<compile_context>
chip_gen: v6e
topology: v6e:2x2x1
jax: 0.10.0
libtpu: 0.0.40
codegen_flags: <defaults>
</compile_context>

<pallas_src>
import numpy as np

import jax
import jax.numpy as jnp
from jax.experimental import pallas as pl
from jax.experimental.pallas import tpu as pltpu


# ----------------------- host-built constant matrices ----------------------

def _maxpool2x2_select(side_in):
    """(4, (side/2)^2, side^2) 0/1 matrices; one per 2x2-window phase."""
    side_out = side_in // 2
    S = np.zeros((4, side_out * side_out, side_in * side_in), np.float32)
    for i in range(2):
        for j in range(2):
            k = i * 2 + j
            for py in range(side_out):
                for px in range(side_out):
                    S[k, py * side_out + px,
                      (2 * py + i) * side_in + (2 * px + j)] = 1.0
    return S


def _avgpool2x2_mat(side_in):
    """((side/2)^2, side^2) averaging matrix for non-overlapping 2x2 windows."""
    side_out = side_in // 2
    M = np.zeros((side_out * side_out, side_in * side_in), np.float32)
    for py in range(side_out):
        for px in range(side_out):
            for i in range(2):
                for j in range(2):
                    M[py * side_out + px,
                      (2 * py + i) * side_in + (2 * px + j)] = 0.25
    return M


def _conv3x3_shift_mats(side):
    """(9, side^2, side^2) 0/1 shift matrices for a zero-padded 3x3 conv."""
    T = np.zeros((9, side * side, side * side), np.float32)
    for dy in range(3):
        for dx in range(3):
            t = dy * 3 + dx
            for y in range(side):
                for x in range(side):
                    sy, sx = y + dy - 1, x + dx - 1
                    if 0 <= sy < side and 0 <= sx < side:
                        T[t, y * side + x, sy * side + sx] = 1.0
    return T


def build_constants():
    # bf16 is exact for 0 / 1 / 0.25, so the selection/shift/avg matmuls stay exact.
    bf16 = jnp.bfloat16
    return {
        "pool1_sel": jnp.asarray(_maxpool2x2_select(16), bf16),            # (4, 64, 256)
        "conv2_shift": jnp.asarray(
            _conv3x3_shift_mats(8).reshape(9 * 64, 64), bf16),             # (576, 64)
        "pool2_sel": jnp.asarray(_maxpool2x2_select(8), bf16),             # (4, 16, 64)
        "avg_mat": jnp.asarray(_avgpool2x2_mat(4), bf16),                  # (4, 16)
    }


# ------------------------------ fused kernel -------------------------------

def vgg_fused_kernel(x_ref,                 # (1, TB*256, 27) bf16 im2col rows
                     w1_ref, b1_ref,        # (27, 16) bf16, (1, 16) f32
                     s1_ref,                # (4, 64, 256) bf16  maxpool-1 select
                     t2_ref,                # (576, 64)    bf16  stacked conv-2 shifts
                     w2_ref, b2_ref,        # (9, 16, 32) bf16, (1, 32) f32
                     s2_ref,                # (4, 16, 64) bf16  maxpool-2 select
                     avg_ref,               # (4, 16)     bf16  adaptive avgpool
                     fc1w_ref, fc1b_ref,    # (4, 32, 64) bf16, (1, 64) f32
                     fc2w_ref, fc2b_ref,    # (64, 64) bf16, (1, 64) f32
                     fcw_ref, fcb_ref,      # (64, 128) bf16 (cols>=10 zero), (1, 128) f32
                     o_ref):                # (1, TB, 128)
    f32, bf16 = jnp.float32, jnp.bfloat16
    TB = o_ref.shape[1]

    # ---- conv1 (3x3, pad=1) + ReLU : single batched im2col matmul
    x = x_ref[0]                                                   # (TB*256, 27)
    a1 = jnp.dot(x, w1_ref[...], preferred_element_type=f32)
    a1 = jnp.maximum(a1 + b1_ref[...], 0.0).astype(bf16)           # (TB*256, 16)

    feat_rows = [[] for _ in range(4)]   # per flattened 2x2 spatial position
    for b in range(TB):
        ab = a1[b * 256:(b + 1) * 256, :]                          # (256, 16)

        # ---- maxpool 2x2 : elementwise max over 4 phase selection matmuls
        p1 = jnp.dot(s1_ref[0], ab, preferred_element_type=f32)
        for k in range(1, 4):
            p1 = jnp.maximum(p1, jnp.dot(s1_ref[k], ab, preferred_element_type=f32))
        p1 = p1.astype(bf16)                                       # (64, 16)

        # ---- conv2 (3x3, pad=1) + ReLU : one stacked-shift matmul + 9 weight matmuls
        sh = jnp.dot(t2_ref[...], p1, preferred_element_type=f32).astype(bf16)  # (576, 16)
        a2 = jnp.dot(sh[0:64, :], w2_ref[0], preferred_element_type=f32)
        for t in range(1, 9):
            a2 = a2 + jnp.dot(sh[t * 64:(t + 1) * 64, :], w2_ref[t],
                              preferred_element_type=f32)
        a2 = jnp.maximum(a2 + b2_ref[...], 0.0).astype(bf16)       # (64, 32)

        # ---- maxpool 2x2
        p2 = jnp.dot(s2_ref[0], a2, preferred_element_type=f32)
        for k in range(1, 4):
            p2 = jnp.maximum(p2, jnp.dot(s2_ref[k], a2, preferred_element_type=f32))
        p2 = p2.astype(bf16)                                       # (16, 32)

        # ---- adaptive avgpool to (2,2): one averaging matmul -> (4, 32)
        av = jnp.dot(avg_ref[...], p2, preferred_element_type=f32)
        for s in range(4):
            feat_rows[s].append(av[s:s + 1, :])                    # (1, 32) f32

    def _stack(lst):
        return lst[0] if len(lst) == 1 else jnp.concatenate(lst, axis=0)

    # ---- fc1 + ReLU : 4 batched matmuls (TB,32)@(32,64); NCHW flatten order is
    #      folded into fc1w (fc1w[s, c, :] == torch row c*4 + s).
    h = jnp.dot(_stack(feat_rows[0]).astype(bf16), fc1w_ref[0],
                preferred_element_type=f32)
    for s in range(1, 4):
        h = h + jnp.dot(_stack(feat_rows[s]).astype(bf16), fc1w_ref[s],
                        preferred_element_type=f32)
    h = jnp.maximum(h + fc1b_ref[...], 0.0).astype(bf16)           # (TB, 64)

    # ---- fc2 + ReLU
    h = jnp.dot(h, fc2w_ref[...], preferred_element_type=f32) + fc2b_ref[...]
    h = jnp.maximum(h, 0.0).astype(bf16)                           # (TB, 64)

    # ---- final fc (classifier[-1]); class dim zero-padded to 128 lanes
    out = jnp.dot(h, fcw_ref[...], preferred_element_type=f32) + fcb_ref[...]
    o_ref[0] = out.astype(o_ref.dtype)                             # (TB, 128)


# ------------------------------- wrapper -----------------------------------

def _replicated_spec(arr):
    nd = arr.ndim
    return pl.BlockSpec(arr.shape, lambda n: (0,) * nd)


def vgg_forward(x_nchw, params, consts, *, num_steps=None):
    N, C, H, W = x_nchw.shape
    assert (C, H, W) == (3, 16, 16), "fused kernel is specialized to 3x16x16 inputs"

    # Batch blocking: 2 grid steps so both v7x TensorCores get one step each
    # (on single-TC v5e/v6e this is just a 2-iteration serial loop, already far
    # fewer steps than 1-sample-per-step).  Each step processes TB samples.
    if num_steps is None:
        num_steps = 2 if N >= 2 else 1
    TB = -(-N // num_steps)
    n_pad = TB * num_steps

    bf16 = jnp.bfloat16

    # Host-side im2col for conv1: NCHW -> padded NHWC -> (steps, TB*256, 27).
    xb = jnp.pad(x_nchw, ((0, n_pad - N), (0, 0), (0, 0), (0, 0)))
    xh = jnp.pad(jnp.transpose(xb, (0, 2, 3, 1)),
                 ((0, 0), (1, 1), (1, 1), (0, 0)))                 # (n_pad, 18, 18, 3)
    cols = [xh[:, dy:dy + 16, dx:dx + 16, :] for dy in range(3) for dx in range(3)]
    x_col = jnp.concatenate(cols, axis=-1)                         # (n_pad, 16, 16, 27)
    x_col = x_col.reshape(num_steps, TB * 256, 27).astype(bf16)

    w1, b1 = params["conv1"]
    w2, b2 = params["conv2"]
    fc1w, fc1b = params["fc1"]
    fc2w, fc2b = params["fc2"]
    fcw, fcb = params["fc"]

    w1f = w1.reshape(27, 16).astype(bf16)            # row = tap*3 + cin (matches im2col)
    w2b = w2.astype(bf16)
    fc1wb = fc1w.astype(bf16)
    fc2wb = fc2w.astype(bf16)
    fcw_pad = jnp.zeros((64, 128), bf16).at[:, :10].set(fcw.astype(bf16))
    fcb_pad = jnp.zeros((1, 128), jnp.float32).at[:, :10].set(fcb)

    operands = (x_col,
                w1f, b1,
                consts["pool1_sel"],
                consts["conv2_shift"],
                w2b, b2,
                consts["pool2_sel"],
                consts["avg_mat"],
                fc1wb, fc1b, fc2wb, fc2b, fcw_pad, fcb_pad)

    in_specs = [pl.BlockSpec((1, TB * 256, 27), lambda n: (n, 0, 0))]
    in_specs += [_replicated_spec(a) for a in operands[1:]]

    # TODO(synk): dropout=True path (classifier[:-1] with nn.Dropout) not modeled;
    #             the reference module here is built with dropout=False.
    out = pl.pallas_call(
        vgg_fused_kernel,
        out_shape=jax.ShapeDtypeStruct((num_steps, TB, 128), x_nchw.dtype),
        grid=(num_steps,),
        in_specs=in_specs,
        out_specs=pl.BlockSpec((1, TB, 128), lambda n: (n, 0, 0)),
        compiler_params=pltpu.CompilerParams(dimension_semantics=("parallel",)),
    )(*operands)

    return out.reshape(n_pad, 128)[:N, :10]


# -------------------------------- params -----------------------------------

def init_params(key):
    ks = jax.random.split(key, 5)

    def conv_p(k, cin, cout):
        k1, k2 = jax.random.split(k)
        scale = 1.0 / (3 * 3 * cin) ** 0.5
        return (jax.random.normal(k1, (9, cin, cout), jnp.float32) * scale,
                jax.random.normal(k2, (1, cout), jnp.float32) * 0.01)

    def lin_p(k, din, dout):
        k1, k2 = jax.random.split(k)
        scale = 1.0 / din ** 0.5
        return (jax.random.normal(k1, (din, dout), jnp.float32) * scale,
                jax.random.normal(k2, (1, dout), jnp.float32) * 0.01)

    p = {
        "conv1": conv_p(ks[0], 3, 16),
        "conv2": conv_p(ks[1], 16, 32),
        "fc1": lin_p(ks[2], 32 * 2 * 2, 64),   # classifier[0]
        "fc2": lin_p(ks[3], 64, 64),           # classifier[3]
        "fc":  lin_p(ks[4], 64, 10),           # classifier[-1]
    }
    # Fold torch.flatten(1)'s NCHW (c, h, w) ordering into fc1's weight layout
    # once at init: flat row k = c*4 + s  ->  folded[s, c, :].
    fc1w_flat, fc1b = p["fc1"]                                       # (128, 64)
    fc1w_folded = fc1w_flat.reshape(32, 4, 64).transpose(1, 0, 2)    # (4, 32, 64)
    p["fc1"] = (fc1w_folded, fc1b)
    return p


# --------------------------------- main -------------------------------------

if __name__ == "__main__":
    key = jax.random.PRNGKey(0)
    pkey, xkey = jax.random.split(key)
    params = init_params(pkey)
    consts = build_constants()
    x = jax.random.normal(xkey, (2, 3, 16, 16), jnp.float32)   # NCHW input
    fwd = jax.jit(lambda a: vgg_forward(a, params, consts))
    out = jax.block_until_ready(fwd(x))
    assert out.shape == (2, 10) and out.dtype == jnp.float32
    print("KERNEL_OK")
</pallas_src>

<mosaic_0001>
module attributes {stable_mosaic.version = 11 : i64} {
  func.func @vgg_fused_kernel(%arg0: i32, %arg1: memref<1x256x27xbf16, #tpu.memory_space<vmem>>, %arg2: memref<27x16xbf16, #tpu.memory_space<vmem>>, %arg3: memref<1x16xf32, #tpu.memory_space<vmem>>, %arg4: memref<4x64x256xbf16, #tpu.memory_space<vmem>>, %arg5: memref<576x64xbf16, #tpu.memory_space<vmem>>, %arg6: memref<9x16x32xbf16, #tpu.memory_space<vmem>>, %arg7: memref<1x32xf32, #tpu.memory_space<vmem>>, %arg8: memref<4x16x64xbf16, #tpu.memory_space<vmem>>, %arg9: memref<4x16xbf16, #tpu.memory_space<vmem>>, %arg10: memref<4x32x64xbf16, #tpu.memory_space<vmem>>, %arg11: memref<1x64xf32, #tpu.memory_space<vmem>>, %arg12: memref<64x64xbf16, #tpu.memory_space<vmem>>, %arg13: memref<1x64xf32, #tpu.memory_space<vmem>>, %arg14: memref<64x128xbf16, #tpu.memory_space<vmem>>, %arg15: memref<1x128xf32, #tpu.memory_space<vmem>>, %arg16: memref<1x1x128xf32, #tpu.memory_space<vmem>>) attributes {dimension_semantics = [#tpu.dimension_semantics<parallel>], iteration_bounds = array<i64: 2>, scalar_prefetch = 0 : i64, scratch_operands = 0 : i64, tpu.core_type = #tpu.core_type<tc>, window_params = [{transform_indices = @transform_0, window_bounds = array<i64: 1, 256, 27>}, {pipeline_mode = #tpu.pipeline_mode<synchronous>, transform_indices = @transform_1, window_bounds = array<i64: 27, 16>}, {pipeline_mode = #tpu.pipeline_mode<synchronous>, transform_indices = @transform_2, window_bounds = array<i64: 1, 16>}, {pipeline_mode = #tpu.pipeline_mode<synchronous>, transform_indices = @transform_3, window_bounds = array<i64: 4, 64, 256>}, {pipeline_mode = #tpu.pipeline_mode<synchronous>, transform_indices = @transform_4, window_bounds = array<i64: 576, 64>}, {pipeline_mode = #tpu.pipeline_mode<synchronous>, transform_indices = @transform_5, window_bounds = array<i64: 9, 16, 32>}, {pipeline_mode = #tpu.pipeline_mode<synchronous>, transform_indices = @transform_6, window_bounds = array<i64: 1, 32>}, {pipeline_mode = #tpu.pipeline_mode<synchronous>, transform_indices = @transform_7, window_bounds = array<i64: 4, 16, 64>}, {pipeline_mode = #tpu.pipeline_mode<synchronous>, transform_indices = @transform_8, window_bounds = array<i64: 4, 16>}, {pipeline_mode = #tpu.pipeline_mode<synchronous>, transform_indices = @transform_9, window_bounds = array<i64: 4, 32, 64>}, {pipeline_mode = #tpu.pipeline_mode<synchronous>, transform_indices = @transform_10, window_bounds = array<i64: 1, 64>}, {pipeline_mode = #tpu.pipeline_mode<synchronous>, transform_indices = @transform_11, window_bounds = array<i64: 64, 64>}, {pipeline_mode = #tpu.pipeline_mode<synchronous>, transform_indices = @transform_12, window_bounds = array<i64: 1, 64>}, {pipeline_mode = #tpu.pipeline_mode<synchronous>, transform_indices = @transform_13, window_bounds = array<i64: 64, 128>}, {pipeline_mode = #tpu.pipeline_mode<synchronous>, transform_indices = @transform_14, window_bounds = array<i64: 1, 128>}, {transform_indices = @transform_15, window_bounds = array<i64: 1, 1, 128>}]} {
    %c0 = arith.constant 0 : index
    %c0_0 = arith.constant 0 : index
    %c0_1 = arith.constant 0 : index
    %0 = vector.load %arg1[%c0, %c0_0, %c0_1] : memref<1x256x27xbf16, #tpu.memory_space<vmem>>, vector<1x256x27xbf16>
    %1 = vector.shape_cast %0 : vector<1x256x27xbf16> to vector<256x27xbf16>
    %c0_2 = arith.constant 0 : index
    %c0_3 = arith.constant 0 : index
    %2 = vector.load %arg2[%c0_2, %c0_3] : memref<27x16xbf16, #tpu.memory_space<vmem>>, vector<27x16xbf16>
    %cst = arith.constant dense<0.000000e+00> : vector<256x16xf32>
    %3 = tpu.matmul %1, %2, %cst {dimension_numbers = #tpu.dot_dimension_numbers<[1], [0], [0], [1], [0, 0, 1, 1], [], []>} : vector<256x27xbf16>, vector<27x16xbf16>, vector<256x16xf32> -> vector<256x16xf32>
    %c0_4 = arith.constant 0 : index
    %c0_5 = arith.constant 0 : index
    %4 = vector.load %arg3[%c0_4, %c0_5] : memref<1x16xf32, #tpu.memory_space<vmem>>, vector<1x16xf32>
    %5 = vector.broadcast %4 : vector<1x16xf32> to vector<256x16xf32>
    %6 = arith.addf %3, %5 : vector<256x16xf32>
    %cst_6 = arith.constant 0.000000e+00 : f32
    %7 = vector.broadcast %cst_6 : f32 to vector<256x16xf32>
    %8 = arith.maximumf %6, %7 : vector<256x16xf32>
    %9 = arith.truncf %8 : vector<256x16xf32> to vector<256x16xbf16>
    %c0_7 = arith.constant 0 : index
    %c0_8 = arith.constant 0 : index
    %c0_9 = arith.constant 0 : index
    %10 = vector.load %arg4[%c0_7, %c0_8, %c0_9] : memref<4x64x256xbf16, #tpu.memory_space<vmem>>, vector<1x64x256xbf16>
    %11 = vector.shape_cast %10 : vector<1x64x256xbf16> to vector<64x256xbf16>
    %cst_10 = arith.constant dense<0.000000e+00> : vector<64x16xf32>
    %12 = tpu.matmul %11, %9, %cst_10 {dimension_numbers = #tpu.dot_dimension_numbers<[1], [0], [0], [1], [0, 0, 1, 1], [], []>} : vector<64x256xbf16>, vector<256x16xbf16>, vector<64x16xf32> -> vector<64x16xf32>
    %c1 = arith.constant 1 : index
    %c0_11 = arith.constant 0 : index
    %c0_12 = arith.constant 0 : index
    %13 = vector.load %arg4[%c1, %c0_11, %c0_12] : memref<4x64x256xbf16, #tpu.memory_space<vmem>>, vector<1x64x256xbf16>
    %14 = vector.shape_cast %13 : vector<1x64x256xbf16> to vector<64x256xbf16>
    %cst_13 = arith.constant dense<0.000000e+00> : vector<64x16xf32>
    %15 = tpu.matmul %14, %9, %cst_13 {dimension_numbers = #tpu.dot_dimension_numbers<[1], [0], [0], [1], [0, 0, 1, 1], [], []>} : vector<64x256xbf16>, vector<256x16xbf16>, vector<64x16xf32> -> vector<64x16xf32>
    %16 = arith.maximumf %12, %15 : vector<64x16xf32>
    %c2 = arith.constant 2 : index
    %c0_14 = arith.constant 0 : index
    %c0_15 = arith.constant 0 : index
    %17 = vector.load %arg4[%c2, %c0_14, %c0_15] : memref<4x64x256xbf16, #tpu.memory_space<vmem>>, vector<1x64x256xbf16>
    %18 = vector.shape_cast %17 : vector<1x64x256xbf16> to vector<64x256xbf16>
    %cst_16 = arith.constant dense<0.000000e+00> : vector<64x16xf32>
    %19 = tpu.matmul %18, %9, %cst_16 {dimension_numbers = #tpu.dot_dimension_numbers<[1], [0], [0], [1], [0, 0, 1, 1], [], []>} : vector<64x256xbf16>, vector<256x16xbf16>, vector<64x16xf32> -> vector<64x16xf32>
    %20 = arith.maximumf %16, %19 : vector<64x16xf32>
    %c3 = arith.constant 3 : index
    %c0_17 = arith.constant 0 : index
    %c0_18 = arith.constant 0 : index
    %21 = vector.load %arg4[%c3, %c0_17, %c0_18] : memref<4x64x256xbf16, #tpu.memory_space<vmem>>, vector<1x64x256xbf16>
    %22 = vector.shape_cast %21 : vector<1x64x256xbf16> to vector<64x256xbf16>
    %cst_19 = arith.constant dense<0.000000e+00> : vector<64x16xf32>
    %23 = tpu.matmul %22, %9, %cst_19 {dimension_numbers = #tpu.dot_dimension_numbers<[1], [0], [0], [1], [0, 0, 1, 1], [], []>} : vector<64x256xbf16>, vector<256x16xbf16>, vector<64x16xf32> -> vector<64x16xf32>
    %24 = arith.maximumf %20, %23 : vector<64x16xf32>
    %25 = arith.truncf %24 : vector<64x16xf32> to vector<64x16xbf16>
    %c0_20 = arith.constant 0 : index
    %c0_21 = arith.constant 0 : index
    %26 = vector.load %arg5[%c0_20, %c0_21] : memref<576x64xbf16, #tpu.memory_space<vmem>>, vector<576x64xbf16>
    %cst_22 = arith.constant dense<0.000000e+00> : vector<576x16xf32>
    %27 = tpu.matmul %26, %25, %cst_22 {dimension_numbers = #tpu.dot_dimension_numbers<[1], [0], [0], [1], [0, 0, 1, 1], [], []>} : vector<576x64xbf16>, vector<64x16xbf16>, vector<576x16xf32> -> vector<576x16xf32>
    %28 = arith.truncf %27 : vector<576x16xf32> to vector<576x16xbf16>
    %29 = vector.extract_strided_slice %28 {offsets = [0, 0], sizes = [64, 16], strides = [1, 1]} : vector<576x16xbf16> to vector<64x16xbf16>
    %c0_23 = arith.constant 0 : index
    %c0_24 = arith.constant 0 : index
    %c0_25 = arith.constant 0 : index
    %30 = vector.load %arg6[%c0_23, %c0_24, %c0_25] : memref<9x16x32xbf16, #tpu.memory_space<vmem>>, vector<1x16x32xbf16>
    %31 = vector.shape_cast %30 : vector<1x16x32xbf16> to vector<16x32xbf16>
    %cst_26 = arith.constant dense<0.000000e+00> : vector<64x32xf32>
    %32 = tpu.matmul %29, %31, %cst_26 {dimension_numbers = #tpu.dot_dimension_numbers<[1], [0], [0], [1], [0, 0, 1, 1], [], []>} : vector<64x16xbf16>, vector<16x32xbf16>, vector<64x32xf32> -> vector<64x32xf32>
    %33 = vector.extract_strided_slice %28 {offsets = [64, 0], sizes = [64, 16], strides = [1, 1]} : vector<576x16xbf16> to vector<64x16xbf16>
    %c1_27 = arith.constant 1 : index
    %c0_28 = arith.constant 0 : index
    %c0_29 = arith.constant 0 : index
    %34 = vector.load %arg6[%c1_27, %c0_28, %c0_29] : memref<9x16x32xbf16, #tpu.memory_space<vmem>>, vector<1x16x32xbf16>
    %35 = vector.shape_cast %34 : vector<1x16x32xbf16> to vector<16x32xbf16>
    %cst_30 = arith.constant dense<0.000000e+00> : vector<64x32xf32>
    %36 = tpu.matmul %33, %35, %cst_30 {dimension_numbers = #tpu.dot_dimension_numbers<[1], [0], [0], [1], [0, 0, 1, 1], [], []>} : vector<64x16xbf16>, vector<16x32xbf16>, vector<64x32xf32> -> vector<64x32xf32>
    %37 = arith.addf %32, %36 : vector<64x32xf32>
    %38 = vector.extract_strided_slice %28 {offsets = [128, 0], sizes = [64, 16], strides = [1, 1]} : vector<576x16xbf16> to vector<64x16xbf16>
    %c2_31 = arith.constant 2 : index
    %c0_32 = arith.constant 0 : index
    %c0_33 = arith.constant 0 : index
    %39 = vector.load %arg6[%c2_31, %c0_32, %c0_33] : memref<9x16x32xbf16, #tpu.memory_space<vmem>>, vector<1x16x32xbf16>
    %40 = vector.shape_cast %39 : vector<1x16x32xbf16> to vector<16x32xbf16>
    %cst_34 = arith.constant dense<0.000000e+00> : vector<64x32xf32>
    %41 = tpu.matmul %38, %40, %cst_34 {dimension_numbers = #tpu.dot_dimension_numbers<[1], [0], [0], [1], [0, 0, 1, 1], [], []>} : vector<64x16xbf16>, vector<16x32xbf16>, vector<64x32xf32> -> vector<64x32xf32>
    %42 = arith.addf %37, %41 : vector<64x32xf32>
    %43 = vector.extract_strided_slice %28 {offsets = [192, 0], sizes = [64, 16], strides = [1, 1]} : vector<576x16xbf16> to vector<64x16xbf16>
    %c3_35 = arith.constant 3 : index
    %c0_36 = arith.constant 0 : index
    %c0_37 = arith.constant 0 : index
    %44 = vector.load %arg6[%c3_35, %c0_36, %c0_37] : memref<9x16x32xbf16, #tpu.memory_space<vmem>>, vector<1x16x32xbf16>
    %45 = vector.shape_cast %44 : vector<1x16x32xbf16> to vector<16x32xbf16>
    %cst_38 = arith.constant dense<0.000000e+00> : vector<64x32xf32>
    %46 = tpu.matmul %43, %45, %cst_38 {dimension_numbers = #tpu.dot_dimension_numbers<[1], [0], [0], [1], [0, 0, 1, 1], [], []>} : vector<64x16xbf16>, vector<16x32xbf16>, vector<64x32xf32> -> vector<64x32xf32>
    %47 = arith.addf %42, %46 : vector<64x32xf32>
    %48 = vector.extract_strided_slice %28 {offsets = [256, 0], sizes = [64, 16], strides = [1, 1]} : vector<576x16xbf16> to vector<64x16xbf16>
    %c4 = arith.constant 4 : index
    %c0_39 = arith.constant 0 : index
    %c0_40 = arith.constant 0 : index
    %49 = vector.load %arg6[%c4, %c0_39, %c0_40] : memref<9x16x32xbf16, #tpu.memory_space<vmem>>, vector<1x16x32xbf16>
    %50 = vector.shape_cast %49 : vector<1x16x32xbf16> to vector<16x32xbf16>
    %cst_41 = arith.constant dense<0.000000e+00> : vector<64x32xf32>
    %51 = tpu.matmul %48, %50, %cst_41 {dimension_numbers = #tpu.dot_dimension_numbers<[1], [0], [0], [1], [0, 0, 1, 1], [], []>} : vector<64x16xbf16>, vector<16x32xbf16>, vector<64x32xf32> -> vector<64x32xf32>
    %52 = arith.addf %47, %51 : vector<64x32xf32>
    %53 = vector.extract_strided_slice %28 {offsets = [320, 0], sizes = [64, 16], strides = [1, 1]} : vector<576x16xbf16> to vector<64x16xbf16>
    %c5 = arith.constant 5 : index
    %c0_42 = arith.constant 0 : index
    %c0_43 = arith.constant 0 : index
    %54 = vector.load %arg6[%c5, %c0_42, %c0_43] : memref<9x16x32xbf16, #tpu.memory_space<vmem>>, vector<1x16x32xbf16>
    %55 = vector.shape_cast %54 : vector<1x16x32xbf16> to vector<16x32xbf16>
    %cst_44 = arith.constant dense<0.000000e+00> : vector<64x32xf32>
    %56 = tpu.matmul %53, %55, %cst_44 {dimension_numbers = #tpu.dot_dimension_numbers<[1], [0], [0], [1], [0, 0, 1, 1], [], []>} : vector<64x16xbf16>, vector<16x32xbf16>, vector<64x32xf32> -> vector<64x32xf32>
    %57 = arith.addf %52, %56 : vector<64x32xf32>
    %58 = vector.extract_strided_slice %28 {offsets = [384, 0], sizes = [64, 16], strides = [1, 1]} : vector<576x16xbf16> to vector<64x16xbf16>
    %c6 = arith.constant 6 : index
    %c0_45 = arith.constant 0 : index
    %c0_46 = arith.constant 0 : index
    %59 = vector.load %arg6[%c6, %c0_45, %c0_46] : memref<9x16x32xbf16, #tpu.memory_space<vmem>>, vector<1x16x32xbf16>
    %60 = vector.shape_cast %59 : vector<1x16x32xbf16> to vector<16x32xbf16>
    %cst_47 = arith.constant dense<0.000000e+00> : vector<64x32xf32>
    %61 = tpu.matmul %58, %60, %cst_47 {dimension_numbers = #tpu.dot_dimension_numbers<[1], [0], [0], [1], [0, 0, 1, 1], [], []>} : vector<64x16xbf16>, vector<16x32xbf16>, vector<64x32xf32> -> vector<64x32xf32>
    %62 = arith.addf %57, %61 : vector<64x32xf32>
    %63 = vector.extract_strided_slice %28 {offsets = [448, 0], sizes = [64, 16], strides = [1, 1]} : vector<576x16xbf16> to vector<64x16xbf16>
    %c7 = arith.constant 7 : index
    %c0_48 = arith.constant 0 : index
    %c0_49 = arith.constant 0 : index
    %64 = vector.load %arg6[%c7, %c0_48, %c0_49] : memref<9x16x32xbf16, #tpu.memory_space<vmem>>, vector<1x16x32xbf16>
    %65 = vector.shape_cast %64 : vector<1x16x32xbf16> to vector<16x32xbf16>
    %cst_50 = arith.constant dense<0.000000e+00> : vector<64x32xf32>
    %66 = tpu.matmul %63, %65, %cst_50 {dimension_numbers = #tpu.dot_dimension_numbers<[1], [0], [0], [1], [0, 0, 1, 1], [], []>} : vector<64x16xbf16>, vector<16x32xbf16>, vector<64x32xf32> -> vector<64x32xf32>
    %67 = arith.addf %62, %66 : vector<64x32xf32>
    %68 = vector.extract_strided_slice %28 {offsets = [512, 0], sizes = [64, 16], strides = [1, 1]} : vector<576x16xbf16> to vector<64x16xbf16>
    %c8 = arith.constant 8 : index
    %c0_51 = arith.constant 0 : index
    %c0_52 = arith.constant 0 : index
    %69 = vector.load %arg6[%c8, %c0_51, %c0_52] : memref<9x16x32xbf16, #tpu.memory_space<vmem>>, vector<1x16x32xbf16>
    %70 = vector.shape_cast %69 : vector<1x16x32xbf16> to vector<16x32xbf16>
    %cst_53 = arith.constant dense<0.000000e+00> : vector<64x32xf32>
    %71 = tpu.matmul %68, %70, %cst_53 {dimension_numbers = #tpu.dot_dimension_numbers<[1], [0], [0], [1], [0, 0, 1, 1], [], []>} : vector<64x16xbf16>, vector<16x32xbf16>, vector<64x32xf32> -> vector<64x32xf32>
    %72 = arith.addf %67, %71 : vector<64x32xf32>
    %c0_54 = arith.constant 0 : index
    %c0_55 = arith.constant 0 : index
    %73 = vector.load %arg7[%c0_54, %c0_55] : memref<1x32xf32, #tpu.memory_space<vmem>>, vector<1x32xf32>
    %74 = vector.broadcast %73 : vector<1x32xf32> to vector<64x32xf32>
    %75 = arith.addf %72, %74 : vector<64x32xf32>
    %cst_56 = arith.constant 0.000000e+00 : f32
    %76 = vector.broadcast %cst_56 : f32 to vector<64x32xf32>
    %77 = arith.maximumf %75, %76 : vector<64x32xf32>
    %78 = arith.truncf %77 : vector<64x32xf32> to vector<64x32xbf16>
    %c0_57 = arith.constant 0 : index
    %c0_58 = arith.constant 0 : index
    %c0_59 = arith.constant 0 : index
    %79 = vector.load %arg8[%c0_57, %c0_58, %c0_59] : memref<4x16x64xbf16, #tpu.memory_space<vmem>>, vector<1x16x64xbf16>
    %80 = vector.shape_cast %79 : vector<1x16x64xbf16> to vector<16x64xbf16>
    %cst_60 = arith.constant dense<0.000000e+00> : vector<16x32xf32>
    %81 = tpu.matmul %80, %78, %cst_60 {dimension_numbers = #tpu.dot_dimension_numbers<[1], [0], [0], [1], [0, 0, 1, 1], [], []>} : vector<16x64xbf16>, vector<64x32xbf16>, vector<16x32xf32> -> vector<16x32xf32>
    %c1_61 = arith.constant 1 : index
    %c0_62 = arith.constant 0 : index
    %c0_63 = arith.constant 0 : index
    %82 = vector.load %arg8[%c1_61, %c0_62, %c0_63] : memref<4x16x64xbf16, #tpu.memory_space<vmem>>, vector<1x16x64xbf16>
    %83 = vector.shape_cast %82 : vector<1x16x64xbf16> to vector<16x64xbf16>
    %cst_64 = arith.constant dense<0.000000e+00> : vector<16x32xf32>
    %84 = tpu.matmul %83, %78, %cst_64 {dimension_numbers = #tpu.dot_dimension_numbers<[1], [0], [0], [1], [0, 0, 1, 1], [], []>} : vector<16x64xbf16>, vector<64x32xbf16>, vector<16x32xf32> -> vector<16x32xf32>
    %85 = arith.maximumf %81, %84 : vector<16x32xf32>
    %c2_65 = arith.constant 2 : index
    %c0_66 = arith.constant 0 : index
    %c0_67 = arith.constant 0 : index
    %86 = vector.load %arg8[%c2_65, %c0_66, %c0_67] : memref<4x16x64xbf16, #tpu.memory_space<vmem>>, vector<1x16x64xbf16>
    %87 = vector.shape_cast %86 : vector<1x16x64xbf16> to vector<16x64xbf16>
    %cst_68 = arith.constant dense<0.000000e+00> : vector<16x32xf32>
    %88 = tpu.matmul %87, %78, %cst_68 {dimension_numbers = #tpu.dot_dimension_numbers<[1], [0], [0], [1], [0, 0, 1, 1], [], []>} : vector<16x64xbf16>, vector<64x32xbf16>, vector<16x32xf32> -> vector<16x32xf32>
    %89 = arith.maximumf %85, %88 : vector<16x32xf32>
    %c3_69 = arith.constant 3 : index
    %c0_70 = arith.constant 0 : index
    %c0_71 = arith.constant 0 : index
    %90 = vector.load %arg8[%c3_69, %c0_70, %c0_71] : memref<4x16x64xbf16, #tpu.memory_space<vmem>>, vector<1x16x64xbf16>
    %91 = vector.shape_cast %90 : vector<1x16x64xbf16> to vector<16x64xbf16>
    %cst_72 = arith.constant dense<0.000000e+00> : vector<16x32xf32>
    %92 = tpu.matmul %91, %78, %cst_72 {dimension_numbers = #tpu.dot_dimension_numbers<[1], [0], [0], [1], [0, 0, 1, 1], [], []>} : vector<16x64xbf16>, vector<64x32xbf16>, vector<16x32xf32> -> vector<16x32xf32>
    %93 = arith.maximumf %89, %92 : vector<16x32xf32>
    %94 = arith.truncf %93 : vector<16x32xf32> to vector<16x32xbf16>
    %c0_73 = arith.constant 0 : index
    %c0_74 = arith.constant 0 : index
    %95 = vector.load %arg9[%c0_73, %c0_74] : memref<4x16xbf16, #tpu.memory_space<vmem>>, vector<4x16xbf16>
    %cst_75 = arith.constant dense<0.000000e+00> : vector<4x32xf32>
    %96 = tpu.matmul %95, %94, %cst_75 {dimension_numbers = #tpu.dot_dimension_numbers<[1], [0], [0], [1], [0, 0, 1, 1], [], []>} : vector<4x16xbf16>, vector<16x32xbf16>, vector<4x32xf32> -> vector<4x32xf32>
    %97 = vector.extract_strided_slice %96 {offsets = [0, 0], sizes = [1, 32], strides = [1, 1]} : vector<4x32xf32> to vector<1x32xf32>
    %98 = vector.extract_strided_slice %96 {offsets = [1, 0], sizes = [1, 32], strides = [1, 1]} : vector<4x32xf32> to vector<1x32xf32>
    %99 = vector.extract_strided_slice %96 {offsets = [2, 0], sizes = [1, 32], strides = [1, 1]} : vector<4x32xf32> to vector<1x32xf32>
    %100 = vector.extract_strided_slice %96 {offsets = [3, 0], sizes = [1, 32], strides = [1, 1]} : vector<4x32xf32> to vector<1x32xf32>
    %101 = arith.truncf %97 : vector<1x32xf32> to vector<1x32xbf16>
    %c0_76 = arith.constant 0 : index
    %c0_77 = arith.constant 0 : index
    %c0_78 = arith.constant 0 : index
    %102 = vector.load %arg10[%c0_76, %c0_77, %c0_78] : memref<4x32x64xbf16, #tpu.memory_space<vmem>>, vector<1x32x64xbf16>
    %103 = vector.shape_cast %102 : vector<1x32x64xbf16> to vector<32x64xbf16>
    %cst_79 = arith.constant dense<0.000000e+00> : vector<1x64xf32>
    %104 = tpu.matmul %101, %103, %cst_79 {dimension_numbers = #tpu.dot_dimension_numbers<[1], [0], [0], [1], [0, 0, 1, 1], [], []>} : vector<1x32xbf16>, vector<32x64xbf16>, vector<1x64xf32> -> vector<1x64xf32>
    %105 = arith.truncf %98 : vector<1x32xf32> to vector<1x32xbf16>
    %c1_80 = arith.constant 1 : index
    %c0_81 = arith.constant 0 : index
    %c0_82 = arith.constant 0 : index
    %106 = vector.load %arg10[%c1_80, %c0_81, %c0_82] : memref<4x32x64xbf16, #tpu.memory_space<vmem>>, vector<1x32x64xbf16>
    %107 = vector.shape_cast %106 : vector<1x32x64xbf16> to vector<32x64xbf16>
    %cst_83 = arith.constant dense<0.000000e+00> : vector<1x64xf32>
    %108 = tpu.matmul %105, %107, %cst_83 {dimension_numbers = #tpu.dot_dimension_numbers<[1], [0], [0], [1], [0, 0, 1, 1], [], []>} : vector<1x32xbf16>, vector<32x64xbf16>, vector<1x64xf32> -> vector<1x64xf32>
    %109 = arith.addf %104, %108 : vector<1x64xf32>
    %110 = arith.truncf %99 : vector<1x32xf32> to vector<1x32xbf16>
    %c2_84 = arith.constant 2 : index
    %c0_85 = arith.constant 0 : index
    %c0_86 = arith.constant 0 : index
    %111 = vector.load %arg10[%c2_84, %c0_85, %c0_86] : memref<4x32x64xbf16, #tpu.memory_space<vmem>>, vector<1x32x64xbf16>
    %112 = vector.shape_cast %111 : vector<1x32x64xbf16> to vector<32x64xbf16>
    %cst_87 = arith.constant dense<0.000000e+00> : vector<1x64xf32>
    %113 = tpu.matmul %110, %112, %cst_87 {dimension_numbers = #tpu.dot_dimension_numbers<[1], [0], [0], [1], [0, 0, 1, 1], [], []>} : vector<1x32xbf16>, vector<32x64xbf16>, vector<1x64xf32> -> vector<1x64xf32>
    %114 = arith.addf %109, %113 : vector<1x64xf32>
    %115 = arith.truncf %100 : vector<1x32xf32> to vector<1x32xbf16>
    %c3_88 = arith.constant 3 : index
    %c0_89 = arith.constant 0 : index
    %c0_90 = arith.constant 0 : index
    %116 = vector.load %arg10[%c3_88, %c0_89, %c0_90] : memref<4x32x64xbf16, #tpu.memory_space<vmem>>, vector<1x32x64xbf16>
    %117 = vector.shape_cast %116 : vector<1x32x64xbf16> to vector<32x64xbf16>
    %cst_91 = arith.constant dense<0.000000e+00> : vector<1x64xf32>
    %118 = tpu.matmul %115, %117, %cst_91 {dimension_numbers = #tpu.dot_dimension_numbers<[1], [0], [0], [1], [0, 0, 1, 1], [], []>} : vector<1x32xbf16>, vector<32x64xbf16>, vector<1x64xf32> -> vector<1x64xf32>
    %119 = arith.addf %114, %118 : vector<1x64xf32>
    %c0_92 = arith.constant 0 : index
    %c0_93 = arith.constant 0 : index
    %120 = vector.load %arg11[%c0_92, %c0_93] : memref<1x64xf32, #tpu.memory_space<vmem>>, vector<1x64xf32>
    %121 = arith.addf %119, %120 : vector<1x64xf32>
    %cst_94 = arith.constant 0.000000e+00 : f32
    %122 = vector.broadcast %cst_94 : f32 to vector<1x64xf32>
    %123 = arith.maximumf %121, %122 : vector<1x64xf32>
    %124 = arith.truncf %123 : vector<1x64xf32> to vector<1x64xbf16>
    %c0_95 = arith.constant 0 : index
    %c0_96 = arith.constant 0 : index
    %125 = vector.load %arg12[%c0_95, %c0_96] : memref<64x64xbf16, #tpu.memory_space<vmem>>, vector<64x64xbf16>
    %cst_97 = arith.constant dense<0.000000e+00> : vector<1x64xf32>
    %126 = tpu.matmul %124, %125, %cst_97 {dimension_numbers = #tpu.dot_dimension_numbers<[1], [0], [0], [1], [0, 0, 1, 1], [], []>} : vector<1x64xbf16>, vector<64x64xbf16>, vector<1x64xf32> -> vector<1x64xf32>
    %c0_98 = arith.constant 0 : index
    %c0_99 = arith.constant 0 : index
    %127 = vector.load %arg13[%c0_98, %c0_99] : memref<1x64xf32, #tpu.memory_space<vmem>>, vector<1x64xf32>
    %128 = arith.addf %126, %127 : vector<1x64xf32>
    %cst_100 = arith.constant 0.000000e+00 : f32
    %129 = vector.broadcast %cst_100 : f32 to vector<1x64xf32>
    %130 = arith.maximumf %128, %129 : vector<1x64xf32>
    %131 = arith.truncf %130 : vector<1x64xf32> to vector<1x64xbf16>
    %c0_101 = arith.constant 0 : index
    %c0_102 = arith.constant 0 : index
    %132 = vector.load %arg14[%c0_101, %c0_102] : memref<64x128xbf16, #tpu.memory_space<vmem>>, vector<64x128xbf16>
    %cst_103 = arith.constant dense<0.000000e+00> : vector<1x128xf32>
    %133 = tpu.matmul %131, %132, %cst_103 {dimension_numbers = #tpu.dot_dimension_numbers<[1], [0], [0], [1], [0, 0, 1, 1], [], []>} : vector<1x64xbf16>, vector<64x128xbf16>, vector<1x128xf32> -> vector<1x128xf32>
    %c0_104 = arith.constant 0 : index
    %c0_105 = arith.constant 0 : index
    %134 = vector.load %arg15[%c0_104, %c0_105] : memref<1x128xf32, #tpu.memory_space<vmem>>, vector<1x128xf32>
    %135 = arith.addf %133, %134 : vector<1x128xf32>
    %c0_106 = arith.constant 0 : index
    %c0_107 = arith.constant 0 : index
    %c0_108 = arith.constant 0 : index
    %136 = vector.load %arg16[%c0_106, %c0_107, %c0_108] : memref<1x1x128xf32, #tpu.memory_space<vmem>>, vector<1x1x128xf32>
    %137 = vector.shape_cast %136 : vector<1x1x128xf32> to vector<1x128xf32>
    %138 = vector.shape_cast %135 : vector<1x128xf32> to vector<1x1x128xf32>
    tpu.vector_store %arg16[%c0_106, %c0_107, %c0_108], %138 {strides = array<i32>} : memref<1x1x128xf32, #tpu.memory_space<vmem>>, vector<1x1x128xf32>,
    return
  }
  func.func @transform_0(%arg0: i32) -> (i32, i32, i32) {
    %c0_i32 = arith.constant 0 : i32
    %c0_i32_0 = arith.constant 0 : i32
    %c0_i32_1 = arith.constant 0 : i32
    return %arg0, %c0_i32, %c0_i32_0 : i32, i32, i32
  }
  func.func @transform_1(%arg0: i32) -> (i32, i32) {
    %c0_i32 = arith.constant 0 : i32
    %c0_i32_0 = arith.constant 0 : i32
    %c0_i32_1 = arith.constant 0 : i32
    return %c0_i32, %c0_i32_0 : i32, i32
  }
  func.func @transform_2(%arg0: i32) -> (i32, i32) {
    %c0_i32 = arith.constant 0 : i32
    %c0_i32_0 = arith.constant 0 : i32
    %c0_i32_1 = arith.constant 0 : i32
    return %c0_i32, %c0_i32_0 : i32, i32
  }
  func.func @transform_3(%arg0: i32) -> (i32, i32, i32) {
    %c0_i32 = arith.constant 0 : i32
    %c0_i32_0 = arith.constant 0 : i32
    %c0_i32_1 = arith.constant 0 : i32
    %c0_i32_2 = arith.constant 0 : i32
    return %c0_i32, %c0_i32_0, %c0_i32_1 : i32, i32, i32
  }
  func.func @transform_4(%arg0: i32) -> (i32, i32) {
    %c0_i32 = arith.constant 0 : i32
    %c0_i32_0 = arith.constant 0 : i32
    %c0_i32_1 = arith.constant 0 : i32
    return %c0_i32, %c0_i32_0 : i32, i32
  }
  func.func @transform_5(%arg0: i32) -> (i32, i32, i32) {
    %c0_i32 = arith.constant 0 : i32
    %c0_i32_0 = arith.constant 0 : i32
    %c0_i32_1 = arith.constant 0 : i32
    %c0_i32_2 = arith.constant 0 : i32
    return %c0_i32, %c0_i32_0, %c0_i32_1 : i32, i32, i32
  }
  func.func @transform_6(%arg0: i32) -> (i32, i32) {
    %c0_i32 = arith.constant 0 : i32
    %c0_i32_0 = arith.constant 0 : i32
    %c0_i32_1 = arith.constant 0 : i32
    return %c0_i32, %c0_i32_0 : i32, i32
  }
  func.func @transform_7(%arg0: i32) -> (i32, i32, i32) {
    %c0_i32 = arith.constant 0 : i32
    %c0_i32_0 = arith.constant 0 : i32
    %c0_i32_1 = arith.constant 0 : i32
    %c0_i32_2 = arith.constant 0 : i32
    return %c0_i32, %c0_i32_0, %c0_i32_1 : i32, i32, i32
  }
  func.func @transform_8(%arg0: i32) -> (i32, i32) {
    %c0_i32 = arith.constant 0 : i32
    %c0_i32_0 = arith.constant 0 : i32
    %c0_i32_1 = arith.constant 0 : i32
    return %c0_i32, %c0_i32_0 : i32, i32
  }
  func.func @transform_9(%arg0: i32) -> (i32, i32, i32) {
    %c0_i32 = arith.constant 0 : i32
    %c0_i32_0 = arith.constant 0 : i32
    %c0_i32_1 = arith.constant 0 : i32
    %c0_i32_2 = arith.constant 0 : i32
    return %c0_i32, %c0_i32_0, %c0_i32_1 : i32, i32, i32
  }
  func.func @transform_10(%arg0: i32) -> (i32, i32) {
    %c0_i32 = arith.constant 0 : i32
    %c0_i32_0 = arith.constant 0 : i32
    %c0_i32_1 = arith.constant 0 : i32
    return %c0_i32, %c0_i32_0 : i32, i32
  }
  func.func @transform_11(%arg0: i32) -> (i32, i32) {
    %c0_i32 = arith.constant 0 : i32
    %c0_i32_0 = arith.constant 0 : i32
    %c0_i32_1 = arith.constant 0 : i32
    return %c0_i32, %c0_i32_0 : i32, i32
  }
  func.func @transform_12(%arg0: i32) -> (i32, i32) {
    %c0_i32 = arith.constant 0 : i32
    %c0_i32_0 = arith.constant 0 : i32
    %c0_i32_1 = arith.constant 0 : i32
    return %c0_i32, %c0_i32_0 : i32, i32
  }
  func.func @transform_13(%arg0: i32) -> (i32, i32) {
    %c0_i32 = arith.constant 0 : i32
    %c0_i32_0 = arith.constant 0 : i32
    %c0_i32_1 = arith.constant 0 : i32
    return %c0_i32, %c0_i32_0 : i32, i32
  }
  func.func @transform_14(%arg0: i32) -> (i32, i32) {
    %c0_i32 = arith.constant 0 : i32
    %c0_i32_0 = arith.constant 0 : i32
    %c0_i32_1 = arith.constant 0 : i32
    return %c0_i32, %c0_i32_0 : i32, i32
  }
  func.func @transform_15(%arg0: i32) -> (i32, i32, i32) {
    %c0_i32 = arith.constant 0 : i32
    %c0_i32_0 = arith.constant 0 : i32
    %c0_i32_1 = arith.constant 0 : i32
    return %arg0, %c0_i32, %c0_i32_0 : i32, i32, i32
  }
}

</mosaic_0001>

<llo_original>
// kernel: _lambda_.1
$region0: #{_lambda_.1}
  #allocation0 [shape = 'u32[]', space=smem, size = 0x4, offset = 0x4, fixed_abs, tag = 'smem constant byte address 0x4 - core index']
  #allocation1 [shape = 'u32[144,128]{1,0:T(1,128)}', space=vmem, size = 0x12000, scoped, tag = 'internal scratch']
  %s0 = inlined_call_operand.vmem [shape: bf16[2,256,27], index: 0, kind: input, shape index: {}]
  %s1 = inlined_call_operand.vmem [shape: bf16[27,16], index: 1, kind: input, shape index: {}]
  %s2 = inlined_call_operand.vmem [shape: f32[1,16], index: 2, kind: input, shape index: {}]
  %s3 = inlined_call_operand.vmem [shape: bf16[4,64,256], index: 3, kind: input, shape index: {}]
  %s4 = inlined_call_operand.vmem [shape: bf16[576,64], index: 4, kind: input, shape index: {}]
  %s5 = inlined_call_operand.vmem [shape: bf16[9,16,32], index: 5, kind: input, shape index: {}]
  %s6 = inlined_call_operand.vmem [shape: f32[1,32], index: 6, kind: input, shape index: {}]
  %s7 = inlined_call_operand.vmem [shape: bf16[4,16,64], index: 7, kind: input, shape index: {}]
  %s8 = inlined_call_operand.vmem [shape: bf16[4,16], index: 8, kind: input, shape index: {}]
  %s9 = inlined_call_operand.vmem [shape: bf16[4,32,64], index: 9, kind: input, shape index: {}]
  %s10 = inlined_call_operand.vmem [shape: f32[1,64], index: 10, kind: input, shape index: {}]
  %s11 = inlined_call_operand.vmem [shape: bf16[64,64], index: 11, kind: input, shape index: {}]
  %s12 = inlined_call_operand.vmem [shape: f32[1,64], index: 12, kind: input, shape index: {}]
  %s13 = inlined_call_operand.vmem [shape: bf16[64,128], index: 13, kind: input, shape index: {}]
  %s14 = inlined_call_operand.vmem [shape: f32[1,128], index: 14, kind: input, shape index: {}]
  %s15 = inlined_call_operand.hbm [shape: f32[2,1,128], index: 15, kind: output, shape index: {}]
  %s16 = sld [smem:[#allocation0]]
  $region93: #{_lambda_.1} parent=0
    _
  %s18 = ssub.s32 1, %s16
  %s19 = scalar_select 0, %s18, %s16
  $region1: #{_lambda_.1} parent=0
    #allocation2 [shape = 'u8[1024]{0}', space=vmem, size = 0x400, scoped, tag = 'output window, operand 0']
    #allocation3 [shape = 's32[2]{0}', space=sflag, size = 0x8, scoped, tag = 'scoped memory for _lambda_.1']
    %20 = vsyncpa [#allocation3], 0
    %s21 = scalar_lea.sflag [#allocation3], 1
    %22 = vsyncpa %s21, 0
    loop: start=0, step=1, limit=4
    $region2: #{_lambda_.1} parent=1 // loop_pre_header
      _
    $region3: #{_lambda_.1} parent=1 // loop_header
      %s24 = sphi 0, %s28
      %p25 = scmp.ge.s32.totalorder %s24, 4
      %s34 = sphi 0, %s36
      %s37 = sphi 0, %s34
      %s38 = sphi 0, %s37
      %s54 = sphi 0, %s38
      %s58 = sphi 0, %s58
      %s60 = sphi 0, %s58
      %s61 = sphi 0, %s60
      %s75 = sphi 0, %s61
      %s79 = sphi 0, %s79
      %s81 = sphi 0, %s79
      %s82 = sphi 0, %s81
      %s96 = sphi 0, %s82
      %s100 = sphi 0, %s100
      %s102 = sphi 0, %s100
      %s103 = sphi 0, %s102
      %s117 = sphi 0, %s103
      %s121 = sphi 0, %s121
      %s123 = sphi 0, %s121
      %s124 = sphi 0, %s123
      %s138 = sphi 0, %s124
      %s142 = sphi 0, %s142
      %s144 = sphi 0, %s142
      %s145 = sphi 0, %s144
      %s159 = sphi 0, %s145
      %s163 = sphi 0, %s163
      %s165 = sphi 0, %s163
      %s166 = sphi 0, %s165
      %s180 = sphi 0, %s166
      %s184 = sphi 0, %s184
      %s186 = sphi 0, %s184
      %s187 = sphi 0, %s186
      %s201 = sphi 0, %s187
      %s205 = sphi 0, %s205
      %s207 = sphi 0, %s205
      %s208 = sphi 0, %s207
      %s222 = sphi 0, %s208
      %s226 = sphi 0, %s226
      %s228 = sphi 0, %s226
      %s229 = sphi 0, %s228
      %s243 = sphi 0, %s229
      %s247 = sphi 0, %s247
      %s249 = sphi 0, %s247
      %s250 = sphi 0, %s249
      %s264 = sphi 0, %s250
      %s268 = sphi 0, %s268
      %s270 = sphi 0, %s268
      %s271 = sphi 0, %s270
      %s285 = sphi 0, %s271
      %s289 = sphi 0, %s289
      %s291 = sphi 0, %s289
      %s292 = sphi 0, %s291
      %s306 = sphi 0, %s292
      %s310 = sphi 0, %s310
      %s312 = sphi 0, %s310
      %s313 = sphi 0, %s312
      %s327 = sphi 0, %s313
      %s331 = sphi 0, %s331
      %s333 = sphi 0, %s331
      %s334 = sphi 0, %s333
      %s348 = sphi 0, %s334
      %s354 = sphi 0, %s356
      %s357 = sphi 0, %s354
      %s358 = sphi 0, %s357
      %s374 = sphi 0, %s358
    $region4: #{_lambda_.1} parent=1 // loop_header_branch
      %27 = sbr.rel (%p25) target = $region8
    $region5: #{_lambda_.1} parent=1 // loop_body
      %s29 = ssub.s32 %s24, 1
      %s30 = ssub.s32 %s24, 2
      %s31 = sadd.s32 %s24, 1
      %s32 = ssub.s32 %s24, %s31
      %p33 = scmp.eq.s32.totalorder %s32, 0
      %s35 = sadd.s32 %s34, 1
      %s36 = scalar_select %p33, %s34, %s35
      %p39 = pneg %p33
      %p40 = scmp.eq.s32.totalorder %s24, 1
      %p41 = por %p39, %p40
      %p42 = scmp.ne.s32.totalorder %s34, %s37
      %p43 = scmp.eq.s32.totalorder %s24, 0
      %p44 = por %p42, %p43
      %p45 = scmp.ne.s32.totalorder %s34, %s37
      %p46 = scmp.eq.s32.totalorder %s29, 1
      %p47 = por %p45, %p46
      %p48 = scmp.ne.s32.totalorder %s37, %s38
      %p49 = scmp.eq.s32.totalorder %s29, 0
      %p50 = por %p48, %p49
      %p51 = scmp.ne.s32.totalorder %s37, %s38
      %p52 = scmp.eq.s32.totalorder %s30, 1
      %p53 = por %p51, %p52
      %p55 = scmp.ne.s32.totalorder %s38, %s54
      %p56 = scmp.eq.s32.totalorder %s30, 0
      %p57 = por %p55, %p56
      %s59 = sadd.s32 %s58, 1
      %p62 = scmp.eq.s32.totalorder %s24, 1
      %p63 = scmp.ne.s32.totalorder %s58, %s60
      %p64 = scmp.eq.s32.totalorder %s24, 0
      %p65 = por %p63, %p64
      %p66 = scmp.ne.s32.totalorder %s58, %s60
      %p67 = scmp.eq.s32.totalorder %s29, 1
      %p68 = por %p66, %p67
      %p69 = scmp.ne.s32.totalorder %s60, %s61
      %p70 = scmp.eq.s32.totalorder %s29, 0
      %p71 = por %p69, %p70
      %p72 = scmp.ne.s32.totalorder %s60, %s61
      %p73 = scmp.eq.s32.totalorder %s30, 1
      %p74 = por %p72, %p73
      %p76 = scmp.ne.s32.totalorder %s61, %s75
      %p77 = scmp.eq.s32.totalorder %s30, 0
      %p78 = por %p76, %p77
      %s80 = sadd.s32 %s79, 1
      %p83 = scmp.eq.s32.totalorder %s24, 1
      %p84 = scmp.ne.s32.totalorder %s79, %s81
      %p85 = scmp.eq.s32.totalorder %s24, 0
      %p86 = por %p84, %p85
      %p87 = scmp.ne.s32.totalorder %s79, %s81
      %p88 = scmp.eq.s32.totalorder %s29, 1
      %p89 = por %p87, %p88
      %p90 = scmp.ne.s32.totalorder %s81, %s82
      %p91 = scmp.eq.s32.totalorder %s29, 0
      %p92 = por %p90, %p91
      %p93 = scmp.ne.s32.totalorder %s81, %s82
      %p94 = scmp.eq.s32.totalorder %s30, 1
      %p95 = por %p93, %p94
      %p97 = scmp.ne.s32.totalorder %s82, %s96
      %p98 = scmp.eq.s32.totalorder %s30, 0
      %p99 = por %p97, %p98
      %s101 = sadd.s32 %s100, 1
      %p104 = scmp.eq.s32.totalorder %s24, 1
      %p105 = scmp.ne.s32.totalorder %s100, %s102
      %p106 = scmp.eq.s32.totalorder %s24, 0
      %p107 = por %p105, %p106
      %p108 = scmp.ne.s32.totalorder %s100, %s102
      %p109 = scmp.eq.s32.totalorder %s29, 1
      %p110 = por %p108, %p109
      %p111 = scmp.ne.s32.totalorder %s102, %s103
      %p112 = scmp.eq.s32.totalorder %s29, 0
      %p113 = por %p111, %p112
      %p114 = scmp.ne.s32.totalorder %s102, %s103
      %p115 = scmp.eq.s32.totalorder %s30, 1
      %p116 = por %p114, %p115
      %p118 = scmp.ne.s32.totalorder %s103, %s117
      %p119 = scmp.eq.s32.totalorder %s30, 0
      %p120 = por %p118, %p119
      %s122 = sadd.s32 %s121, 1
      %p125 = scmp.eq.s32.totalorder %s24, 1
      %p126 = scmp.ne.s32.totalorder %s121, %s123
      %p127 = scmp.eq.s32.totalorder %s24, 0
      %p128 = por %p126, %p127
      %p129 = scmp.ne.s32.totalorder %s121, %s123
      %p130 = scmp.eq.s32.totalorder %s29, 1
      %p131 = por %p129, %p130
      %p132 = scmp.ne.s32.totalorder %s123, %s124
      %p133 = scmp.eq.s32.totalorder %s29, 0
      %p134 = por %p132, %p133
      %p135 = scmp.ne.s32.totalorder %s123, %s124
      %p136 = scmp.eq.s32.totalorder %s30, 1
      %p137 = por %p135, %p136
      %p139 = scmp.ne.s32.totalorder %s124, %s138
      %p140 = scmp.eq.s32.totalorder %s30, 0
      %p141 = por %p139, %p140
      %s143 = sadd.s32 %s142, 1
      %p146 = scmp.eq.s32.totalorder %s24, 1
      %p147 = scmp.ne.s32.totalorder %s142, %s144
      %p148 = scmp.eq.s32.totalorder %s24, 0
      %p149 = por %p147, %p148
      %p150 = scmp.ne.s32.totalorder %s142, %s144
      %p151 = scmp.eq.s32.totalorder %s29, 1
      %p152 = por %p150, %p151
      %p153 = scmp.ne.s32.totalorder %s144, %s145
      %p154 = scmp.eq.s32.totalorder %s29, 0
      %p155 = por %p153, %p154
      %p156 = scmp.ne.s32.totalorder %s144, %s145
      %p157 = scmp.eq.s32.totalorder %s30, 1
      %p158 = por %p156, %p157
      %p160 = scmp.ne.s32.totalorder %s145, %s159
      %p161 = scmp.eq.s32.totalorder %s30, 0
      %p162 = por %p160, %p161
      %s164 = sadd.s32 %s163, 1
      %p167 = scmp.eq.s32.totalorder %s24, 1
      %p168 = scmp.ne.s32.totalorder %s163, %s165
      %p169 = scmp.eq.s32.totalorder %s24, 0
      %p170 = por %p168, %p169
      %p171 = scmp.ne.s32.totalorder %s163, %s165
      %p172 = scmp.eq.s32.totalorder %s29, 1
      %p173 = por %p171, %p172
      %p174 = scmp.ne.s32.totalorder %s165, %s166
      %p175 = scmp.eq.s32.totalorder %s29, 0
      %p176 = por %p174, %p175
      %p177 = scmp.ne.s32.totalorder %s165, %s166
      %p178 = scmp.eq.s32.totalorder %s30, 1
      %p179 = por %p177, %p178
      %p181 = scmp.ne.s32.totalorder %s166, %s180
      %p182 = scmp.eq.s32.totalorder %s30, 0
      %p183 = por %p181, %p182
      %s185 = sadd.s32 %s184, 1
      %p188 = scmp.eq.s32.totalorder %s24, 1
      %p189 = scmp.ne.s32.totalorder %s184, %s186
      %p190 = scmp.eq.s32.totalorder %s24, 0
      %p191 = por %p189, %p190
      %p192 = scmp.ne.s32.totalorder %s184, %s186
      %p193 = scmp.eq.s32.totalorder %s29, 1
      %p194 = por %p192, %p193
      %p195 = scmp.ne.s32.totalorder %s186, %s187
      %p196 = scmp.eq.s32.totalorder %s29, 0
      %p197 = por %p195, %p196
      %p198 = scmp.ne.s32.totalorder %s186, %s187
      %p199 = scmp.eq.s32.totalorder %s30, 1
      %p200 = por %p198, %p199
      %p202 = scmp.ne.s32.totalorder %s187, %s201
      %p203 = scmp.eq.s32.totalorder %s30, 0
      %p204 = por %p202, %p203
      %s206 = sadd.s32 %s205, 1
      %p209 = scmp.eq.s32.totalorder %s24, 1
      %p210 = scmp.ne.s32.totalorder %s205, %s207
      %p211 = scmp.eq.s32.totalorder %s24, 0
      %p212 = por %p210, %p211
      %p213 = scmp.ne.s32.totalorder %s205, %s207
      %p214 = scmp.eq.s32.totalorder %s29, 1
      %p215 = por %p213, %p214
      %p216 = scmp.ne.s32.totalorder %s207, %s208
      %p217 = scmp.eq.s32.totalorder %s29, 0
      %p218 = por %p216, %p217
      %p219 = scmp.ne.s32.totalorder %s207, %s208
      %p220 = scmp.eq.s32.totalorder %s30, 1
      %p221 = por %p219, %p220
      %p223 = scmp.ne.s32.totalorder %s208, %s222
      %p224 = scmp.eq.s32.totalorder %s30, 0
      %p225 = por %p223, %p224
      %s227 = sadd.s32 %s226, 1
      %p230 = scmp.eq.s32.totalorder %s24, 1
      %p231 = scmp.ne.s32.totalorder %s226, %s228
      %p232 = scmp.eq.s32.totalorder %s24, 0
      %p233 = por %p231, %p232
      %p234 = scmp.ne.s32.totalorder %s226, %s228
      %p235 = scmp.eq.s32.totalorder %s29, 1
      %p236 = por %p234, %p235
      %p237 = scmp.ne.s32.totalorder %s228, %s229
      %p238 = scmp.eq.s32.totalorder %s29, 0
      %p239 = por %p237, %p238
      %p240 = scmp.ne.s32.totalorder %s228, %s229
      %p241 = scmp.eq.s32.totalorder %s30, 1
      %p242 = por %p240, %p241
      %p244 = scmp.ne.s32.totalorder %s229, %s243
      %p245 = scmp.eq.s32.totalorder %s30, 0
      %p246 = por %p244, %p245
      %s248 = sadd.s32 %s247, 1
      %p251 = scmp.eq.s32.totalorder %s24, 1
      %p252 = scmp.ne.s32.totalorder %s247, %s249
      %p253 = scmp.eq.s32.totalorder %s24, 0
      %p254 = por %p252, %p253
      %p255 = scmp.ne.s32.totalorder %s247, %s249
      %p256 = scmp.eq.s32.totalorder %s29, 1
      %p257 = por %p255, %p256
      %p258 = scmp.ne.s32.totalorder %s249, %s250
      %p259 = scmp.eq.s32.totalorder %s29, 0
      %p260 = por %p258, %p259
      %p261 = scmp.ne.s32.totalorder %s249, %s250
      %p262 = scmp.eq.s32.totalorder %s30, 1
      %p263 = por %p261, %p262
      %p265 = scmp.ne.s32.totalorder %s250, %s264
      %p266 = scmp.eq.s32.totalorder %s30, 0
      %p267 = por %p265, %p266
      %s269 = sadd.s32 %s268, 1
      %p272 = scmp.eq.s32.totalorder %s24, 1
      %p273 = scmp.ne.s32.totalorder %s268, %s270
      %p274 = scmp.eq.s32.totalorder %s24, 0
      %p275 = por %p273, %p274
      %p276 = scmp.ne.s32.totalorder %s268, %s270
      %p277 = scmp.eq.s32.totalorder %s29, 1
      %p278 = por %p276, %p277
      %p279 = scmp.ne.s32.totalorder %s270, %s271
      %p280 = scmp.eq.s32.totalorder %s29, 0
      %p281 = por %p279, %p280
      %p282 = scmp.ne.s32.totalorder %s270, %s271
      %p283 = scmp.eq.s32.totalorder %s30, 1
      %p284 = por %p282, %p283
      %p286 = scmp.ne.s32.totalorder %s271, %s285
      %p287 = scmp.eq.s32.totalorder %s30, 0
      %p288 = por %p286, %p287
      %s290 = sadd.s32 %s289, 1
      %p293 = scmp.eq.s32.totalorder %s24, 1
      %p294 = scmp.ne.s32.totalorder %s289, %s291
      %p295 = scmp.eq.s32.totalorder %s24, 0
      %p296 = por %p294, %p295
      %p297 = scmp.ne.s32.totalorder %s289, %s291
      %p298 = scmp.eq.s32.totalorder %s29, 1
      %p299 = por %p297, %p298
      %p300 = scmp.ne.s32.totalorder %s291, %s292
      %p301 = scmp.eq.s32.totalorder %s29, 0
      %p302 = por %p300, %p301
      %p303 = scmp.ne.s32.totalorder %s291, %s292
      %p304 = scmp.eq.s32.totalorder %s30, 1
      %p305 = por %p303, %p304
      %p307 = scmp.ne.s32.totalorder %s292, %s306
      %p308 = scmp.eq.s32.totalorder %s30, 0
      %p309 = por %p307, %p308
      %s311 = sadd.s32 %s310, 1
      %p314 = scmp.eq.s32.totalorder %s24, 1
      %p315 = scmp.ne.s32.totalorder %s310, %s312
      %p316 = scmp.eq.s32.totalorder %s24, 0
      %p317 = por %p315, %p316
      %p318 = scmp.ne.s32.totalorder %s310, %s312
      %p319 = scmp.eq.s32.totalorder %s29, 1
      %p320 = por %p318, %p319
      %p321 = scmp.ne.s32.totalorder %s312, %s313
      %p322 = scmp.eq.s32.totalorder %s29, 0
      %p323 = por %p321, %p322
      %p324 = scmp.ne.s32.totalorder %s312, %s313
      %p325 = scmp.eq.s32.totalorder %s30, 1
      %p326 = por %p324, %p325
      %p328 = scmp.ne.s32.totalorder %s313, %s327
      %p329 = scmp.eq.s32.totalorder %s30, 0
      %p330 = por %p328, %p329
      %s332 = sadd.s32 %s331, 1
      %p335 = scmp.eq.s32.totalorder %s24, 1
      %p336 = scmp.ne.s32.totalorder %s331, %s333
      %p337 = scmp.eq.s32.totalorder %s24, 0
      %p338 = por %p336, %p337
      %p339 = scmp.ne.s32.totalorder %s331, %s333
      %p340 = scmp.eq.s32.totalorder %s29, 1
      %p341 = por %p339, %p340
      %p342 = scmp.ne.s32.totalorder %s333, %s334
      %p343 = scmp.eq.s32.totalorder %s29, 0
      %p344 = por %p342, %p343
      %p345 = scmp.ne.s32.totalorder %s333, %s334
      %p346 = scmp.eq.s32.totalorder %s30, 1
      %p347 = por %p345, %p346
      %p349 = scmp.ne.s32.totalorder %s334, %s348
      %p350 = scmp.eq.s32.totalorder %s30, 0
      %p351 = por %p349, %p350
      %s352 = ssub.s32 %s24, %s31
      %p353 = scmp.eq.s32.totalorder %s352, 0
      %s355 = sadd.s32 %s354, 1
      %s356 = scalar_select %p353, %s354, %s355
      %p359 = pneg %p353
      %p360 = scmp.eq.s32.totalorder %s24, 1
      %p361 = por %p359, %p360
      %p362 = scmp.ne.s32.totalorder %s354, %s357
      %p363 = scmp.eq.s32.totalorder %s24, 0
      %p364 = por %p362, %p363
      %p365 = scmp.ne.s32.totalorder %s354, %s357
      %p366 = scmp.eq.s32.totalorder %s29, 1
      %p367 = por %p365, %p366
      %p368 = scmp.ne.s32.totalorder %s357, %s358
      %p369 = scmp.eq.s32.totalorder %s29, 0
      %p370 = por %p368, %p369
      %p371 = scmp.ne.s32.totalorder %s357, %s358
      %p372 = scmp.eq.s32.totalorder %s30, 1
      %p373 = por %p371, %p372
      %p375 = scmp.ne.s32.totalorder %s358, %s374
      %p376 = scmp.eq.s32.totalorder %s30, 0
      %p377 = por %p375, %p376
      %p378 = scmp.le.s32.totalorder 1, %s24
      %p379 = scmp.lt.s32.totalorder %s24, 3
      %p380 = pnand %p378, %p379
      %p381 = pneg %p380
      // Predicated region
      $region9: #{_lambda_.1} parent=5 // pred_check
        _
      $region10: #{_lambda_.1} parent=5 // pred_check_branch
        %383 = sbr.rel (%p380) target = $region12
      $region11: #{_lambda_.1} parent=5 // pred_region
        %s384 = ssub.s32 %s24, 1
        // Predicated region
        $region13: #{_lambda_.1} parent=11 // pred_check
          %p385 = pneg %p71
        $region14: #{_lambda_.1} parent=11 // pred_check_branch
          %387 = sbr.rel (%p385) target = $region16
        $region15: #{_lambda_.1} parent=11 // pred_region
          _
        $region16: #{_lambda_.1} parent=11 // pred_fallthru
          _
        // Predicated region
        $region17: #{_lambda_.1} parent=11 // pred_check
          %p388 = pneg %p92
        $region18: #{_lambda_.1} parent=11 // pred_check_branch
          %390 = sbr.rel (%p388) target = $region20
        $region19: #{_lambda_.1} parent=11 // pred_region
          _
        $region20: #{_lambda_.1} parent=11 // pred_fallthru
          _
        // Predicated region
        $region21: #{_lambda_.1} parent=11 // pred_check
          %p391 = pneg %p113
        $region22: #{_lambda_.1} parent=11 // pred_check_branch
          %393 = sbr.rel (%p391) target = $region24
        $region23: #{_lambda_.1} parent=11 // pred_region
          _
        $region24: #{_lambda_.1} parent=11 // pred_fallthru
          _
        // Predicated region
        $region25: #{_lambda_.1} parent=11 // pred_check
          %p394 = pneg %p134
        $region26: #{_lambda_.1} parent=11 // pred_check_branch
          %396 = sbr.rel (%p394) target = $region28
        $region27: #{_lambda_.1} parent=11 // pred_region
          _
        $region28: #{_lambda_.1} parent=11 // pred_fallthru
          _
        // Predicated region
        $region29: #{_lambda_.1} parent=11 // pred_check
          %p397 = pneg %p155
        $region30: #{_lambda_.1} parent=11 // pred_check_branch
          %399 = sbr.rel (%p397) target = $region32
        $region31: #{_lambda_.1} parent=11 // pred_region
          _
        $region32: #{_lambda_.1} parent=11 // pred_fallthru
          _
        // Predicated region
        $region33: #{_lambda_.1} parent=11 // pred_check
          %p400 = pneg %p176
        $region34: #{_lambda_.1} parent=11 // pred_check_branch
          %402 = sbr.rel (%p400) target = $region36
        $region35: #{_lambda_.1} parent=11 // pred_region
          _
        $region36: #{_lambda_.1} parent=11 // pred_fallthru
          _
        // Predicated region
        $region37: #{_lambda_.1} parent=11 // pred_check
          %p403 = pneg %p197
        $region38: #{_lambda_.1} parent=11 // pred_check_branch
          %405 = sbr.rel (%p403) target = $region40
        $region39: #{_lambda_.1} parent=11 // pred_region
          _
        $region40: #{_lambda_.1} parent=11 // pred_fallthru
          _
        // Predicated region
        $region41: #{_lambda_.1} parent=11 // pred_check
          %p406 = pneg %p218
        $region42: #{_lambda_.1} parent=11 // pred_check_branch
          %408 = sbr.rel (%p406) target = $region44
        $region43: #{_lambda_.1} parent=11 // pred_region
          _
        $region44: #{_lambda_.1} parent=11 // pred_fallthru
          _
        // Predicated region
        $region45: #{_lambda_.1} parent=11 // pred_check
          %p409 = pneg %p239
        $region46: #{_lambda_.1} parent=11 // pred_check_branch
          %411 = sbr.rel (%p409) target = $region48
        $region47: #{_lambda_.1} parent=11 // pred_region
          _
        $region48: #{_lambda_.1} parent=11 // pred_fallthru
          _
        // Predicated region
        $region49: #{_lambda_.1} parent=11 // pred_check
          %p412 = pneg %p260
        $region50: #{_lambda_.1} parent=11 // pred_check_branch
          %414 = sbr.rel (%p412) target = $region52
        $region51: #{_lambda_.1} parent=11 // pred_region
          _
        $region52: #{_lambda_.1} parent=11 // pred_fallthru
          _
        // Predicated region
        $region53: #{_lambda_.1} parent=11 // pred_check
          %p415 = pneg %p281
        $region54: #{_lambda_.1} parent=11 // pred_check_branch
          %417 = sbr.rel (%p415) target = $region56
        $region55: #{_lambda_.1} parent=11 // pred_region
          _
        $region56: #{_lambda_.1} parent=11 // pred_fallthru
          _
        // Predicated region
        $region57: #{_lambda_.1} parent=11 // pred_check
          %p418 = pneg %p302
        $region58: #{_lambda_.1} parent=11 // pred_check_branch
          %420 = sbr.rel (%p418) target = $region60
        $region59: #{_lambda_.1} parent=11 // pred_region
          _
        $region60: #{_lambda_.1} parent=11 // pred_fallthru
          _
        // Predicated region
        $region61: #{_lambda_.1} parent=11 // pred_check
          %p421 = pneg %p323
        $region62: #{_lambda_.1} parent=11 // pred_check_branch
          %423 = sbr.rel (%p421) target = $region64
        $region63: #{_lambda_.1} parent=11 // pred_region
          _
        $region64: #{_lambda_.1} parent=11 // pred_fallthru
          _
        // Predicated region
        $region65: #{_lambda_.1} parent=11 // pred_check
          %p424 = pneg %p344
        $region66: #{_lambda_.1} parent=11 // pred_check_branch
          %426 = sbr.rel (%p424) target = $region68
        $region67: #{_lambda_.1} parent=11 // pred_region
          _
        $region68: #{_lambda_.1} parent=11 // pred_fallthru
          _
      $region12: #{_lambda_.1} parent=5 // pred_fallthru
        _
      %p427 = scmp.lt.s32.totalorder %s24, 2
      // Predicated region
      $region69: #{_lambda_.1} parent=5 // pred_check
        %p428 = pneg %p427
      $region70: #{_lambda_.1} parent=5 // pred_check_branch
        %430 = sbr.rel (%p428) target = $region72
      $region71: #{_lambda_.1} parent=5 // pred_region
        // Predicated region
        $region73: #{_lambda_.1} parent=71 // pred_check
          %p431 = pneg %p44
        $region74: #{_lambda_.1} parent=71 // pred_check_branch
          %433 = sbr.rel (%p431) target = $region76
        $region75: #{_lambda_.1} parent=71 // pred_region
          %p434 = scmp.lt.s32.totalorder %s24, 1
          %s435 = scalar_select %p434, %s24, 1
          %s436 = smul.addr %s435, 32
          %s437 = smul.addr %s436, 4
          %s438 = scalar_lea.vmem %s0, %s437
        $region76: #{_lambda_.1} parent=71 // pred_fallthru
          _
      $region72: #{_lambda_.1} parent=5 // pred_fallthru
        _
      %p439 = scmp.le.s32.totalorder 1, %s24
      %p440 = scmp.lt.s32.totalorder %s24, 3
      %p441 = pnand %p439, %p440
      %p442 = pneg %p441
      // Predicated region
      $region77: #{_lambda_.1} parent=5 // pred_check
        _
      $region78: #{_lambda_.1} parent=5 // pred_check_branch
        %444 = sbr.rel (%p441) target = $region80
      $region79: #{_lambda_.1} parent=5 // pred_region
        %s445 = ssub.s32 %s24, 1
        %p446 = scmp.lt.s32.totalorder %s29, 1
        %s447 = scalar_select %p446, %s29, 1
        %s448 = smul.addr %s447, 32
        %s449 = smul.addr %s448, 4
        %s450 = scalar_lea.vmem %s0, %s449
        %p451 = pneg %p50
        %p452 = pneg %p47
        %p453 = pneg %p71
        %p454 = pneg %p68
        %p455 = pneg %p92
        %p456 = pneg %p89
        %p457 = pneg %p113
        %p458 = pneg %p110
        %p459 = pneg %p134
        %p460 = pneg %p131
        %p461 = pneg %p155
        %p462 = pneg %p152
        %p463 = pneg %p176
        %p464 = pneg %p173
        %p465 = pneg %p197
        %p466 = pneg %p194
        %p467 = pneg %p218
        %p468 = pneg %p215
        %p469 = pneg %p239
        %p470 = pneg %p236
        %p471 = pneg %p260
        %p472 = pneg %p257
        %p473 = pneg %p281
        %p474 = pneg %p278
        %p475 = pneg %p302
        %p476 = pneg %p299
        %p477 = pneg %p323
        %p478 = pneg %p320
        %p479 = pneg %p344
        %p480 = pneg %p341
        %p481 = pneg %p370
        %p482 = pneg %p367
        %s483 = sand.u32 %s357, 1
        %s484 = scalar_lea.sflag [#allocation3], %s483
        %s485 = sand.u32 %s357, 1
        %s486 = scalar_lea.vmem [#allocation2], %s485
        %p487 = scmp.lt.s32.totalorder %s29, 1
        %s488 = scalar_select %p487, %s29, 1
        %s489 = smul.addr %s488, 32
        %s490 = smul.addr %s489, 4
        %s491 = scalar_lea.vmem %s0, %s490
        %v493 = vld [vmem:[%s491] sm:$0xf]
        %v494 = vld [vmem:[%s491 + $0x4] sm:$0xf]
        %v495 = vld [vmem:[%s491 + $0x8] sm:$0xf]
        %v496 = vld [vmem:[%s491 + $0xc] sm:$0xf]
        %v497 = vld [vmem:[%s491 + $0x10] sm:$0xf]
        %v498 = vld [vmem:[%s491 + $0x14] sm:$0xf]
        %v499 = vld [vmem:[%s491 + $0x18] sm:$0xf]
        %v500 = vld [vmem:[%s491 + $0x1c] sm:$0xf]
        %v501 = vld [vmem:[%s491 + $0x20] sm:$0xf]
        %v502 = vld [vmem:[%s491 + $0x24] sm:$0xf]
        %v503 = vld [vmem:[%s491 + $0x28] sm:$0xf]
        %v504 = vld [vmem:[%s491 + $0x2c] sm:$0xf]
        %v505 = vld [vmem:[%s491 + $0x30] sm:$0xf]
        %v506 = vld [vmem:[%s491 + $0x34] sm:$0xf]
        %v507 = vld [vmem:[%s491 + $0x38] sm:$0xf]
        %v508 = vld [vmem:[%s491 + $0x3c] sm:$0xf]
        %v509 = vld [vmem:[%s491 + $0x40] sm:$0xf]
        %v510 = vld [vmem:[%s491 + $0x44] sm:$0xf]
        %v511 = vld [vmem:[%s491 + $0x48] sm:$0xf]
        %v512 = vld [vmem:[%s491 + $0x4c] sm:$0xf]
        %v513 = vld [vmem:[%s491 + $0x50] sm:$0xf]
        %v514 = vld [vmem:[%s491 + $0x54] sm:$0xf]
        %v515 = vld [vmem:[%s491 + $0x58] sm:$0xf]
        %v516 = vld [vmem:[%s491 + $0x5c] sm:$0xf]
        %v517 = vld [vmem:[%s491 + $0x60] sm:$0xf]
        %v518 = vld [vmem:[%s491 + $0x64] sm:$0xf]
        %v519 = vld [vmem:[%s491 + $0x68] sm:$0xf]
        %v520 = vld [vmem:[%s491 + $0x6c] sm:$0xf]
        %v521 = vld [vmem:[%s491 + $0x70] sm:$0xf]
        %v522 = vld [vmem:[%s491 + $0x74] sm:$0xf]
        %v523 = vld [vmem:[%s491 + $0x78] sm:$0xf]
        %v524 = vld [vmem:[%s491 + $0x7c] sm:$0xf]
        %v525 = vld [vmem:[%s1] sm:$0xf]
        %v526 = vld [vmem:[%s1 + $0x4] sm:$0xf]
        %v527 = vld [vmem:[%s1 + $0x8] sm:$0xf]
        %v528 = vld [vmem:[%s1 + $0xc] sm:$0x3]
        %v529 = vld [vmem:[%s2] sm:$0x1]
        %v531 = vlaneseq
        %v532 = vshrl.u32 %v531, 7
        %v533 = vsub.s32 0, %v532
        %v534 = vrot.slane %v529, %v533
        %v568 = vunpack.c.l.b16 %v493
        %v569 = vunpack.c.l.b16 %v494
        %v570 = vunpack.c.l.b16 %v495
        %v571 = vunpack.c.l.b16 %v496
        %v572 = vunpack.c.l.b16 %v497
        %v573 = vunpack.c.l.b16 %v498
        %v574 = vunpack.c.l.b16 %v499
        %v575 = vunpack.c.l.b16 %v500
        %v576 = vunpack.c.l.b16 %v501
        %v577 = vunpack.c.l.b16 %v502
        %v578 = vunpack.c.l.b16 %v503
        %v579 = vunpack.c.l.b16 %v504
        %v580 = vunpack.c.l.b16 %v505
        %v581 = vunpack.c.l.b16 %v506
        %v582 = vunpack.c.l.b16 %v507
        %v583 = vunpack.c.l.b16 %v508
        %v584 = vunpack.c.l.b16 %v509
        %v585 = vunpack.c.l.b16 %v510
        %v586 = vunpack.c.l.b16 %v511
        %v587 = vunpack.c.l.b16 %v512
        %v588 = vunpack.c.l.b16 %v513
        %v589 = vunpack.c.l.b16 %v514
        %v590 = vunpack.c.l.b16 %v515
        %v591 = vunpack.c.l.b16 %v516
        %v592 = vunpack.c.l.b16 %v517
        %v593 = vunpack.c.l.b16 %v518
        %v594 = vunpack.c.l.b16 %v519
        %v595 = vunpack.c.l.b16 %v520
        %v596 = vunpack.c.l.b16 %v521
        %v597 = vunpack.c.l.b16 %v522
        %v598 = vunpack.c.l.b16 %v523
        %v599 = vunpack.c.l.b16 %v524
        %v600 = vpack.c.b16 %v569, %v568
        %v601 = vpack.c.b16 %v571, %v570
        %v602 = vpack.c.b16 %v573, %v572
        %v603 = vpack.c.b16 %v575, %v574
        %v604 = vpack.c.b16 %v577, %v576
        %v605 = vpack.c.b16 %v579, %v578
        %v606 = vpack.c.b16 %v581, %v580
        %v607 = vpack.c.b16 %v583, %v582
        %v608 = vpack.c.b16 %v585, %v584
        %v609 = vpack.c.b16 %v587, %v586
        %v610 = vpack.c.b16 %v589, %v588
        %v611 = vpack.c.b16 %v591, %v590
        %v612 = vpack.c.b16 %v593, %v592
        %v613 = vpack.c.b16 %v595, %v594
        %v614 = vpack.c.b16 %v597, %v596
        %v615 = vpack.c.b16 %v599, %v598
        %v620 = vunpack.c.l.b16 %v525
        %v621 = vunpack.c.l.b16 %v526
        %v622 = vunpack.c.l.b16 %v527
        %v623 = vunpack.c.l.b16 %v528
        %v624 = vpack.c.b16 %v621, %v620
        %v625 = vpack.c.b16 %v623, %v622
        %vm627 = vcmask 220160
        %v629 = vsel %vm627, %v600, 0
        %v632 = vsel %vm627, %v601, 0
        %v635 = vsel %vm627, %v602, 0
        %v638 = vsel %vm627, %v603, 0
        %v641 = vsel %vm627, %v604, 0
        %v644 = vsel %vm627, %v605, 0
        %v647 = vsel %vm627, %v606, 0
        %v650 = vsel %vm627, %v607, 0
        %v653 = vsel %vm627, %v608, 0
        %v656 = vsel %vm627, %v609, 0
        %v659 = vsel %vm627, %v610, 0
        %v662 = vsel %vm627, %v611, 0
        %v665 = vsel %vm627, %v612, 0
        %v668 = vsel %vm627, %v613, 0
        %v671 = vsel %vm627, %v614, 0
        %v674 = vsel %vm627, %v615, 0
        %vm676 = vcmask 1044480
        %vm677 = vcmask 1045504
        %v678 = vsel %vm676, 4294967295, 65535
        %v679 = vsel %vm677, %v678, 0
        %v681 = vand.u32 %v625, %v679
        %683 = vmatprep.subr.bf16.mxu0 0
        %684 = vmatpush1.bf16.msra.mxu0 0
        %685 = vmatprep.subr.bf16.mxu0 0
        %686 = vmatpush1.bf16.msra.mxu0 0
        %687 = vmatprep.subr.bf16.mxu0 0
        %688 = vmatpush1.bf16.msra.mxu0 0
        %689 = vmatprep.subr.bf16.mxu0 0
        %690 = vmatpush1.bf16.msra.mxu0 0
        %691 = vmatprep.subr.bf16.mxu0 0
        %692 = vmatpush1.bf16.msra.mxu0 0
        %693 = vmatprep.subr.bf16.mxu0 0
        %694 = vmatpush1.bf16.msra.mxu0 0
        %695 = vmatprep.subr.bf16.mxu0 0
        %696 = vmatpush1.bf16.msra.mxu0 %v681
        %697 = vmatprep.subr.bf16.mxu0 0
        %698 = vmatpush1.bf16.msra.mxu0 %v624
        %699 = vmatprep.subr.bf16.mxu0 0
        %700 = vmatpush2.bf16.msra.mxu0 0
        %701 = vmatprep.subr.bf16.mxu0 0
        %702 = vmatpush2.bf16.msra.mxu0 0
        %703 = vmatprep.subr.bf16.mxu0 0
        %704 = vmatpush2.bf16.msra.mxu0 0
        %705 = vmatprep.subr.bf16.mxu0 0
        %706 = vmatpush2.bf16.msra.mxu0 0
        %707 = vmatprep.subr.bf16.mxu0 0
        %708 = vmatpush2.bf16.msra.mxu0 0
        %709 = vmatprep.subr.bf16.mxu0 0
        %710 = vmatpush2.bf16.msra.mxu0 0
        %711 = vmatprep.subr.bf16.mxu0 0
        %712 = vmatpush2.bf16.msra.mxu0 0
        %713 = vmatprep.subr.bf16.mxu0 0
        %714 = vmatpush2.bf16.msra.mxu0 0
        %715 = vmatprep.mubr.bf16.mxu0 0
        %716 = vmatmul.mubr.bf16.gmra.mxu0 %v629
        %v717 = vpop.f32.mrf.mxu0
        %v718 = vadd.f32 %v534, %v717
        %v719 = vpop.f32.mrf.mxu0
        %v720 = vpop.f32.mrf.mxu0
        %v721 = vadd.f32 %v534, %v720
        %v722 = vpop.f32.mrf.mxu0
        %723 = vmatprep.mubr.bf16.mxu0 0
        %724 = vmatmul.mubr.bf16.gmra.mxu0 %v632
        %v725 = vpop.f32.mrf.mxu0
        %v726 = vadd.f32 %v534, %v725
        %v727 = vpop.f32.mrf.mxu0
        %v728 = vpop.f32.mrf.mxu0
        %v729 = vadd.f32 %v534, %v728
        %v730 = vpop.f32.mrf.mxu0
        %731 = vmatprep.mubr.bf16.mxu0 0
        %732 = vmatmul.mubr.bf16.gmra.mxu0 %v635
        %v733 = vpop.f32.mrf.mxu0
        %v734 = vadd.f32 %v534, %v733
        %v735 = vpop.f32.mrf.mxu0
        %v736 = vpop.f32.mrf.mxu0
        %v737 = vadd.f32 %v534, %v736
        %v738 = vpop.f32.mrf.mxu0
        %739 = vmatprep.mubr.bf16.mxu0 0
        %740 = vmatmul.mubr.bf16.gmra.mxu0 %v638
        %v741 = vpop.f32.mrf.mxu0
        %v742 = vadd.f32 %v534, %v741
        %v743 = vpop.f32.mrf.mxu0
        %v744 = vpop.f32.mrf.mxu0
        %v745 = vadd.f32 %v534, %v744
        %v746 = vpop.f32.mrf.mxu0
        %747 = vmatprep.mubr.bf16.mxu0 0
        %748 = vmatmul.mubr.bf16.gmra.mxu0 %v641
        %v749 = vpop.f32.mrf.mxu0
        %v750 = vadd.f32 %v534, %v749
        %v751 = vpop.f32.mrf.mxu0
        %v752 = vpop.f32.mrf.mxu0
        %v753 = vadd.f32 %v534, %v752
        %v754 = vpop.f32.mrf.mxu0
        %755 = vmatprep.mubr.bf16.mxu0 0
        %756 = vmatmul.mubr.bf16.gmra.mxu0 %v644
        %v757 = vpop.f32.mrf.mxu0
        %v758 = vadd.f32 %v534, %v757
        %v759 = vpop.f32.mrf.mxu0
        %v760 = vpop.f32.mrf.mxu0
        %v761 = vadd.f32 %v534, %v760
        %v762 = vpop.f32.mrf.mxu0
        %763 = vmatprep.mubr.bf16.mxu0 0
        %764 = vmatmul.mubr.bf16.gmra.mxu0 %v647
        %v765 = vpop.f32.mrf.mxu0
        %v766 = vadd.f32 %v534, %v765
        %v767 = vpop.f32.mrf.mxu0
        %v768 = vpop.f32.mrf.mxu0
        %v769 = vadd.f32 %v534, %v768
        %v770 = vpop.f32.mrf.mxu0
        %771 = vmatprep.mubr.bf16.mxu0 0
        %772 = vmatmul.mubr.bf16.gmra.mxu0 %v650
        %v773 = vpop.f32.mrf.mxu0
        %v774 = vadd.f32 %v534, %v773
        %v775 = vpop.f32.mrf.mxu0
        %v776 = vpop.f32.mrf.mxu0
        %v777 = vadd.f32 %v534, %v776
        %v778 = vpop.f32.mrf.mxu0
        %779 = vmatprep.mubr.bf16.mxu0 0
        %780 = vmatmul.mubr.bf16.gmra.mxu0 %v653
        %v781 = vpop.f32.mrf.mxu0
        %v782 = vadd.f32 %v534, %v781
        %v783 = vpop.f32.mrf.mxu0
        %v784 = vpop.f32.mrf.mxu0
        %v785 = vadd.f32 %v534, %v784
        %v786 = vpop.f32.mrf.mxu0
        %787 = vmatprep.mubr.bf16.mxu0 0
        %788 = vmatmul.mubr.bf16.gmra.mxu0 %v656
        %v789 = vpop.f32.mrf.mxu0
        %v790 = vadd.f32 %v534, %v789
        %v791 = vpop.f32.mrf.mxu0
        %v792 = vpop.f32.mrf.mxu0
        %v793 = vadd.f32 %v534, %v792
        %v794 = vpop.f32.mrf.mxu0
        %795 = vmatprep.mubr.bf16.mxu0 0
        %796 = vmatmul.mubr.bf16.gmra.mxu0 %v659
        %v797 = vpop.f32.mrf.mxu0
        %v798 = vadd.f32 %v534, %v797
        %v799 = vpop.f32.mrf.mxu0
        %v800 = vpop.f32.mrf.mxu0
        %v801 = vadd.f32 %v534, %v800
        %v802 = vpop.f32.mrf.mxu0
        %803 = vmatprep.mubr.bf16.mxu0 0
        %804 = vmatmul.mubr.bf16.gmra.mxu0 %v662
        %v805 = vpop.f32.mrf.mxu0
        %v806 = vadd.f32 %v534, %v805
        %v807 = vpop.f32.mrf.mxu0
        %v808 = vpop.f32.mrf.mxu0
        %v809 = vadd.f32 %v534, %v808
        %v810 = vpop.f32.mrf.mxu0
        %811 = vmatprep.mubr.bf16.mxu0 0
        %812 = vmatmul.mubr.bf16.gmra.mxu0 %v665
        %v813 = vpop.f32.mrf.mxu0
        %v814 = vadd.f32 %v534, %v813
        %v815 = vpop.f32.mrf.mxu0
        %v816 = vpop.f32.mrf.mxu0
        %v817 = vadd.f32 %v534, %v816
        %v818 = vpop.f32.mrf.mxu0
        %819 = vmatprep.mubr.bf16.mxu0 0
        %820 = vmatmul.mubr.bf16.gmra.mxu0 %v668
        %v821 = vpop.f32.mrf.mxu0
        %v822 = vadd.f32 %v534, %v821
        %v823 = vpop.f32.mrf.mxu0
        %v824 = vpop.f32.mrf.mxu0
        %v825 = vadd.f32 %v534, %v824
        %v826 = vpop.f32.mrf.mxu0
        %827 = vmatprep.mubr.bf16.mxu0 0
        %828 = vmatmul.mubr.bf16.gmra.mxu0 %v671
        %v829 = vpop.f32.mrf.mxu0
        %v830 = vadd.f32 %v534, %v829
        %v831 = vpop.f32.mrf.mxu0
        %v832 = vpop.f32.mrf.mxu0
        %v833 = vadd.f32 %v534, %v832
        %v834 = vpop.f32.mrf.mxu0
        %835 = vmatprep.mubr.bf16.mxu0 0
        %836 = vmatmul.mubr.bf16.gmra.mxu0 %v674
        %v837 = vpop.f32.mrf.mxu0
        %v838 = vadd.f32 %v534, %v837
        %v839 = vpop.f32.mrf.mxu0
        %v840 = vpop.f32.mrf.mxu0
        %v841 = vadd.f32 %v534, %v840
        %v842 = vpop.f32.mrf.mxu0
        %843 = vdwg.mxu0
        %v844 = vmax.f32 %v718, 0.0
        %v845 = vmax.f32 %v721, 0.0
        %v846 = vmax.f32 %v726, 0.0
        %v847 = vmax.f32 %v729, 0.0
        %v848 = vmax.f32 %v734, 0.0
        %v849 = vmax.f32 %v737, 0.0
        %v850 = vmax.f32 %v742, 0.0
        %v851 = vmax.f32 %v745, 0.0
        %v852 = vmax.f32 %v750, 0.0
        %v853 = vmax.f32 %v753, 0.0
        %v854 = vmax.f32 %v758, 0.0
        %v855 = vmax.f32 %v761, 0.0
        %v856 = vmax.f32 %v766, 0.0
        %v857 = vmax.f32 %v769, 0.0
        %v858 = vmax.f32 %v774, 0.0
        %v859 = vmax.f32 %v777, 0.0
        %v860 = vmax.f32 %v782, 0.0
        %v861 = vmax.f32 %v785, 0.0
        %v862 = vmax.f32 %v790, 0.0
        %v863 = vmax.f32 %v793, 0.0
        %v864 = vmax.f32 %v798, 0.0
        %v865 = vmax.f32 %v801, 0.0
        %v866 = vmax.f32 %v806, 0.0
        %v867 = vmax.f32 %v809, 0.0
        %v868 = vmax.f32 %v814, 0.0
        %v869 = vmax.f32 %v817, 0.0
        %v870 = vmax.f32 %v822, 0.0
        %v871 = vmax.f32 %v825, 0.0
        %v872 = vmax.f32 %v830, 0.0
        %v873 = vmax.f32 %v833, 0.0
        %v874 = vmax.f32 %v838, 0.0
        %v875 = vmax.f32 %v841, 0.0
        %v876 = vpack.c.bf16 %v845, %v844
        %v877 = vpack.c.bf16 %v847, %v846
        %v878 = vpack.c.bf16 %v849, %v848
        %v879 = vpack.c.bf16 %v851, %v850
        %v880 = vpack.c.bf16 %v853, %v852
        %v881 = vpack.c.bf16 %v855, %v854
        %v882 = vpack.c.bf16 %v857, %v856
        %v883 = vpack.c.bf16 %v859, %v858
        %v884 = vpack.c.bf16 %v861, %v860
        %v885 = vpack.c.bf16 %v863, %v862
        %v886 = vpack.c.bf16 %v865, %v864
        %v887 = vpack.c.bf16 %v867, %v866
        %v888 = vpack.c.bf16 %v869, %v868
        %v889 = vpack.c.bf16 %v871, %v870
        %v890 = vpack.c.bf16 %v873, %v872
        %v891 = vpack.c.bf16 %v875, %v874
        %v892 = vld [vmem:[%s3] sm:$0xff]
        %v893 = vld [vmem:[%s3 + $0x8] sm:$0xff]
        %v894 = vld [vmem:[%s3 + $0x10] sm:$0xff]
        %v895 = vld [vmem:[%s3 + $0x18] sm:$0xff]
        %v896 = vld [vmem:[%s3 + $0x20] sm:$0xff]
        %v897 = vld [vmem:[%s3 + $0x28] sm:$0xff]
        %v898 = vld [vmem:[%s3 + $0x30] sm:$0xff]
        %v899 = vld [vmem:[%s3 + $0x38] sm:$0xff]
        %v908 = vunpack.c.l.b16 %v892
        %v909 = vunpack.c.h.b16 %v892
        %v910 = vunpack.c.l.b16 %v893
        %v911 = vunpack.c.h.b16 %v893
        %v912 = vunpack.c.l.b16 %v894
        %v913 = vunpack.c.h.b16 %v894
        %v914 = vunpack.c.l.b16 %v895
        %v915 = vunpack.c.h.b16 %v895
        %v916 = vunpack.c.l.b16 %v896
        %v917 = vunpack.c.h.b16 %v896
        %v918 = vunpack.c.l.b16 %v897
        %v919 = vunpack.c.h.b16 %v897
        %v920 = vunpack.c.l.b16 %v898
        %v921 = vunpack.c.h.b16 %v898
        %v922 = vunpack.c.l.b16 %v899
        %v923 = vunpack.c.h.b16 %v899
        %v924 = vpack.c.b16 %v910, %v908
        %v925 = vpack.c.b16 %v911, %v909
        %v926 = vpack.c.b16 %v914, %v912
        %v927 = vpack.c.b16 %v915, %v913
        %v928 = vpack.c.b16 %v918, %v916
        %v929 = vpack.c.b16 %v919, %v917
        %v930 = vpack.c.b16 %v922, %v920
        %v931 = vpack.c.b16 %v923, %v921
        %940 = vmatprep.subr.bf16.mxu0 0
        %941 = vmatpush1.bf16.msra.mxu0 %v883
        %942 = vmatprep.subr.bf16.mxu0 0
        %943 = vmatpush1.bf16.msra.mxu0 %v882
        %944 = vmatprep.subr.bf16.mxu0 0
        %945 = vmatpush1.bf16.msra.mxu0 %v881
        %946 = vmatprep.subr.bf16.mxu0 0
        %947 = vmatpush1.bf16.msra.mxu0 %v880
        %948 = vmatprep.subr.bf16.mxu0 0
        %949 = vmatpush1.bf16.msra.mxu0 %v879
        %950 = vmatprep.subr.bf16.mxu0 0
        %951 = vmatpush1.bf16.msra.mxu0 %v878
        %952 = vmatprep.subr.bf16.mxu0 0
        %953 = vmatpush1.bf16.msra.mxu0 %v877
        %954 = vmatprep.subr.bf16.mxu0 0
        %955 = vmatpush1.bf16.msra.mxu0 %v876
        %956 = vmatprep.subr.bf16.mxu0 0
        %957 = vmatpush2.bf16.msra.mxu0 %v891
        %958 = vmatprep.subr.bf16.mxu0 0
        %959 = vmatpush2.bf16.msra.mxu0 %v890
        %960 = vmatprep.subr.bf16.mxu0 0
        %961 = vmatpush2.bf16.msra.mxu0 %v889
        %962 = vmatprep.subr.bf16.mxu0 0
        %963 = vmatpush2.bf16.msra.mxu0 %v888
        %964 = vmatprep.subr.bf16.mxu0 0
        %965 = vmatpush2.bf16.msra.mxu0 %v887
        %966 = vmatprep.subr.bf16.mxu0 0
        %967 = vmatpush2.bf16.msra.mxu0 %v886
        %968 = vmatprep.subr.bf16.mxu0 0
        %969 = vmatpush2.bf16.msra.mxu0 %v885
        %970 = vmatprep.subr.bf16.mxu0 0
        %971 = vmatpush2.bf16.msra.mxu0 %v884
        %972 = vmatprep.mubr.bf16.mxu0 %v925
        %973 = vmatmul.mubr.bf16.gmra.mxu0 %v924
        %v974 = vpop.f32.mrf.mxu0
        %v975 = vadd.f32 0.0, %v974
        %v976 = vpop.f32.mrf.mxu0
        %v977 = vpop.f32.mrf.mxu0
        %v978 = vadd.f32 0.0, %v977
        %v979 = vpop.f32.mrf.mxu0
        %980 = vmatprep.mubr.bf16.mxu0 %v927
        %981 = vmatmul.mubr.bf16.gmra.mxu0 %v926
        %v982 = vpop.f32.mrf.mxu0
        %v983 = vadd.f32 0.0, %v982
        %v984 = vpop.f32.mrf.mxu0
        %v985 = vpop.f32.mrf.mxu0
        %v986 = vadd.f32 0.0, %v985
        %v987 = vpop.f32.mrf.mxu0
        %988 = vmatprep.mubr.bf16.mxu0 %v929
        %989 = vmatmul.mubr.bf16.gmra.mxu0 %v928
        %v990 = vpop.f32.mrf.mxu0
        %v991 = vadd.f32 0.0, %v990
        %v992 = vpop.f32.mrf.mxu0
        %v993 = vpop.f32.mrf.mxu0
        %v994 = vadd.f32 0.0, %v993
        %v995 = vpop.f32.mrf.mxu0
        %996 = vmatprep.mubr.bf16.mxu0 %v931
        %997 = vmatmul.mubr.bf16.gmra.mxu0 %v930
        %v998 = vpop.f32.mrf.mxu0
        %v999 = vadd.f32 0.0, %v998
        %v1000 = vpop.f32.mrf.mxu0
        %v1001 = vpop.f32.mrf.mxu0
        %v1002 = vadd.f32 0.0, %v1001
        %v1003 = vpop.f32.mrf.mxu0
        %1004 = vdwg.mxu0
        %s1005 = scalar_lea.vmem %s3, 64
        %v1006 = vld [vmem:[%s1005] sm:$0xff]
        %v1007 = vld [vmem:[%s1005 + $0x8] sm:$0xff]
        %v1008 = vld [vmem:[%s1005 + $0x10] sm:$0xff]
        %v1009 = vld [vmem:[%s1005 + $0x18] sm:$0xff]
        %v1010 = vld [vmem:[%s1005 + $0x20] sm:$0xff]
        %v1011 = vld [vmem:[%s1005 + $0x28] sm:$0xff]
        %v1012 = vld [vmem:[%s1005 + $0x30] sm:$0xff]
        %v1013 = vld [vmem:[%s1005 + $0x38] sm:$0xff]
        %v1022 = vunpack.c.l.b16 %v1006
        %v1023 = vunpack.c.h.b16 %v1006
        %v1024 = vunpack.c.l.b16 %v1007
        %v1025 = vunpack.c.h.b16 %v1007
        %v1026 = vunpack.c.l.b16 %v1008
        %v1027 = vunpack.c.h.b16 %v1008
        %v1028 = vunpack.c.l.b16 %v1009
        %v1029 = vunpack.c.h.b16 %v1009
        %v1030 = vunpack.c.l.b16 %v1010
        %v1031 = vunpack.c.h.b16 %v1010
        %v1032 = vunpack.c.l.b16 %v1011
        %v1033 = vunpack.c.h.b16 %v1011
        %v1034 = vunpack.c.l.b16 %v1012
        %v1035 = vunpack.c.h.b16 %v1012
        %v1036 = vunpack.c.l.b16 %v1013
        %v1037 = vunpack.c.h.b16 %v1013
        %v1038 = vpack.c.b16 %v1024, %v1022
        %v1039 = vpack.c.b16 %v1025, %v1023
        %v1040 = vpack.c.b16 %v1028, %v1026
        %v1041 = vpack.c.b16 %v1029, %v1027
        %v1042 = vpack.c.b16 %v1032, %v1030
        %v1043 = vpack.c.b16 %v1033, %v1031
        %v1044 = vpack.c.b16 %v1036, %v1034
        %v1045 = vpack.c.b16 %v1037, %v1035
        %1054 = vmatprep.subr.bf16.mxu0 0
        %1055 = vmatpush1.bf16.msra.mxu0 %v883
        %1056 = vmatprep.subr.bf16.mxu0 0
        %1057 = vmatpush1.bf16.msra.mxu0 %v882
        %1058 = vmatprep.subr.bf16.mxu0 0
        %1059 = vmatpush1.bf16.msra.mxu0 %v881
        %1060 = vmatprep.subr.bf16.mxu0 0
        %1061 = vmatpush1.bf16.msra.mxu0 %v880
        %1062 = vmatprep.subr.bf16.mxu0 0
        %1063 = vmatpush1.bf16.msra.mxu0 %v879
        %1064 = vmatprep.subr.bf16.mxu0 0
        %1065 = vmatpush1.bf16.msra.mxu0 %v878
        %1066 = vmatprep.subr.bf16.mxu0 0
        %1067 = vmatpush1.bf16.msra.mxu0 %v877
        %1068 = vmatprep.subr.bf16.mxu0 0
        %1069 = vmatpush1.bf16.msra.mxu0 %v876
        %1070 = vmatprep.subr.bf16.mxu0 0
        %1071 = vmatpush2.bf16.msra.mxu0 %v891
        %1072 = vmatprep.subr.bf16.mxu0 0
        %1073 = vmatpush2.bf16.msra.mxu0 %v890
        %1074 = vmatprep.subr.bf16.mxu0 0
        %1075 = vmatpush2.bf16.msra.mxu0 %v889
        %1076 = vmatprep.subr.bf16.mxu0 0
        %1077 = vmatpush2.bf16.msra.mxu0 %v888
        %1078 = vmatprep.subr.bf16.mxu0 0
        %1079 = vmatpush2.bf16.msra.mxu0 %v887
        %1080 = vmatprep.subr.bf16.mxu0 0
        %1081 = vmatpush2.bf16.msra.mxu0 %v886
        %1082 = vmatprep.subr.bf16.mxu0 0
        %1083 = vmatpush2.bf16.msra.mxu0 %v885
        %1084 = vmatprep.subr.bf16.mxu0 0
        %1085 = vmatpush2.bf16.msra.mxu0 %v884
        %1086 = vmatprep.mubr.bf16.mxu0 %v1039
        %1087 = vmatmul.mubr.bf16.gmra.mxu0 %v1038
        %v1088 = vpop.f32.mrf.mxu0
        %v1089 = vadd.f32 0.0, %v1088
        %v1090 = vpop.f32.mrf.mxu0
        %v1091 = vpop.f32.mrf.mxu0
        %v1092 = vadd.f32 0.0, %v1091
        %v1093 = vpop.f32.mrf.mxu0
        %1094 = vmatprep.mubr.bf16.mxu0 %v1041
        %1095 = vmatmul.mubr.bf16.gmra.mxu0 %v1040
        %v1096 = vpop.f32.mrf.mxu0
        %v1097 = vadd.f32 0.0, %v1096
        %v1098 = vpop.f32.mrf.mxu0
        %v1099 = vpop.f32.mrf.mxu0
        %v1100 = vadd.f32 0.0, %v1099
        %v1101 = vpop.f32.mrf.mxu0
        %1102 = vmatprep.mubr.bf16.mxu0 %v1043
        %1103 = vmatmul.mubr.bf16.gmra.mxu0 %v1042
        %v1104 = vpop.f32.mrf.mxu0
        %v1105 = vadd.f32 0.0, %v1104
        %v1106 = vpop.f32.mrf.mxu0
        %v1107 = vpop.f32.mrf.mxu0
        %v1108 = vadd.f32 0.0, %v1107
        %v1109 = vpop.f32.mrf.mxu0
        %1110 = vmatprep.mubr.bf16.mxu0 %v1045
        %1111 = vmatmul.mubr.bf16.gmra.mxu0 %v1044
        %v1112 = vpop.f32.mrf.mxu0
        %v1113 = vadd.f32 0.0, %v1112
        %v1114 = vpop.f32.mrf.mxu0
        %v1115 = vpop.f32.mrf.mxu0
        %v1116 = vadd.f32 0.0, %v1115
        %v1117 = vpop.f32.mrf.mxu0
        %1118 = vdwg.mxu0
        %v1119 = vmax.f32 %v975, %v1089
        %v1120 = vmax.f32 %v978, %v1092
        %v1121 = vmax.f32 %v983, %v1097
        %v1122 = vmax.f32 %v986, %v1100
        %v1123 = vmax.f32 %v991, %v1105
        %v1124 = vmax.f32 %v994, %v1108
        %v1125 = vmax.f32 %v999, %v1113
        %v1126 = vmax.f32 %v1002, %v1116
        %s1127 = scalar_lea.vmem %s3, 128
        %v1128 = vld [vmem:[%s1127] sm:$0xff]
        %v1129 = vld [vmem:[%s1127 + $0x8] sm:$0xff]
        %v1130 = vld [vmem:[%s1127 + $0x10] sm:$0xff]
        %v1131 = vld [vmem:[%s1127 + $0x18] sm:$0xff]
        %v1132 = vld [vmem:[%s1127 + $0x20] sm:$0xff]
        %v1133 = vld [vmem:[%s1127 + $0x28] sm:$0xff]
        %v1134 = vld [vmem:[%s1127 + $0x30] sm:$0xff]
        %v1135 = vld [vmem:[%s1127 + $0x38] sm:$0xff]
        %v1144 = vunpack.c.l.b16 %v1128
        %v1145 = vunpack.c.h.b16 %v1128
        %v1146 = vunpack.c.l.b16 %v1129
        %v1147 = vunpack.c.h.b16 %v1129
        %v1148 = vunpack.c.l.b16 %v1130
        %v1149 = vunpack.c.h.b16 %v1130
        %v1150 = vunpack.c.l.b16 %v1131
        %v1151 = vunpack.c.h.b16 %v1131
        %v1152 = vunpack.c.l.b16 %v1132
        %v1153 = vunpack.c.h.b16 %v1132
        %v1154 = vunpack.c.l.b16 %v1133
        %v1155 = vunpack.c.h.b16 %v1133
        %v1156 = vunpack.c.l.b16 %v1134
        %v1157 = vunpack.c.h.b16 %v1134
        %v1158 = vunpack.c.l.b16 %v1135
        %v1159 = vunpack.c.h.b16 %v1135
        %v1160 = vpack.c.b16 %v1146, %v1144
        %v1161 = vpack.c.b16 %v1147, %v1145
        %v1162 = vpack.c.b16 %v1150, %v1148
        %v1163 = vpack.c.b16 %v1151, %v1149
        %v1164 = vpack.c.b16 %v1154, %v1152
        %v1165 = vpack.c.b16 %v1155, %v1153
        %v1166 = vpack.c.b16 %v1158, %v1156
        %v1167 = vpack.c.b16 %v1159, %v1157
        %1176 = vmatprep.subr.bf16.mxu0 0
        %1177 = vmatpush1.bf16.msra.mxu0 %v883
        %1178 = vmatprep.subr.bf16.mxu0 0
        %1179 = vmatpush1.bf16.msra.mxu0 %v882
        %1180 = vmatprep.subr.bf16.mxu0 0
        %1181 = vmatpush1.bf16.msra.mxu0 %v881
        %1182 = vmatprep.subr.bf16.mxu0 0
        %1183 = vmatpush1.bf16.msra.mxu0 %v880
        %1184 = vmatprep.subr.bf16.mxu0 0
        %1185 = vmatpush1.bf16.msra.mxu0 %v879
        %1186 = vmatprep.subr.bf16.mxu0 0
        %1187 = vmatpush1.bf16.msra.mxu0 %v878
        %1188 = vmatprep.subr.bf16.mxu0 0
        %1189 = vmatpush1.bf16.msra.mxu0 %v877
        %1190 = vmatprep.subr.bf16.mxu0 0
        %1191 = vmatpush1.bf16.msra.mxu0 %v876
        %1192 = vmatprep.subr.bf16.mxu0 0
        %1193 = vmatpush2.bf16.msra.mxu0 %v891
        %1194 = vmatprep.subr.bf16.mxu0 0
        %1195 = vmatpush2.bf16.msra.mxu0 %v890
        %1196 = vmatprep.subr.bf16.mxu0 0
        %1197 = vmatpush2.bf16.msra.mxu0 %v889
        %1198 = vmatprep.subr.bf16.mxu0 0
        %1199 = vmatpush2.bf16.msra.mxu0 %v888
        %1200 = vmatprep.subr.bf16.mxu0 0
        %1201 = vmatpush2.bf16.msra.mxu0 %v887
        %1202 = vmatprep.subr.bf16.mxu0 0
        %1203 = vmatpush2.bf16.msra.mxu0 %v886
        %1204 = vmatprep.subr.bf16.mxu0 0
        %1205 = vmatpush2.bf16.msra.mxu0 %v885
        %1206 = vmatprep.subr.bf16.mxu0 0
        %1207 = vmatpush2.bf16.msra.mxu0 %v884
        %1208 = vmatprep.mubr.bf16.mxu0 %v1161
        %1209 = vmatmul.mubr.bf16.gmra.mxu0 %v1160
        %v1210 = vpop.f32.mrf.mxu0
        %v1211 = vadd.f32 0.0, %v1210
        %v1212 = vpop.f32.mrf.mxu0
        %v1213 = vpop.f32.mrf.mxu0
        %v1214 = vadd.f32 0.0, %v1213
        %v1215 = vpop.f32.mrf.mxu0
        %1216 = vmatprep.mubr.bf16.mxu0 %v1163
        %1217 = vmatmul.mubr.bf16.gmra.mxu0 %v1162
        %v1218 = vpop.f32.mrf.mxu0
        %v1219 = vadd.f32 0.0, %v1218
        %v1220 = vpop.f32.mrf.mxu0
        %v1221 = vpop.f32.mrf.mxu0
        %v1222 = vadd.f32 0.0, %v1221
        %v1223 = vpop.f32.mrf.mxu0
        %1224 = vmatprep.mubr.bf16.mxu0 %v1165
        %1225 = vmatmul.mubr.bf16.gmra.mxu0 %v1164
        %v1226 = vpop.f32.mrf.mxu0
        %v1227 = vadd.f32 0.0, %v1226
        %v1228 = vpop.f32.mrf.mxu0
        %v1229 = vpop.f32.mrf.mxu0
        %v1230 = vadd.f32 0.0, %v1229
        %v1231 = vpop.f32.mrf.mxu0
        %1232 = vmatprep.mubr.bf16.mxu0 %v1167
        %1233 = vmatmul.mubr.bf16.gmra.mxu0 %v1166
        %v1234 = vpop.f32.mrf.mxu0
        %v1235 = vadd.f32 0.0, %v1234
        %v1236 = vpop.f32.mrf.mxu0
        %v1237 = vpop.f32.mrf.mxu0
        %v1238 = vadd.f32 0.0, %v1237
        %v1239 = vpop.f32.mrf.mxu0
        %1240 = vdwg.mxu0
        %v1241 = vmax.f32 %v1119, %v1211
        %v1242 = vmax.f32 %v1120, %v1214
        %v1243 = vmax.f32 %v1121, %v1219
        %v1244 = vmax.f32 %v1122, %v1222
        %v1245 = vmax.f32 %v1123, %v1227
        %v1246 = vmax.f32 %v1124, %v1230
        %v1247 = vmax.f32 %v1125, %v1235
        %v1248 = vmax.f32 %v1126, %v1238
        %s1249 = scalar_lea.vmem %s3, 192
        %v1250 = vld [vmem:[%s1249] sm:$0xff]
        %v1251 = vld [vmem:[%s1249 + $0x8] sm:$0xff]
        %v1252 = vld [vmem:[%s1249 + $0x10] sm:$0xff]
        %v1253 = vld [vmem:[%s1249 + $0x18] sm:$0xff]
        %v1254 = vld [vmem:[%s1249 + $0x20] sm:$0xff]
        %v1255 = vld [vmem:[%s1249 + $0x28] sm:$0xff]
        %v1256 = vld [vmem:[%s1249 + $0x30] sm:$0xff]
        %v1257 = vld [vmem:[%s1249 + $0x38] sm:$0xff]
        %v1266 = vunpack.c.l.b16 %v1250
        %v1267 = vunpack.c.h.b16 %v1250
        %v1268 = vunpack.c.l.b16 %v1251
        %v1269 = vunpack.c.h.b16 %v1251
        %v1270 = vunpack.c.l.b16 %v1252
        %v1271 = vunpack.c.h.b16 %v1252
        %v1272 = vunpack.c.l.b16 %v1253
        %v1273 = vunpack.c.h.b16 %v1253
        %v1274 = vunpack.c.l.b16 %v1254
        %v1275 = vunpack.c.h.b16 %v1254
        %v1276 = vunpack.c.l.b16 %v1255
        %v1277 = vunpack.c.h.b16 %v1255
        %v1278 = vunpack.c.l.b16 %v1256
        %v1279 = vunpack.c.h.b16 %v1256
        %v1280 = vunpack.c.l.b16 %v1257
        %v1281 = vunpack.c.h.b16 %v1257
        %v1282 = vpack.c.b16 %v1268, %v1266
        %v1283 = vpack.c.b16 %v1269, %v1267
        %v1284 = vpack.c.b16 %v1272, %v1270
        %v1285 = vpack.c.b16 %v1273, %v1271
        %v1286 = vpack.c.b16 %v1276, %v1274
        %v1287 = vpack.c.b16 %v1277, %v1275
        %v1288 = vpack.c.b16 %v1280, %v1278
        %v1289 = vpack.c.b16 %v1281, %v1279
        %1298 = vmatprep.subr.bf16.mxu0 0
        %1299 = vmatpush1.bf16.msra.mxu0 %v883
        %1300 = vmatprep.subr.bf16.mxu0 0
        %1301 = vmatpush1.bf16.msra.mxu0 %v882
        %1302 = vmatprep.subr.bf16.mxu0 0
        %1303 = vmatpush1.bf16.msra.mxu0 %v881
        %1304 = vmatprep.subr.bf16.mxu0 0
        %1305 = vmatpush1.bf16.msra.mxu0 %v880
        %1306 = vmatprep.subr.bf16.mxu0 0
        %1307 = vmatpush1.bf16.msra.mxu0 %v879
        %1308 = vmatprep.subr.bf16.mxu0 0
        %1309 = vmatpush1.bf16.msra.mxu0 %v878
        %1310 = vmatprep.subr.bf16.mxu0 0
        %1311 = vmatpush1.bf16.msra.mxu0 %v877
        %1312 = vmatprep.subr.bf16.mxu0 0
        %1313 = vmatpush1.bf16.msra.mxu0 %v876
        %1314 = vmatprep.subr.bf16.mxu0 0
        %1315 = vmatpush2.bf16.msra.mxu0 %v891
        %1316 = vmatprep.subr.bf16.mxu0 0
        %1317 = vmatpush2.bf16.msra.mxu0 %v890
        %1318 = vmatprep.subr.bf16.mxu0 0
        %1319 = vmatpush2.bf16.msra.mxu0 %v889
        %1320 = vmatprep.subr.bf16.mxu0 0
        %1321 = vmatpush2.bf16.msra.mxu0 %v888
        %1322 = vmatprep.subr.bf16.mxu0 0
        %1323 = vmatpush2.bf16.msra.mxu0 %v887
        %1324 = vmatprep.subr.bf16.mxu0 0
        %1325 = vmatpush2.bf16.msra.mxu0 %v886
        %1326 = vmatprep.subr.bf16.mxu0 0
        %1327 = vmatpush2.bf16.msra.mxu0 %v885
        %1328 = vmatprep.subr.bf16.mxu0 0
        %1329 = vmatpush2.bf16.msra.mxu0 %v884
        %1330 = vmatprep.mubr.bf16.mxu0 %v1283
        %1331 = vmatmul.mubr.bf16.gmra.mxu0 %v1282
        %v1332 = vpop.f32.mrf.mxu0
        %v1333 = vadd.f32 0.0, %v1332
        %v1334 = vpop.f32.mrf.mxu0
        %v1335 = vpop.f32.mrf.mxu0
        %v1336 = vadd.f32 0.0, %v1335
        %v1337 = vpop.f32.mrf.mxu0
        %1338 = vmatprep.mubr.bf16.mxu0 %v1285
        %1339 = vmatmul.mubr.bf16.gmra.mxu0 %v1284
        %v1340 = vpop.f32.mrf.mxu0
        %v1341 = vadd.f32 0.0, %v1340
        %v1342 = vpop.f32.mrf.mxu0
        %v1343 = vpop.f32.mrf.mxu0
        %v1344 = vadd.f32 0.0, %v1343
        %v1345 = vpop.f32.mrf.mxu0
        %1346 = vmatprep.mubr.bf16.mxu0 %v1287
        %1347 = vmatmul.mubr.bf16.gmra.mxu0 %v1286
        %v1348 = vpop.f32.mrf.mxu0
        %v1349 = vadd.f32 0.0, %v1348
        %v1350 = vpop.f32.mrf.mxu0
        %v1351 = vpop.f32.mrf.mxu0
        %v1352 = vadd.f32 0.0, %v1351
        %v1353 = vpop.f32.mrf.mxu0
        %1354 = vmatprep.mubr.bf16.mxu0 %v1289
        %1355 = vmatmul.mubr.bf16.gmra.mxu0 %v1288
        %v1356 = vpop.f32.mrf.mxu0
        %v1357 = vadd.f32 0.0, %v1356
        %v1358 = vpop.f32.mrf.mxu0
        %v1359 = vpop.f32.mrf.mxu0
        %v1360 = vadd.f32 0.0, %v1359
        %v1361 = vpop.f32.mrf.mxu0
        %1362 = vdwg.mxu0
        %v1363 = vmax.f32 %v1241, %v1333
        %v1364 = vmax.f32 %v1242, %v1336
        %v1365 = vmax.f32 %v1243, %v1341
        %v1366 = vmax.f32 %v1244, %v1344
        %v1367 = vmax.f32 %v1245, %v1349
        %v1368 = vmax.f32 %v1246, %v1352
        %v1369 = vmax.f32 %v1247, %v1357
        %v1370 = vmax.f32 %v1248, %v1360
        %v1371 = vpack.c.bf16 %v1364, %v1363
        %v1372 = vpack.c.bf16 %v1366, %v1365
        %v1373 = vpack.c.bf16 %v1368, %v1367
        %v1374 = vpack.c.bf16 %v1370, %v1369
        %v1375 = vld [vmem:[%s4] sm:$0xf]
        %v1376 = vld [vmem:[%s4 + $0x4] sm:$0xf]
        %v1377 = vld [vmem:[%s4 + $0x8] sm:$0xf]
        %v1378 = vld [vmem:[%s4 + $0xc] sm:$0xf]
        %v1379 = vld [vmem:[%s4 + $0x10] sm:$0xf]
        %v1380 = vld [vmem:[%s4 + $0x14] sm:$0xf]
        %v1381 = vld [vmem:[%s4 + $0x18] sm:$0xf]
        %v1382 = vld [vmem:[%s4 + $0x1c] sm:$0xf]
        %v1383 = vld [vmem:[%s4 + $0x20] sm:$0xf]
        %v1384 = vld [vmem:[%s4 + $0x24] sm:$0xf]
        %v1385 = vld [vmem:[%s4 + $0x28] sm:$0xf]
        %v1386 = vld [vmem:[%s4 + $0x2c] sm:$0xf]
        %v1387 = vld [vmem:[%s4 + $0x30] sm:$0xf]
        %v1388 = vld [vmem:[%s4 + $0x34] sm:$0xf]
        %v1389 = vld [vmem:[%s4 + $0x38] sm:$0xf]
        %v1390 = vld [vmem:[%s4 + $0x3c] sm:$0xf]
        %v1391 = vld [vmem:[%s4 + $0x40] sm:$0xf]
        %v1392 = vld [vmem:[%s4 + $0x44] sm:$0xf]
        %v1393 = vld [vmem:[%s4 + $0x48] sm:$0xf]
        %v1394 = vld [vmem:[%s4 + $0x4c] sm:$0xf]
        %v1395 = vld [vmem:[%s4 + $0x50] sm:$0xf]
        %v1396 = vld [vmem:[%s4 + $0x54] sm:$0xf]
        %v1397 = vld [vmem:[%s4 + $0x58] sm:$0xf]
        %v1398 = vld [vmem:[%s4 + $0x5c] sm:$0xf]
        %v1399 = vld [vmem:[%s4 + $0x60] sm:$0xf]
        %v1400 = vld [vmem:[%s4 + $0x64] sm:$0xf]
        %v1401 = vld [vmem:[%s4 + $0x68] sm:$0xf]
        %v1402 = vld [vmem:[%s4 + $0x6c] sm:$0xf]
        %v1403 = vld [vmem:[%s4 + $0x70] sm:$0xf]
        %v1404 = vld [vmem:[%s4 + $0x74] sm:$0xf]
        %v1405 = vld [vmem:[%s4 + $0x78] sm:$0xf]
        %v1406 = vld [vmem:[%s4 + $0x7c] sm:$0xf]
        %v1407 = vld [vmem:[%s4 + $0x80] sm:$0xf]
        %v1408 = vld [vmem:[%s4 + $0x84] sm:$0xf]
        %v1409 = vld [vmem:[%s4 + $0x88] sm:$0xf]
        %v1410 = vld [vmem:[%s4 + $0x8c] sm:$0xf]
        %v1411 = vld [vmem:[%s4 + $0x90] sm:$0xf]
        %v1412 = vld [vmem:[%s4 + $0x94] sm:$0xf]
        %v1413 = vld [vmem:[%s4 + $0x98] sm:$0xf]
        %v1414 = vld [vmem:[%s4 + $0x9c] sm:$0xf]
        %v1415 = vld [vmem:[%s4 + $0xa0] sm:$0xf]
        %v1416 = vld [vmem:[%s4 + $0xa4] sm:$0xf]
        %v1417 = vld [vmem:[%s4 + $0xa8] sm:$0xf]
        %v1418 = vld [vmem:[%s4 + $0xac] sm:$0xf]
        %v1419 = vld [vmem:[%s4 + $0xb0] sm:$0xf]
        %v1420 = vld [vmem:[%s4 + $0xb4] sm:$0xf]
        %v1421 = vld [vmem:[%s4 + $0xb8] sm:$0xf]
        %v1422 = vld [vmem:[%s4 + $0xbc] sm:$0xf]
        %v1423 = vld [vmem:[%s4 + $0xc0] sm:$0xf]
        %v1424 = vld [vmem:[%s4 + $0xc4] sm:$0xf]
        %v1425 = vld [vmem:[%s4 + $0xc8] sm:$0xf]
        %v1426 = vld [vmem:[%s4 + $0xcc] sm:$0xf]
        %v1427 = vld [vmem:[%s4 + $0xd0] sm:$0xf]
        %v1428 = vld [vmem:[%s4 + $0xd4] sm:$0xf]
        %v1429 = vld [vmem:[%s4 + $0xd8] sm:$0xf]
        %v1430 = vld [vmem:[%s4 + $0xdc] sm:$0xf]
        %v1431 = vld [vmem:[%s4 + $0xe0] sm:$0xf]
        %v1432 = vld [vmem:[%s4 + $0xe4] sm:$0xf]
        %v1433 = vld [vmem:[%s4 + $0xe8] sm:$0xf]
        %v1434 = vld [vmem:[%s4 + $0xec] sm:$0xf]
        %v1435 = vld [vmem:[%s4 + $0xf0] sm:$0xf]
        %v1436 = vld [vmem:[%s4 + $0xf4] sm:$0xf]
        %v1437 = vld [vmem:[%s4 + $0xf8] sm:$0xf]
        %v1438 = vld [vmem:[%s4 + $0xfc] sm:$0xf]
        %v1439 = vld [vmem:[%s4 + $0x100] sm:$0xf]
        %v1440 = vld [vmem:[%s4 + $0x104] sm:$0xf]
        %v1441 = vld [vmem:[%s4 + $0x108] sm:$0xf]
        %v1442 = vld [vmem:[%s4 + $0x10c] sm:$0xf]
        %v1443 = vld [vmem:[%s4 + $0x110] sm:$0xf]
        %v1444 = vld [vmem:[%s4 + $0x114] sm:$0xf]
        %v1445 = vld [vmem:[%s4 + $0x118] sm:$0xf]
        %v1446 = vld [vmem:[%s4 + $0x11c] sm:$0xf]
        %v1519 = vunpack.c.l.b16 %v1375
        %v1520 = vunpack.c.l.b16 %v1376
        %v1521 = vunpack.c.l.b16 %v1377
        %v1522 = vunpack.c.l.b16 %v1378
        %v1523 = vunpack.c.l.b16 %v1379
        %v1524 = vunpack.c.l.b16 %v1380
        %v1525 = vunpack.c.l.b16 %v1381
        %v1526 = vunpack.c.l.b16 %v1382
        %v1527 = vunpack.c.l.b16 %v1383
        %v1528 = vunpack.c.l.b16 %v1384
        %v1529 = vunpack.c.l.b16 %v1385
        %v1530 = vunpack.c.l.b16 %v1386
        %v1531 = vunpack.c.l.b16 %v1387
        %v1532 = vunpack.c.l.b16 %v1388
        %v1533 = vunpack.c.l.b16 %v1389
        %v1534 = vunpack.c.l.b16 %v1390
        %v1535 = vunpack.c.l.b16 %v1391
        %v1536 = vunpack.c.l.b16 %v1392
        %v1537 = vunpack.c.l.b16 %v1393
        %v1538 = vunpack.c.l.b16 %v1394
        %v1539 = vunpack.c.l.b16 %v1395
        %v1540 = vunpack.c.l.b16 %v1396
        %v1541 = vunpack.c.l.b16 %v1397
        %v1542 = vunpack.c.l.b16 %v1398
        %v1543 = vunpack.c.l.b16 %v1399
        %v1544 = vunpack.c.l.b16 %v1400
        %v1545 = vunpack.c.l.b16 %v1401
        %v1546 = vunpack.c.l.b16 %v1402
        %v1547 = vunpack.c.l.b16 %v1403
        %v1548 = vunpack.c.l.b16 %v1404
        %v1549 = vunpack.c.l.b16 %v1405
        %v1550 = vunpack.c.l.b16 %v1406
        %v1551 = vunpack.c.l.b16 %v1407
        %v1552 = vunpack.c.l.b16 %v1408
        %v1553 = vunpack.c.l.b16 %v1409
        %v1554 = vunpack.c.l.b16 %v1410
        %v1555 = vunpack.c.l.b16 %v1411
        %v1556 = vunpack.c.l.b16 %v1412
        %v1557 = vunpack.c.l.b16 %v1413
        %v1558 = vunpack.c.l.b16 %v1414
        %v1559 = vunpack.c.l.b16 %v1415
        %v1560 = vunpack.c.l.b16 %v1416
        %v1561 = vunpack.c.l.b16 %v1417
        %v1562 = vunpack.c.l.b16 %v1418
        %v1563 = vunpack.c.l.b16 %v1419
        %v1564 = vunpack.c.l.b16 %v1420
        %v1565 = vunpack.c.l.b16 %v1421
        %v1566 = vunpack.c.l.b16 %v1422
        %v1567 = vunpack.c.l.b16 %v1423
        %v1568 = vunpack.c.l.b16 %v1424
        %v1569 = vunpack.c.l.b16 %v1425
        %v1570 = vunpack.c.l.b16 %v1426
        %v1571 = vunpack.c.l.b16 %v1427
        %v1572 = vunpack.c.l.b16 %v1428
        %v1573 = vunpack.c.l.b16 %v1429
        %v1574 = vunpack.c.l.b16 %v1430
        %v1575 = vunpack.c.l.b16 %v1431
        %v1576 = vunpack.c.l.b16 %v1432
        %v1577 = vunpack.c.l.b16 %v1433
        %v1578 = vunpack.c.l.b16 %v1434
        %v1579 = vunpack.c.l.b16 %v1435
        %v1580 = vunpack.c.l.b16 %v1436
        %v1581 = vunpack.c.l.b16 %v1437
        %v1582 = vunpack.c.l.b16 %v1438
        %v1583 = vunpack.c.l.b16 %v1439
        %v1584 = vunpack.c.l.b16 %v1440
        %v1585 = vunpack.c.l.b16 %v1441
        %v1586 = vunpack.c.l.b16 %v1442
        %v1587 = vunpack.c.l.b16 %v1443
        %v1588 = vunpack.c.l.b16 %v1444
        %v1589 = vunpack.c.l.b16 %v1445
        %v1590 = vunpack.c.l.b16 %v1446
        %v1591 = vpack.c.b16 %v1520, %v1519
        %v1592 = vpack.c.b16 %v1522, %v1521
        %v1593 = vpack.c.b16 %v1524, %v1523
        %v1594 = vpack.c.b16 %v1526, %v1525
        %v1595 = vpack.c.b16 %v1528, %v1527
        %v1596 = vpack.c.b16 %v1530, %v1529
        %v1597 = vpack.c.b16 %v1532, %v1531
        %v1598 = vpack.c.b16 %v1534, %v1533
        %v1599 = vpack.c.b16 %v1536, %v1535
        %v1600 = vpack.c.b16 %v1538, %v1537
        %v1601 = vpack.c.b16 %v1540, %v1539
        %v1602 = vpack.c.b16 %v1542, %v1541
        %v1603 = vpack.c.b16 %v1544, %v1543
        %v1604 = vpack.c.b16 %v1546, %v1545
        %v1605 = vpack.c.b16 %v1548, %v1547
        %v1606 = vpack.c.b16 %v1550, %v1549
        %v1607 = vpack.c.b16 %v1552, %v1551
        %v1608 = vpack.c.b16 %v1554, %v1553
        %v1609 = vpack.c.b16 %v1556, %v1555
        %v1610 = vpack.c.b16 %v1558, %v1557
        %v1611 = vpack.c.b16 %v1560, %v1559
        %v1612 = vpack.c.b16 %v1562, %v1561
        %v1613 = vpack.c.b16 %v1564, %v1563
        %v1614 = vpack.c.b16 %v1566, %v1565
        %v1615 = vpack.c.b16 %v1568, %v1567
        %v1616 = vpack.c.b16 %v1570, %v1569
        %v1617 = vpack.c.b16 %v1572, %v1571
        %v1618 = vpack.c.b16 %v1574, %v1573
        %v1619 = vpack.c.b16 %v1576, %v1575
        %v1620 = vpack.c.b16 %v1578, %v1577
        %v1621 = vpack.c.b16 %v1580, %v1579
        %v1622 = vpack.c.b16 %v1582, %v1581
        %v1623 = vpack.c.b16 %v1584, %v1583
        %v1624 = vpack.c.b16 %v1586, %v1585
        %v1625 = vpack.c.b16 %v1588, %v1587
        %v1626 = vpack.c.b16 %v1590, %v1589
        %vm1627 = vcmask 523264
        %v1629 = vsel %vm1627, %v1591, 0
        %v1632 = vsel %vm1627, %v1592, 0
        %v1635 = vsel %vm1627, %v1593, 0
        %v1638 = vsel %vm1627, %v1594, 0
        %v1641 = vsel %vm1627, %v1595, 0
        %v1644 = vsel %vm1627, %v1596, 0
        %v1647 = vsel %vm1627, %v1597, 0
        %v1650 = vsel %vm1627, %v1598, 0
        %v1653 = vsel %vm1627, %v1599, 0
        %v1656 = vsel %vm1627, %v1600, 0
        %v1659 = vsel %vm1627, %v1601, 0
        %v1662 = vsel %vm1627, %v1602, 0
        %v1665 = vsel %vm1627, %v1603, 0
        %v1668 = vsel %vm1627, %v1604, 0
        %v1671 = vsel %vm1627, %v1605, 0
        %v1674 = vsel %vm1627, %v1606, 0
        %v1677 = vsel %vm1627, %v1607, 0
        %v1680 = vsel %vm1627, %v1608, 0
        %v1683 = vsel %vm1627, %v1609, 0
        %v1686 = vsel %vm1627, %v1610, 0
        %v1689 = vsel %vm1627, %v1611, 0
        %v1692 = vsel %vm1627, %v1612, 0
        %v1695 = vsel %vm1627, %v1613, 0
        %v1698 = vsel %vm1627, %v1614, 0
        %v1701 = vsel %vm1627, %v1615, 0
        %v1704 = vsel %vm1627, %v1616, 0
        %v1707 = vsel %vm1627, %v1617, 0
        %v1710 = vsel %vm1627, %v1618, 0
        %v1713 = vsel %vm1627, %v1619, 0
        %v1716 = vsel %vm1627, %v1620, 0
        %v1719 = vsel %vm1627, %v1621, 0
        %v1722 = vsel %vm1627, %v1622, 0
        %v1725 = vsel %vm1627, %v1623, 0
        %v1728 = vsel %vm1627, %v1624, 0
        %v1731 = vsel %vm1627, %v1625, 0
        %v1734 = vsel %vm1627, %v1626, 0
        %1736 = vmatprep.subr.bf16.mxu0 0
        %1737 = vmatpush1.bf16.msra.mxu0 0
        %1738 = vmatprep.subr.bf16.mxu0 0
        %1739 = vmatpush1.bf16.msra.mxu0 0
        %1740 = vmatprep.subr.bf16.mxu0 0
        %1741 = vmatpush1.bf16.msra.mxu0 0
        %1742 = vmatprep.subr.bf16.mxu0 0
        %1743 = vmatpush1.bf16.msra.mxu0 0
        %1744 = vmatprep.subr.bf16.mxu0 0
        %1745 = vmatpush1.bf16.msra.mxu0 %v1374
        %1746 = vmatprep.subr.bf16.mxu0 0
        %1747 = vmatpush1.bf16.msra.mxu0 %v1373
        %1748 = vmatprep.subr.bf16.mxu0 0
        %1749 = vmatpush1.bf16.msra.mxu0 %v1372
        %1750 = vmatprep.subr.bf16.mxu0 0
        %1751 = vmatpush1.bf16.msra.mxu0 %v1371
        %1752 = vmatprep.subr.bf16.mxu0 0
        %1753 = vmatpush2.bf16.msra.mxu0 0
        %1754 = vmatprep.subr.bf16.mxu0 0
        %1755 = vmatpush2.bf16.msra.mxu0 0
        %1756 = vmatprep.subr.bf16.mxu0 0
        %1757 = vmatpush2.bf16.msra.mxu0 0
        %1758 = vmatprep.subr.bf16.mxu0 0
        %1759 = vmatpush2.bf16.msra.mxu0 0
        %1760 = vmatprep.subr.bf16.mxu0 0
        %1761 = vmatpush2.bf16.msra.mxu0 0
        %1762 = vmatprep.subr.bf16.mxu0 0
        %1763 = vmatpush2.bf16.msra.mxu0 0
        %1764 = vmatprep.subr.bf16.mxu0 0
        %1765 = vmatpush2.bf16.msra.mxu0 0
        %1766 = vmatprep.subr.bf16.mxu0 0
        %1767 = vmatpush2.bf16.msra.mxu0 0
        %1768 = vmatprep.mubr.bf16.mxu0 0
        %1769 = vmatmul.mubr.bf16.gmra.mxu0 %v1629
        %v1770 = vpop.f32.mrf.mxu0
        %v1771 = vadd.f32 0.0, %v1770
        %v1772 = vpop.f32.mrf.mxu0
        %v1773 = vpop.f32.mrf.mxu0
        %v1774 = vadd.f32 0.0, %v1773
        %v1775 = vpop.f32.mrf.mxu0
        %1776 = vmatprep.mubr.bf16.mxu0 0
        %1777 = vmatmul.mubr.bf16.gmra.mxu0 %v1632
        %v1778 = vpop.f32.mrf.mxu0
        %v1779 = vadd.f32 0.0, %v1778
        %v1780 = vpop.f32.mrf.mxu0
        %v1781 = vpop.f32.mrf.mxu0
        %v1782 = vadd.f32 0.0, %v1781
        %v1783 = vpop.f32.mrf.mxu0
        %1784 = vmatprep.mubr.bf16.mxu0 0
        %1785 = vmatmul.mubr.bf16.gmra.mxu0 %v1635
        %v1786 = vpop.f32.mrf.mxu0
        %v1787 = vadd.f32 0.0, %v1786
        %v1788 = vpop.f32.mrf.mxu0
        %v1789 = vpop.f32.mrf.mxu0
        %v1790 = vadd.f32 0.0, %v1789
        %v1791 = vpop.f32.mrf.mxu0
        %1792 = vmatprep.mubr.bf16.mxu0 0
        %1793 = vmatmul.mubr.bf16.gmra.mxu0 %v1638
        %v1794 = vpop.f32.mrf.mxu0
        %v1795 = vadd.f32 0.0, %v1794
        %v1796 = vpop.f32.mrf.mxu0
        %v1797 = vpop.f32.mrf.mxu0
        %v1798 = vadd.f32 0.0, %v1797
        %v1799 = vpop.f32.mrf.mxu0
        %1800 = vmatprep.mubr.bf16.mxu0 0
        %1801 = vmatmul.mubr.bf16.gmra.mxu0 %v1641
        %v1802 = vpop.f32.mrf.mxu0
        %v1803 = vadd.f32 0.0, %v1802
        %v1804 = vpop.f32.mrf.mxu0
        %v1805 = vpop.f32.mrf.mxu0
        %v1806 = vadd.f32 0.0, %v1805
        %v1807 = vpop.f32.mrf.mxu0
        %1808 = vmatprep.mubr.bf16.mxu0 0
        %1809 = vmatmul.mubr.bf16.gmra.mxu0 %v1644
        %v1810 = vpop.f32.mrf.mxu0
        %v1811 = vadd.f32 0.0, %v1810
        %v1812 = vpop.f32.mrf.mxu0
        %v1813 = vpop.f32.mrf.mxu0
        %v1814 = vadd.f32 0.0, %v1813
        %v1815 = vpop.f32.mrf.mxu0
        %1816 = vmatprep.mubr.bf16.mxu0 0
        %1817 = vmatmul.mubr.bf16.gmra.mxu0 %v1647
        %v1818 = vpop.f32.mrf.mxu0
        %v1819 = vadd.f32 0.0, %v1818
        %v1820 = vpop.f32.mrf.mxu0
        %v1821 = vpop.f32.mrf.mxu0
        %v1822 = vadd.f32 0.0, %v1821
        %v1823 = vpop.f32.mrf.mxu0
        %1824 = vmatprep.mubr.bf16.mxu0 0
        %1825 = vmatmul.mubr.bf16.gmra.mxu0 %v1650
        %v1826 = vpop.f32.mrf.mxu0
        %v1827 = vadd.f32 0.0, %v1826
        %v1828 = vpop.f32.mrf.mxu0
        %v1829 = vpop.f32.mrf.mxu0
        %v1830 = vadd.f32 0.0, %v1829
        %v1831 = vpop.f32.mrf.mxu0
        %1832 = vmatprep.mubr.bf16.mxu0 0
        %1833 = vmatmul.mubr.bf16.gmra.mxu0 %v1653
        %v1834 = vpop.f32.mrf.mxu0
        %v1835 = vadd.f32 0.0, %v1834
        %v1836 = vpop.f32.mrf.mxu0
        %v1837 = vpop.f32.mrf.mxu0
        %v1838 = vadd.f32 0.0, %v1837
        %v1839 = vpop.f32.mrf.mxu0
        %1840 = vmatprep.mubr.bf16.mxu0 0
        %1841 = vmatmul.mubr.bf16.gmra.mxu0 %v1656
        %v1842 = vpop.f32.mrf.mxu0
        %v1843 = vadd.f32 0.0, %v1842
        %v1844 = vpop.f32.mrf.mxu0
        %v1845 = vpop.f32.mrf.mxu0
        %v1846 = vadd.f32 0.0, %v1845
        %v1847 = vpop.f32.mrf.mxu0
        %1848 = vmatprep.mubr.bf16.mxu0 0
        %1849 = vmatmul.mubr.bf16.gmra.mxu0 %v1659
        %v1850 = vpop.f32.mrf.mxu0
        %v1851 = vadd.f32 0.0, %v1850
        %v1852 = vpop.f32.mrf.mxu0
        %v1853 = vpop.f32.mrf.mxu0
        %v1854 = vadd.f32 0.0, %v1853
        %v1855 = vpop.f32.mrf.mxu0
        %1856 = vmatprep.mubr.bf16.mxu0 0
        %1857 = vmatmul.mubr.bf16.gmra.mxu0 %v1662
        %v1858 = vpop.f32.mrf.mxu0
        %v1859 = vadd.f32 0.0, %v1858
        %v1860 = vpop.f32.mrf.mxu0
        %v1861 = vpop.f32.mrf.mxu0
        %v1862 = vadd.f32 0.0, %v1861
        %v1863 = vpop.f32.mrf.mxu0
        %1864 = vmatprep.mubr.bf16.mxu0 0
        %1865 = vmatmul.mubr.bf16.gmra.mxu0 %v1665
        %v1866 = vpop.f32.mrf.mxu0
        %v1867 = vadd.f32 0.0, %v1866
        %v1868 = vpop.f32.mrf.mxu0
        %v1869 = vpop.f32.mrf.mxu0
        %v1870 = vadd.f32 0.0, %v1869
        %v1871 = vpop.f32.mrf.mxu0
        %1872 = vmatprep.mubr.bf16.mxu0 0
        %1873 = vmatmul.mubr.bf16.gmra.mxu0 %v1668
        %v1874 = vpop.f32.mrf.mxu0
        %v1875 = vadd.f32 0.0, %v1874
        %v1876 = vpop.f32.mrf.mxu0
        %v1877 = vpop.f32.mrf.mxu0
        %v1878 = vadd.f32 0.0, %v1877
        %v1879 = vpop.f32.mrf.mxu0
        %1880 = vmatprep.mubr.bf16.mxu0 0
        %1881 = vmatmul.mubr.bf16.gmra.mxu0 %v1671
        %v1882 = vpop.f32.mrf.mxu0
        %v1883 = vadd.f32 0.0, %v1882
        %v1884 = vpop.f32.mrf.mxu0
        %v1885 = vpop.f32.mrf.mxu0
        %v1886 = vadd.f32 0.0, %v1885
        %v1887 = vpop.f32.mrf.mxu0
        %1888 = vmatprep.mubr.bf16.mxu0 0
        %1889 = vmatmul.mubr.bf16.gmra.mxu0 %v1674
        %v1890 = vpop.f32.mrf.mxu0
        %v1891 = vadd.f32 0.0, %v1890
        %v1892 = vpop.f32.mrf.mxu0
        %v1893 = vpop.f32.mrf.mxu0
        %v1894 = vadd.f32 0.0, %v1893
        %v1895 = vpop.f32.mrf.mxu0
        %1896 = vmatprep.mubr.bf16.mxu0 0
        %1897 = vmatmul.mubr.bf16.gmra.mxu0 %v1677
        %v1898 = vpop.f32.mrf.mxu0
        %v1899 = vadd.f32 0.0, %v1898
        %v1900 = vpop.f32.mrf.mxu0
        %v1901 = vpop.f32.mrf.mxu0
        %v1902 = vadd.f32 0.0, %v1901
        %v1903 = vpop.f32.mrf.mxu0
        %1904 = vmatprep.mubr.bf16.mxu0 0
        %1905 = vmatmul.mubr.bf16.gmra.mxu0 %v1680
        %v1906 = vpop.f32.mrf.mxu0
        %v1907 = vadd.f32 0.0, %v1906
        %v1908 = vpop.f32.mrf.mxu0
        %v1909 = vpop.f32.mrf.mxu0
        %v1910 = vadd.f32 0.0, %v1909
        %v1911 = vpop.f32.mrf.mxu0
        %1912 = vmatprep.mubr.bf16.mxu0 0
        %1913 = vmatmul.mubr.bf16.gmra.mxu0 %v1683
        %v1914 = vpop.f32.mrf.mxu0
        %v1915 = vadd.f32 0.0, %v1914
        %v1916 = vpop.f32.mrf.mxu0
        %v1917 = vpop.f32.mrf.mxu0
        %v1918 = vadd.f32 0.0, %v1917
        %v1919 = vpop.f32.mrf.mxu0
        %1920 = vmatprep.mubr.bf16.mxu0 0
        %1921 = vmatmul.mubr.bf16.gmra.mxu0 %v1686
        %v1922 = vpop.f32.mrf.mxu0
        %v1923 = vadd.f32 0.0, %v1922
        %v1924 = vpop.f32.mrf.mxu0
        %v1925 = vpop.f32.mrf.mxu0
        %v1926 = vadd.f32 0.0, %v1925
        %v1927 = vpop.f32.mrf.mxu0
        %1928 = vmatprep.mubr.bf16.mxu0 0
        %1929 = vmatmul.mubr.bf16.gmra.mxu0 %v1689
        %v1930 = vpop.f32.mrf.mxu0
        %v1931 = vadd.f32 0.0, %v1930
        %v1932 = vpop.f32.mrf.mxu0
        %v1933 = vpop.f32.mrf.mxu0
        %v1934 = vadd.f32 0.0, %v1933
        %v1935 = vpop.f32.mrf.mxu0
        %1936 = vmatprep.mubr.bf16.mxu0 0
        %1937 = vmatmul.mubr.bf16.gmra.mxu0 %v1692
        %v1938 = vpop.f32.mrf.mxu0
        %v1939 = vadd.f32 0.0, %v1938
        %v1940 = vpop.f32.mrf.mxu0
        %v1941 = vpop.f32.mrf.mxu0
        %v1942 = vadd.f32 0.0, %v1941
        %v1943 = vpop.f32.mrf.mxu0
        %1944 = vmatprep.mubr.bf16.mxu0 0
        %1945 = vmatmul.mubr.bf16.gmra.mxu0 %v1695
        %v1946 = vpop.f32.mrf.mxu0
        %v1947 = vadd.f32 0.0, %v1946
        %v1948 = vpop.f32.mrf.mxu0
        %v1949 = vpop.f32.mrf.mxu0
        %v1950 = vadd.f32 0.0, %v1949
        %v1951 = vpop.f32.mrf.mxu0
        %1952 = vmatprep.mubr.bf16.mxu0 0
        %1953 = vmatmul.mubr.bf16.gmra.mxu0 %v1698
        %v1954 = vpop.f32.mrf.mxu0
        %v1955 = vadd.f32 0.0, %v1954
        %v1956 = vpop.f32.mrf.mxu0
        %v1957 = vpop.f32.mrf.mxu0
        %v1958 = vadd.f32 0.0, %v1957
        %v1959 = vpop.f32.mrf.mxu0
        %1960 = vmatprep.mubr.bf16.mxu0 0
        %1961 = vmatmul.mubr.bf16.gmra.mxu0 %v1701
        %v1962 = vpop.f32.mrf.mxu0
        %v1963 = vadd.f32 0.0, %v1962
        %v1964 = vpop.f32.mrf.mxu0
        %v1965 = vpop.f32.mrf.mxu0
        %v1966 = vadd.f32 0.0, %v1965
        %v1967 = vpop.f32.mrf.mxu0
        %1968 = vmatprep.mubr.bf16.mxu0 0
        %1969 = vmatmul.mubr.bf16.gmra.mxu0 %v1704
        %v1970 = vpop.f32.mrf.mxu0
        %v1971 = vadd.f32 0.0, %v1970
        %v1972 = vpop.f32.mrf.mxu0
        %v1973 = vpop.f32.mrf.mxu0
        %v1974 = vadd.f32 0.0, %v1973
        %v1975 = vpop.f32.mrf.mxu0
        %1976 = vmatprep.mubr.bf16.mxu0 0
        %1977 = vmatmul.mubr.bf16.gmra.mxu0 %v1707
        %v1978 = vpop.f32.mrf.mxu0
        %v1979 = vadd.f32 0.0, %v1978
        %v1980 = vpop.f32.mrf.mxu0
        %v1981 = vpop.f32.mrf.mxu0
        %v1982 = vadd.f32 0.0, %v1981
        %v1983 = vpop.f32.mrf.mxu0
        %1984 = vmatprep.mubr.bf16.mxu0 0
        %1985 = vmatmul.mubr.bf16.gmra.mxu0 %v1710
        %v1986 = vpop.f32.mrf.mxu0
        %v1987 = vadd.f32 0.0, %v1986
        %v1988 = vpop.f32.mrf.mxu0
        %v1989 = vpop.f32.mrf.mxu0
        %v1990 = vadd.f32 0.0, %v1989
        %v1991 = vpop.f32.mrf.mxu0
        %1992 = vmatprep.mubr.bf16.mxu0 0
        %1993 = vmatmul.mubr.bf16.gmra.mxu0 %v1713
        %v1994 = vpop.f32.mrf.mxu0
        %v1995 = vadd.f32 0.0, %v1994
        %v1996 = vpop.f32.mrf.mxu0
        %v1997 = vpop.f32.mrf.mxu0
        %v1998 = vadd.f32 0.0, %v1997
        %v1999 = vpop.f32.mrf.mxu0
        %2000 = vmatprep.mubr.bf16.mxu0 0
        %2001 = vmatmul.mubr.bf16.gmra.mxu0 %v1716
        %v2002 = vpop.f32.mrf.mxu0
        %v2003 = vadd.f32 0.0, %v2002
        %v2004 = vpop.f32.mrf.mxu0
        %v2005 = vpop.f32.mrf.mxu0
        %v2006 = vadd.f32 0.0, %v2005
        %v2007 = vpop.f32.mrf.mxu0
        %2008 = vmatprep.mubr.bf16.mxu0 0
        %2009 = vmatmul.mubr.bf16.gmra.mxu0 %v1719
        %v2010 = vpop.f32.mrf.mxu0
        %v2011 = vadd.f32 0.0, %v2010
        %v2012 = vpop.f32.mrf.mxu0
        %v2013 = vpop.f32.mrf.mxu0
        %v2014 = vadd.f32 0.0, %v2013
        %v2015 = vpop.f32.mrf.mxu0
        %2016 = vmatprep.mubr.bf16.mxu0 0
        %2017 = vmatmul.mubr.bf16.gmra.mxu0 %v1722
        %v2018 = vpop.f32.mrf.mxu0
        %v2019 = vadd.f32 0.0, %v2018
        %v2020 = vpop.f32.mrf.mxu0
        %v2021 = vpop.f32.mrf.mxu0
        %v2022 = vadd.f32 0.0, %v2021
        %v2023 = vpop.f32.mrf.mxu0
        %2024 = vmatprep.mubr.bf16.mxu0 0
        %2025 = vmatmul.mubr.bf16.gmra.mxu0 %v1725
        %v2026 = vpop.f32.mrf.mxu0
        %v2027 = vadd.f32 0.0, %v2026
        %v2028 = vpop.f32.mrf.mxu0
        %v2029 = vpop.f32.mrf.mxu0
        %v2030 = vadd.f32 0.0, %v2029
        %v2031 = vpop.f32.mrf.mxu0
        %2032 = vmatprep.mubr.bf16.mxu0 0
        %2033 = vmatmul.mubr.bf16.gmra.mxu0 %v1728
        %v2034 = vpop.f32.mrf.mxu0
        %v2035 = vadd.f32 0.0, %v2034
        %v2036 = vpop.f32.mrf.mxu0
        %v2037 = vpop.f32.mrf.mxu0
        %v2038 = vadd.f32 0.0, %v2037
        %v2039 = vpop.f32.mrf.mxu0
        %2040 = vmatprep.mubr.bf16.mxu0 0
        %2041 = vmatmul.mubr.bf16.gmra.mxu0 %v1731
        %v2042 = vpop.f32.mrf.mxu0
        %v2043 = vadd.f32 0.0, %v2042
        %v2044 = vpop.f32.mrf.mxu0
        %v2045 = vpop.f32.mrf.mxu0
        %v2046 = vadd.f32 0.0, %v2045
        %v2047 = vpop.f32.mrf.mxu0
        %2048 = vmatprep.mubr.bf16.mxu0 0
        %2049 = vmatmul.mubr.bf16.gmra.mxu0 %v1734
        %v2050 = vpop.f32.mrf.mxu0
        %v2051 = vadd.f32 0.0, %v2050
        %v2052 = vpop.f32.mrf.mxu0
        %v2053 = vpop.f32.mrf.mxu0
        %v2054 = vadd.f32 0.0, %v2053
        %v2055 = vpop.f32.mrf.mxu0
        %2056 = vdwg.mxu0
        %v2057 = vpack.c.bf16 %v1774, %v1771
        %v2058 = vpack.c.bf16 %v1782, %v1779
        %v2059 = vpack.c.bf16 %v1790, %v1787
        %v2060 = vpack.c.bf16 %v1798, %v1795
        %v2061 = vpack.c.bf16 %v1806, %v1803
        %v2062 = vpack.c.bf16 %v1814, %v1811
        %v2063 = vpack.c.bf16 %v1822, %v1819
        %v2064 = vpack.c.bf16 %v1830, %v1827
        %v2065 = vpack.c.bf16 %v1838, %v1835
        %v2066 = vpack.c.bf16 %v1846, %v1843
        %v2067 = vpack.c.bf16 %v1854, %v1851
        %v2068 = vpack.c.bf16 %v1862, %v1859
        %v2069 = vpack.c.bf16 %v1870, %v1867
        %v2070 = vpack.c.bf16 %v1878, %v1875
        %v2071 = vpack.c.bf16 %v1886, %v1883
        %v2072 = vpack.c.bf16 %v1894, %v1891
        %v2073 = vpack.c.bf16 %v1902, %v1899
        %v2074 = vpack.c.bf16 %v1910, %v1907
        %v2075 = vpack.c.bf16 %v1918, %v1915
        %v2076 = vpack.c.bf16 %v1926, %v1923
        %v2077 = vpack.c.bf16 %v1934, %v1931
        %v2078 = vpack.c.bf16 %v1942, %v1939
        %v2079 = vpack.c.bf16 %v1950, %v1947
        %v2080 = vpack.c.bf16 %v1958, %v1955
        %v2081 = vpack.c.bf16 %v1966, %v1963
        %v2082 = vpack.c.bf16 %v1974, %v1971
        %v2083 = vpack.c.bf16 %v1982, %v1979
        %v2084 = vpack.c.bf16 %v1990, %v1987
        %v2085 = vpack.c.bf16 %v1998, %v1995
        %v2086 = vpack.c.bf16 %v2006, %v2003
        %v2087 = vpack.c.bf16 %v2014, %v2011
        %v2088 = vpack.c.bf16 %v2022, %v2019
        %v2089 = vpack.c.bf16 %v2030, %v2027
        %v2090 = vpack.c.bf16 %v2038, %v2035
        %v2091 = vpack.c.bf16 %v2046, %v2043
        %v2092 = vpack.c.bf16 %v2054, %v2051
        %v2093 = vld [vmem:[%s5] sm:$0xf]
        %v2094 = vld [vmem:[%s5 + $0x4] sm:$0xf]
        %s2095 = scalar_lea.vmem %s5, 8
        %v2096 = vld [vmem:[%s2095] sm:$0xf]
        %v2097 = vld [vmem:[%s2095 + $0x4] sm:$0xf]
        %v2100 = vunpack.c.l.b16 %v2096
        %v2101 = vunpack.c.l.b16 %v2097
        %v2102 = vpack.c.b16 %v2101, %v2100
        %vm2104 = vcmask 130048
        %v2106 = vsel %vm2104, %v2061, 0
        %v2109 = vsel %vm2104, %v2062, 0
        %v2112 = vsel %vm2104, %v2063, 0
        %v2115 = vsel %vm2104, %v2064, 0
        %2117 = vmatprep.subr.bf16.mxu0 0
        %2118 = vmatpush1.bf16.msra.mxu0 0
        %2119 = vmatprep.subr.bf16.mxu0 0
        %2120 = vmatpush1.bf16.msra.mxu0 0
        %2121 = vmatprep.subr.bf16.mxu0 0
        %2122 = vmatpush1.bf16.msra.mxu0 0
        %2123 = vmatprep.subr.bf16.mxu0 0
        %2124 = vmatpush1.bf16.msra.mxu0 0
        %2125 = vmatprep.subr.bf16.mxu0 0
        %2126 = vmatpush1.bf16.msra.mxu0 0
        %2127 = vmatprep.subr.bf16.mxu0 0
        %2128 = vmatpush1.bf16.msra.mxu0 0
        %2129 = vmatprep.subr.bf16.mxu0 0
        %2130 = vmatpush1.bf16.msra.mxu0 0
        %2131 = vmatprep.subr.bf16.mxu0 0
        %2132 = vmatpush1.bf16.msra.mxu0 %v2102
        %2133 = vmatprep.subr.bf16.mxu0 0
        %2134 = vmatpush2.bf16.msra.mxu0 0
        %2135 = vmatprep.subr.bf16.mxu0 0
        %2136 = vmatpush2.bf16.msra.mxu0 0
        %2137 = vmatprep.subr.bf16.mxu0 0
        %2138 = vmatpush2.bf16.msra.mxu0 0
        %2139 = vmatprep.subr.bf16.mxu0 0
        %2140 = vmatpush2.bf16.msra.mxu0 0
        %2141 = vmatprep.subr.bf16.mxu0 0
        %2142 = vmatpush2.bf16.msra.mxu0 0
        %2143 = vmatprep.subr.bf16.mxu0 0
        %2144 = vmatpush2.bf16.msra.mxu0 0
        %2145 = vmatprep.subr.bf16.mxu0 0
        %2146 = vmatpush2.bf16.msra.mxu0 0
        %2147 = vmatprep.subr.bf16.mxu0 0
        %2148 = vmatpush2.bf16.msra.mxu0 0
        %2149 = vmatprep.mubr.bf16.mxu0 0
        %2150 = vmatmul.mubr.bf16.gmra.mxu0 %v2106
        %v2151 = vpop.f32.mrf.mxu0
        %v2152 = vadd.f32 0.0, %v2151
        %v2153 = vpop.f32.mrf.mxu0
        %v2154 = vpop.f32.mrf.mxu0
        %v2155 = vadd.f32 0.0, %v2154
        %v2156 = vpop.f32.mrf.mxu0
        %2157 = vmatprep.mubr.bf16.mxu0 0
        %2158 = vmatmul.mubr.bf16.gmra.mxu0 %v2109
        %v2159 = vpop.f32.mrf.mxu0
        %v2160 = vadd.f32 0.0, %v2159
        %v2161 = vpop.f32.mrf.mxu0
        %v2162 = vpop.f32.mrf.mxu0
        %v2163 = vadd.f32 0.0, %v2162
        %v2164 = vpop.f32.mrf.mxu0
        %2165 = vmatprep.mubr.bf16.mxu0 0
        %2166 = vmatmul.mubr.bf16.gmra.mxu0 %v2112
        %v2167 = vpop.f32.mrf.mxu0
        %v2168 = vadd.f32 0.0, %v2167
        %v2169 = vpop.f32.mrf.mxu0
        %v2170 = vpop.f32.mrf.mxu0
        %v2171 = vadd.f32 0.0, %v2170
        %v2172 = vpop.f32.mrf.mxu0
        %2173 = vmatprep.mubr.bf16.mxu0 0
        %2174 = vmatmul.mubr.bf16.gmra.mxu0 %v2115
        %v2175 = vpop.f32.mrf.mxu0
        %v2176 = vadd.f32 0.0, %v2175
        %v2177 = vpop.f32.mrf.mxu0
        %v2178 = vpop.f32.mrf.mxu0
        %v2179 = vadd.f32 0.0, %v2178
        %v2180 = vpop.f32.mrf.mxu0
        %2181 = vdwg.mxu0
        %v2184 = vunpack.c.l.b16 %v2093
        %v2185 = vunpack.c.l.b16 %v2094
        %v2186 = vpack.c.b16 %v2185, %v2184
        %v2189 = vsel %vm2104, %v2057, 0
        %v2192 = vsel %vm2104, %v2058, 0
        %v2195 = vsel %vm2104, %v2059, 0
        %v2198 = vsel %vm2104, %v2060, 0
        %2200 = vmatprep.subr.bf16.mxu0 0
        %2201 = vmatpush1.bf16.msra.mxu0 0
        %2202 = vmatprep.subr.bf16.mxu0 0
        %2203 = vmatpush1.bf16.msra.mxu0 0
        %2204 = vmatprep.subr.bf16.mxu0 0
        %2205 = vmatpush1.bf16.msra.mxu0 0
        %2206 = vmatprep.subr.bf16.mxu0 0
        %2207 = vmatpush1.bf16.msra.mxu0 0
        %2208 = vmatprep.subr.bf16.mxu0 0
        %2209 = vmatpush1.bf16.msra.mxu0 0
        %2210 = vmatprep.subr.bf16.mxu0 0
        %2211 = vmatpush1.bf16.msra.mxu0 0
        %2212 = vmatprep.subr.bf16.mxu0 0
        %2213 = vmatpush1.bf16.msra.mxu0 0
        %2214 = vmatprep.subr.bf16.mxu0 0
        %2215 = vmatpush1.bf16.msra.mxu0 %v2186
        %2216 = vmatprep.subr.bf16.mxu0 0
        %2217 = vmatpush2.bf16.msra.mxu0 0
        %2218 = vmatprep.subr.bf16.mxu0 0
        %2219 = vmatpush2.bf16.msra.mxu0 0
        %2220 = vmatprep.subr.bf16.mxu0 0
        %2221 = vmatpush2.bf16.msra.mxu0 0
        %2222 = vmatprep.subr.bf16.mxu0 0
        %2223 = vmatpush2.bf16.msra.mxu0 0
        %2224 = vmatprep.subr.bf16.mxu0 0
        %2225 = vmatpush2.bf16.msra.mxu0 0
        %2226 = vmatprep.subr.bf16.mxu0 0
        %2227 = vmatpush2.bf16.msra.mxu0 0
        %2228 = vmatprep.subr.bf16.mxu0 0
        %2229 = vmatpush2.bf16.msra.mxu0 0
        %2230 = vmatprep.subr.bf16.mxu0 0
        %2231 = vmatpush2.bf16.msra.mxu0 0
        %2232 = vmatprep.mubr.bf16.mxu0 0
        %2233 = vmatmul.mubr.bf16.gmra.mxu0 %v2189
        %v2234 = vpop.f32.mrf.mxu0
        %v2235 = vadd.f32 %v2152, %v2234
        %v2236 = vpop.f32.mrf.mxu0
        %v2237 = vpop.f32.mrf.mxu0
        %v2238 = vadd.f32 %v2155, %v2237
        %v2239 = vpop.f32.mrf.mxu0
        %2240 = vmatprep.mubr.bf16.mxu0 0
        %2241 = vmatmul.mubr.bf16.gmra.mxu0 %v2192
        %v2242 = vpop.f32.mrf.mxu0
        %v2243 = vadd.f32 %v2160, %v2242
        %v2244 = vpop.f32.mrf.mxu0
        %v2245 = vpop.f32.mrf.mxu0
        %v2246 = vadd.f32 %v2163, %v2245
        %v2247 = vpop.f32.mrf.mxu0
        %2248 = vmatprep.mubr.bf16.mxu0 0
        %2249 = vmatmul.mubr.bf16.gmra.mxu0 %v2195
        %v2250 = vpop.f32.mrf.mxu0
        %v2251 = vadd.f32 %v2168, %v2250
        %v2252 = vpop.f32.mrf.mxu0
        %v2253 = vpop.f32.mrf.mxu0
        %v2254 = vadd.f32 %v2171, %v2253
        %v2255 = vpop.f32.mrf.mxu0
        %2256 = vmatprep.mubr.bf16.mxu0 0
        %2257 = vmatmul.mubr.bf16.gmra.mxu0 %v2198
        %v2258 = vpop.f32.mrf.mxu0
        %v2259 = vadd.f32 %v2176, %v2258
        %v2260 = vpop.f32.mrf.mxu0
        %v2261 = vpop.f32.mrf.mxu0
        %v2262 = vadd.f32 %v2179, %v2261
        %v2263 = vpop.f32.mrf.mxu0
        %2264 = vdwg.mxu0
        %s2265 = scalar_lea.vmem %s5, 16
        %v2266 = vld [vmem:[%s2265] sm:$0xf]
        %v2267 = vld [vmem:[%s2265 + $0x4] sm:$0xf]
        %v2270 = vunpack.c.l.b16 %v2266
        %v2271 = vunpack.c.l.b16 %v2267
        %v2272 = vpack.c.b16 %v2271, %v2270
        %v2275 = vsel %vm2104, %v2065, 0
        %v2278 = vsel %vm2104, %v2066, 0
        %v2281 = vsel %vm2104, %v2067, 0
        %v2284 = vsel %vm2104, %v2068, 0
        %2286 = vmatprep.subr.bf16.mxu0 0
        %2287 = vmatpush1.bf16.msra.mxu0 0
        %2288 = vmatprep.subr.bf16.mxu0 0
        %2289 = vmatpush1.bf16.msra.mxu0 0
        %2290 = vmatprep.subr.bf16.mxu0 0
        %2291 = vmatpush1.bf16.msra.mxu0 0
        %2292 = vmatprep.subr.bf16.mxu0 0
        %2293 = vmatpush1.bf16.msra.mxu0 0
        %2294 = vmatprep.subr.bf16.mxu0 0
        %2295 = vmatpush1.bf16.msra.mxu0 0
        %2296 = vmatprep.subr.bf16.mxu0 0
        %2297 = vmatpush1.bf16.msra.mxu0 0
        %2298 = vmatprep.subr.bf16.mxu0 0
        %2299 = vmatpush1.bf16.msra.mxu0 0
        %2300 = vmatprep.subr.bf16.mxu0 0
        %2301 = vmatpush1.bf16.msra.mxu0 %v2272
        %2302 = vmatprep.subr.bf16.mxu0 0
        %2303 = vmatpush2.bf16.msra.mxu0 0
        %2304 = vmatprep.subr.bf16.mxu0 0
        %2305 = vmatpush2.bf16.msra.mxu0 0
        %2306 = vmatprep.subr.bf16.mxu0 0
        %2307 = vmatpush2.bf16.msra.mxu0 0
        %2308 = vmatprep.subr.bf16.mxu0 0
        %2309 = vmatpush2.bf16.msra.mxu0 0
        %2310 = vmatprep.subr.bf16.mxu0 0
        %2311 = vmatpush2.bf16.msra.mxu0 0
        %2312 = vmatprep.subr.bf16.mxu0 0
        %2313 = vmatpush2.bf16.msra.mxu0 0
        %2314 = vmatprep.subr.bf16.mxu0 0
        %2315 = vmatpush2.bf16.msra.mxu0 0
        %2316 = vmatprep.subr.bf16.mxu0 0
        %2317 = vmatpush2.bf16.msra.mxu0 0
        %2318 = vmatprep.mubr.bf16.mxu0 0
        %2319 = vmatmul.mubr.bf16.gmra.mxu0 %v2275
        %v2320 = vpop.f32.mrf.mxu0
        %v2321 = vadd.f32 0.0, %v2320
        %v2322 = vpop.f32.mrf.mxu0
        %v2323 = vpop.f32.mrf.mxu0
        %v2324 = vadd.f32 0.0, %v2323
        %v2325 = vpop.f32.mrf.mxu0
        %2326 = vmatprep.mubr.bf16.mxu0 0
        %2327 = vmatmul.mubr.bf16.gmra.mxu0 %v2278
        %v2328 = vpop.f32.mrf.mxu0
        %v2329 = vadd.f32 0.0, %v2328
        %v2330 = vpop.f32.mrf.mxu0
        %v2331 = vpop.f32.mrf.mxu0
        %v2332 = vadd.f32 0.0, %v2331
        %v2333 = vpop.f32.mrf.mxu0
        %2334 = vmatprep.mubr.bf16.mxu0 0
        %2335 = vmatmul.mubr.bf16.gmra.mxu0 %v2281
        %v2336 = vpop.f32.mrf.mxu0
        %v2337 = vadd.f32 0.0, %v2336
        %v2338 = vpop.f32.mrf.mxu0
        %v2339 = vpop.f32.mrf.mxu0
        %v2340 = vadd.f32 0.0, %v2339
        %v2341 = vpop.f32.mrf.mxu0
        %2342 = vmatprep.mubr.bf16.mxu0 0
        %2343 = vmatmul.mubr.bf16.gmra.mxu0 %v2284
        %v2344 = vpop.f32.mrf.mxu0
        %v2345 = vadd.f32 0.0, %v2344
        %v2346 = vpop.f32.mrf.mxu0
        %v2347 = vpop.f32.mrf.mxu0
        %v2348 = vadd.f32 0.0, %v2347
        %v2349 = vpop.f32.mrf.mxu0
        %2350 = vdwg.mxu0
        %v2351 = vadd.f32 %v2235, %v2321
        %v2352 = vadd.f32 %v2238, %v2324
        %v2353 = vadd.f32 %v2243, %v2329
        %v2354 = vadd.f32 %v2246, %v2332
        %v2355 = vadd.f32 %v2251, %v2337
        %v2356 = vadd.f32 %v2254, %v2340
        %v2357 = vadd.f32 %v2259, %v2345
        %v2358 = vadd.f32 %v2262, %v2348
        %s2359 = scalar_lea.vmem %s5, 24
        %v2360 = vld [vmem:[%s2359] sm:$0xf]
        %v2361 = vld [vmem:[%s2359 + $0x4] sm:$0xf]
        %v2364 = vunpack.c.l.b16 %v2360
        %v2365 = vunpack.c.l.b16 %v2361
        %v2366 = vpack.c.b16 %v2365, %v2364
        %v2369 = vsel %vm2104, %v2069, 0
        %v2372 = vsel %vm2104, %v2070, 0
        %v2375 = vsel %vm2104, %v2071, 0
        %v2378 = vsel %vm2104, %v2072, 0
        %2380 = vmatprep.subr.bf16.mxu0 0
        %2381 = vmatpush1.bf16.msra.mxu0 0
        %2382 = vmatprep.subr.bf16.mxu0 0
        %2383 = vmatpush1.bf16.msra.mxu0 0
        %2384 = vmatprep.subr.bf16.mxu0 0
        %2385 = vmatpush1.bf16.msra.mxu0 0
        %2386 = vmatprep.subr.bf16.mxu0 0
        %2387 = vmatpush1.bf16.msra.mxu0 0
        %2388 = vmatprep.subr.bf16.mxu0 0
        %2389 = vmatpush1.bf16.msra.mxu0 0
        %2390 = vmatprep.subr.bf16.mxu0 0
        %2391 = vmatpush1.bf16.msra.mxu0 0
        %2392 = vmatprep.subr.bf16.mxu0 0
        %2393 = vmatpush1.bf16.msra.mxu0 0
        %2394 = vmatprep.subr.bf16.mxu0 0
        %2395 = vmatpush1.bf16.msra.mxu0 %v2366
        %2396 = vmatprep.subr.bf16.mxu0 0
        %2397 = vmatpush2.bf16.msra.mxu0 0
        %2398 = vmatprep.subr.bf16.mxu0 0
        %2399 = vmatpush2.bf16.msra.mxu0 0
        %2400 = vmatprep.subr.bf16.mxu0 0
        %2401 = vmatpush2.bf16.msra.mxu0 0
        %2402 = vmatprep.subr.bf16.mxu0 0
        %2403 = vmatpush2.bf16.msra.mxu0 0
        %2404 = vmatprep.subr.bf16.mxu0 0
        %2405 = vmatpush2.bf16.msra.mxu0 0
        %2406 = vmatprep.subr.bf16.mxu0 0
        %2407 = vmatpush2.bf16.msra.mxu0 0
        %2408 = vmatprep.subr.bf16.mxu0 0
        %2409 = vmatpush2.bf16.msra.mxu0 0
        %2410 = vmatprep.subr.bf16.mxu0 0
        %2411 = vmatpush2.bf16.msra.mxu0 0
        %2412 = vmatprep.mubr.bf16.mxu0 0
        %2413 = vmatmul.mubr.bf16.gmra.mxu0 %v2369
        %v2414 = vpop.f32.mrf.mxu0
        %v2415 = vadd.f32 0.0, %v2414
        %v2416 = vpop.f32.mrf.mxu0
        %v2417 = vpop.f32.mrf.mxu0
        %v2418 = vadd.f32 0.0, %v2417
        %v2419 = vpop.f32.mrf.mxu0
        %2420 = vmatprep.mubr.bf16.mxu0 0
        %2421 = vmatmul.mubr.bf16.gmra.mxu0 %v2372
        %v2422 = vpop.f32.mrf.mxu0
        %v2423 = vadd.f32 0.0, %v2422
        %v2424 = vpop.f32.mrf.mxu0
        %v2425 = vpop.f32.mrf.mxu0
        %v2426 = vadd.f32 0.0, %v2425
        %v2427 = vpop.f32.mrf.mxu0
        %2428 = vmatprep.mubr.bf16.mxu0 0
        %2429 = vmatmul.mubr.bf16.gmra.mxu0 %v2375
        %v2430 = vpop.f32.mrf.mxu0
        %v2431 = vadd.f32 0.0, %v2430
        %v2432 = vpop.f32.mrf.mxu0
        %v2433 = vpop.f32.mrf.mxu0
        %v2434 = vadd.f32 0.0, %v2433
        %v2435 = vpop.f32.mrf.mxu0
        %2436 = vmatprep.mubr.bf16.mxu0 0
        %2437 = vmatmul.mubr.bf16.gmra.mxu0 %v2378
        %v2438 = vpop.f32.mrf.mxu0
        %v2439 = vadd.f32 0.0, %v2438
        %v2440 = vpop.f32.mrf.mxu0
        %v2441 = vpop.f32.mrf.mxu0
        %v2442 = vadd.f32 0.0, %v2441
        %v2443 = vpop.f32.mrf.mxu0
        %2444 = vdwg.mxu0
        %v2445 = vadd.f32 %v2351, %v2415
        %v2446 = vadd.f32 %v2352, %v2418
        %v2447 = vadd.f32 %v2353, %v2423
        %v2448 = vadd.f32 %v2354, %v2426
        %v2449 = vadd.f32 %v2355, %v2431
        %v2450 = vadd.f32 %v2356, %v2434
        %v2451 = vadd.f32 %v2357, %v2439
        %v2452 = vadd.f32 %v2358, %v2442
        %s2453 = scalar_lea.vmem %s5, 32
        %v2454 = vld [vmem:[%s2453] sm:$0xf]
        %v2455 = vld [vmem:[%s2453 + $0x4] sm:$0xf]
        %v2458 = vunpack.c.l.b16 %v2454
        %v2459 = vunpack.c.l.b16 %v2455
        %v2460 = vpack.c.b16 %v2459, %v2458
        %v2463 = vsel %vm2104, %v2073, 0
        %v2466 = vsel %vm2104, %v2074, 0
        %v2469 = vsel %vm2104, %v2075, 0
        %v2472 = vsel %vm2104, %v2076, 0
        %2474 = vmatprep.subr.bf16.mxu0 0
        %2475 = vmatpush1.bf16.msra.mxu0 0
        %2476 = vmatprep.subr.bf16.mxu0 0
        %2477 = vmatpush1.bf16.msra.mxu0 0
        %2478 = vmatprep.subr.bf16.mxu0 0
        %2479 = vmatpush1.bf16.msra.mxu0 0
        %2480 = vmatprep.subr.bf16.mxu0 0
        %2481 = vmatpush1.bf16.msra.mxu0 0
        %2482 = vmatprep.subr.bf16.mxu0 0
        %2483 = vmatpush1.bf16.msra.mxu0 0
        %2484 = vmatprep.subr.bf16.mxu0 0
        %2485 = vmatpush1.bf16.msra.mxu0 0
        %2486 = vmatprep.subr.bf16.mxu0 0
        %2487 = vmatpush1.bf16.msra.mxu0 0
        %2488 = vmatprep.subr.bf16.mxu0 0
        %2489 = vmatpush1.bf16.msra.mxu0 %v2460
        %2490 = vmatprep.subr.bf16.mxu0 0
        %2491 = vmatpush2.bf16.msra.mxu0 0
        %2492 = vmatprep.subr.bf16.mxu0 0
        %2493 = vmatpush2.bf16.msra.mxu0 0
        %2494 = vmatprep.subr.bf16.mxu0 0
        %2495 = vmatpush2.bf16.msra.mxu0 0
        %2496 = vmatprep.subr.bf16.mxu0 0
        %2497 = vmatpush2.bf16.msra.mxu0 0
        %2498 = vmatprep.subr.bf16.mxu0 0
        %2499 = vmatpush2.bf16.msra.mxu0 0
        %2500 = vmatprep.subr.bf16.mxu0 0
        %2501 = vmatpush2.bf16.msra.mxu0 0
        %2502 = vmatprep.subr.bf16.mxu0 0
        %2503 = vmatpush2.bf16.msra.mxu0 0
        %2504 = vmatprep.subr.bf16.mxu0 0
        %2505 = vmatpush2.bf16.msra.mxu0 0
        %2506 = vmatprep.mubr.bf16.mxu0 0
        %2507 = vmatmul.mubr.bf16.gmra.mxu0 %v2463
        %v2508 = vpop.f32.mrf.mxu0
        %v2509 = vadd.f32 0.0, %v2508
        %v2510 = vpop.f32.mrf.mxu0
        %v2511 = vpop.f32.mrf.mxu0
        %v2512 = vadd.f32 0.0, %v2511
        %v2513 = vpop.f32.mrf.mxu0
        %2514 = vmatprep.mubr.bf16.mxu0 0
        %2515 = vmatmul.mubr.bf16.gmra.mxu0 %v2466
        %v2516 = vpop.f32.mrf.mxu0
        %v2517 = vadd.f32 0.0, %v2516
        %v2518 = vpop.f32.mrf.mxu0
        %v2519 = vpop.f32.mrf.mxu0
        %v2520 = vadd.f32 0.0, %v2519
        %v2521 = vpop.f32.mrf.mxu0
        %2522 = vmatprep.mubr.bf16.mxu0 0
        %2523 = vmatmul.mubr.bf16.gmra.mxu0 %v2469
        %v2524 = vpop.f32.mrf.mxu0
        %v2525 = vadd.f32 0.0, %v2524
        %v2526 = vpop.f32.mrf.mxu0
        %v2527 = vpop.f32.mrf.mxu0
        %v2528 = vadd.f32 0.0, %v2527
        %v2529 = vpop.f32.mrf.mxu0
        %2530 = vmatprep.mubr.bf16.mxu0 0
        %2531 = vmatmul.mubr.bf16.gmra.mxu0 %v2472
        %v2532 = vpop.f32.mrf.mxu0
        %v2533 = vadd.f32 0.0, %v2532
        %v2534 = vpop.f32.mrf.mxu0
        %v2535 = vpop.f32.mrf.mxu0
        %v2536 = vadd.f32 0.0, %v2535
        %v2537 = vpop.f32.mrf.mxu0
        %2538 = vdwg.mxu0
        %v2539 = vadd.f32 %v2445, %v2509
        %v2540 = vadd.f32 %v2446, %v2512
        %v2541 = vadd.f32 %v2447, %v2517
        %v2542 = vadd.f32 %v2448, %v2520
        %v2543 = vadd.f32 %v2449, %v2525
        %v2544 = vadd.f32 %v2450, %v2528
        %v2545 = vadd.f32 %v2451, %v2533
        %v2546 = vadd.f32 %v2452, %v2536
        %s2547 = scalar_lea.vmem %s5, 40
        %v2548 = vld [vmem:[%s2547] sm:$0xf]
        %v2549 = vld [vmem:[%s2547 + $0x4] sm:$0xf]
        %v2552 = vunpack.c.l.b16 %v2548
        %v2553 = vunpack.c.l.b16 %v2549
        %v2554 = vpack.c.b16 %v2553, %v2552
        %v2557 = vsel %vm2104, %v2077, 0
        %v2560 = vsel %vm2104, %v2078, 0
        %v2563 = vsel %vm2104, %v2079, 0
        %v2566 = vsel %vm2104, %v2080, 0
        %2568 = vmatprep.subr.bf16.mxu0 0
        %2569 = vmatpush1.bf16.msra.mxu0 0
        %2570 = vmatprep.subr.bf16.mxu0 0
        %2571 = vmatpush1.bf16.msra.mxu0 0
        %2572 = vmatprep.subr.bf16.mxu0 0
        %2573 = vmatpush1.bf16.msra.mxu0 0
        %2574 = vmatprep.subr.bf16.mxu0 0
        %2575 = vmatpush1.bf16.msra.mxu0 0
        %2576 = vmatprep.subr.bf16.mxu0 0
        %2577 = vmatpush1.bf16.msra.mxu0 0
        %2578 = vmatprep.subr.bf16.mxu0 0
        %2579 = vmatpush1.bf16.msra.mxu0 0
        %2580 = vmatprep.subr.bf16.mxu0 0
        %2581 = vmatpush1.bf16.msra.mxu0 0
        %2582 = vmatprep.subr.bf16.mxu0 0
        %2583 = vmatpush1.bf16.msra.mxu0 %v2554
        %2584 = vmatprep.subr.bf16.mxu0 0
        %2585 = vmatpush2.bf16.msra.mxu0 0
        %2586 = vmatprep.subr.bf16.mxu0 0
        %2587 = vmatpush2.bf16.msra.mxu0 0
        %2588 = vmatprep.subr.bf16.mxu0 0
        %2589 = vmatpush2.bf16.msra.mxu0 0
        %2590 = vmatprep.subr.bf16.mxu0 0
        %2591 = vmatpush2.bf16.msra.mxu0 0
        %2592 = vmatprep.subr.bf16.mxu0 0
        %2593 = vmatpush2.bf16.msra.mxu0 0
        %2594 = vmatprep.subr.bf16.mxu0 0
        %2595 = vmatpush2.bf16.msra.mxu0 0
        %2596 = vmatprep.subr.bf16.mxu0 0
        %2597 = vmatpush2.bf16.msra.mxu0 0
        %2598 = vmatprep.subr.bf16.mxu0 0
        %2599 = vmatpush2.bf16.msra.mxu0 0
        %2600 = vmatprep.mubr.bf16.mxu0 0
        %2601 = vmatmul.mubr.bf16.gmra.mxu0 %v2557
        %v2602 = vpop.f32.mrf.mxu0
        %v2603 = vadd.f32 0.0, %v2602
        %v2604 = vpop.f32.mrf.mxu0
        %v2605 = vpop.f32.mrf.mxu0
        %v2606 = vadd.f32 0.0, %v2605
        %v2607 = vpop.f32.mrf.mxu0
        %2608 = vmatprep.mubr.bf16.mxu0 0
        %2609 = vmatmul.mubr.bf16.gmra.mxu0 %v2560
        %v2610 = vpop.f32.mrf.mxu0
        %v2611 = vadd.f32 0.0, %v2610
        %v2612 = vpop.f32.mrf.mxu0
        %v2613 = vpop.f32.mrf.mxu0
        %v2614 = vadd.f32 0.0, %v2613
        %v2615 = vpop.f32.mrf.mxu0
        %2616 = vmatprep.mubr.bf16.mxu0 0
        %2617 = vmatmul.mubr.bf16.gmra.mxu0 %v2563
        %v2618 = vpop.f32.mrf.mxu0
        %v2619 = vadd.f32 0.0, %v2618
        %v2620 = vpop.f32.mrf.mxu0
        %v2621 = vpop.f32.mrf.mxu0
        %v2622 = vadd.f32 0.0, %v2621
        %v2623 = vpop.f32.mrf.mxu0
        %2624 = vmatprep.mubr.bf16.mxu0 0
        %2625 = vmatmul.mubr.bf16.gmra.mxu0 %v2566
        %v2626 = vpop.f32.mrf.mxu0
        %v2627 = vadd.f32 0.0, %v2626
        %v2628 = vpop.f32.mrf.mxu0
        %v2629 = vpop.f32.mrf.mxu0
        %v2630 = vadd.f32 0.0, %v2629
        %v2631 = vpop.f32.mrf.mxu0
        %2632 = vdwg.mxu0
        %v2633 = vadd.f32 %v2539, %v2603
        %v2634 = vadd.f32 %v2540, %v2606
        %v2635 = vadd.f32 %v2541, %v2611
        %v2636 = vadd.f32 %v2542, %v2614
        %v2637 = vadd.f32 %v2543, %v2619
        %v2638 = vadd.f32 %v2544, %v2622
        %v2639 = vadd.f32 %v2545, %v2627
        %v2640 = vadd.f32 %v2546, %v2630
        %s2641 = scalar_lea.vmem %s5, 48
        %v2642 = vld [vmem:[%s2641] sm:$0xf]
        %v2643 = vld [vmem:[%s2641 + $0x4] sm:$0xf]
        %v2646 = vunpack.c.l.b16 %v2642
        %v2647 = vunpack.c.l.b16 %v2643
        %v2648 = vpack.c.b16 %v2647, %v2646
        %v2651 = vsel %vm2104, %v2081, 0
        %v2654 = vsel %vm2104, %v2082, 0
        %v2657 = vsel %vm2104, %v2083, 0
        %v2660 = vsel %vm2104, %v2084, 0
        %2662 = vmatprep.subr.bf16.mxu0 0
        %2663 = vmatpush1.bf16.msra.mxu0 0
        %2664 = vmatprep.subr.bf16.mxu0 0
        %2665 = vmatpush1.bf16.msra.mxu0 0
        %2666 = vmatprep.subr.bf16.mxu0 0
        %2667 = vmatpush1.bf16.msra.mxu0 0
        %2668 = vmatprep.subr.bf16.mxu0 0
        %2669 = vmatpush1.bf16.msra.mxu0 0
        %2670 = vmatprep.subr.bf16.mxu0 0
        %2671 = vmatpush1.bf16.msra.mxu0 0
        %2672 = vmatprep.subr.bf16.mxu0 0
        %2673 = vmatpush1.bf16.msra.mxu0 0
        %2674 = vmatprep.subr.bf16.mxu0 0
        %2675 = vmatpush1.bf16.msra.mxu0 0
        %2676 = vmatprep.subr.bf16.mxu0 0
        %2677 = vmatpush1.bf16.msra.mxu0 %v2648
        %2678 = vmatprep.subr.bf16.mxu0 0
        %2679 = vmatpush2.bf16.msra.mxu0 0
        %2680 = vmatprep.subr.bf16.mxu0 0
        %2681 = vmatpush2.bf16.msra.mxu0 0
        %2682 = vmatprep.subr.bf16.mxu0 0
        %2683 = vmatpush2.bf16.msra.mxu0 0
        %2684 = vmatprep.subr.bf16.mxu0 0
        %2685 = vmatpush2.bf16.msra.mxu0 0
        %2686 = vmatprep.subr.bf16.mxu0 0
        %2687 = vmatpush2.bf16.msra.mxu0 0
        %2688 = vmatprep.subr.bf16.mxu0 0
        %2689 = vmatpush2.bf16.msra.mxu0 0
        %2690 = vmatprep.subr.bf16.mxu0 0
        %2691 = vmatpush2.bf16.msra.mxu0 0
        %2692 = vmatprep.subr.bf16.mxu0 0
        %2693 = vmatpush2.bf16.msra.mxu0 0
        %2694 = vmatprep.mubr.bf16.mxu0 0
        %2695 = vmatmul.mubr.bf16.gmra.mxu0 %v2651
        %v2696 = vpop.f32.mrf.mxu0
        %v2697 = vadd.f32 0.0, %v2696
        %v2698 = vpop.f32.mrf.mxu0
        %v2699 = vpop.f32.mrf.mxu0
        %v2700 = vadd.f32 0.0, %v2699
        %v2701 = vpop.f32.mrf.mxu0
        %2702 = vmatprep.mubr.bf16.mxu0 0
        %2703 = vmatmul.mubr.bf16.gmra.mxu0 %v2654
        %v2704 = vpop.f32.mrf.mxu0
        %v2705 = vadd.f32 0.0, %v2704
        %v2706 = vpop.f32.mrf.mxu0
        %v2707 = vpop.f32.mrf.mxu0
        %v2708 = vadd.f32 0.0, %v2707
        %v2709 = vpop.f32.mrf.mxu0
        %2710 = vmatprep.mubr.bf16.mxu0 0
        %2711 = vmatmul.mubr.bf16.gmra.mxu0 %v2657
        %v2712 = vpop.f32.mrf.mxu0
        %v2713 = vadd.f32 0.0, %v2712
        %v2714 = vpop.f32.mrf.mxu0
        %v2715 = vpop.f32.mrf.mxu0
        %v2716 = vadd.f32 0.0, %v2715
        %v2717 = vpop.f32.mrf.mxu0
        %2718 = vmatprep.mubr.bf16.mxu0 0
        %2719 = vmatmul.mubr.bf16.gmra.mxu0 %v2660
        %v2720 = vpop.f32.mrf.mxu0
        %v2721 = vadd.f32 0.0, %v2720
        %v2722 = vpop.f32.mrf.mxu0
        %v2723 = vpop.f32.mrf.mxu0
        %v2724 = vadd.f32 0.0, %v2723
        %v2725 = vpop.f32.mrf.mxu0
        %2726 = vdwg.mxu0
        %v2727 = vadd.f32 %v2633, %v2697
        %v2728 = vadd.f32 %v2634, %v2700
        %v2729 = vadd.f32 %v2635, %v2705
        %v2730 = vadd.f32 %v2636, %v2708
        %v2731 = vadd.f32 %v2637, %v2713
        %v2732 = vadd.f32 %v2638, %v2716
        %v2733 = vadd.f32 %v2639, %v2721
        %v2734 = vadd.f32 %v2640, %v2724
        %s2735 = scalar_lea.vmem %s5, 56
        %v2736 = vld [vmem:[%s2735] sm:$0xf]
        %v2737 = vld [vmem:[%s2735 + $0x4] sm:$0xf]
        %v2740 = vunpack.c.l.b16 %v2736
        %v2741 = vunpack.c.l.b16 %v2737
        %v2742 = vpack.c.b16 %v2741, %v2740
        %v2745 = vsel %vm2104, %v2085, 0
        %v2748 = vsel %vm2104, %v2086, 0
        %v2751 = vsel %vm2104, %v2087, 0
        %v2754 = vsel %vm2104, %v2088, 0
        %2756 = vmatprep.subr.bf16.mxu0 0
        %2757 = vmatpush1.bf16.msra.mxu0 0
        %2758 = vmatprep.subr.bf16.mxu0 0
        %2759 = vmatpush1.bf16.msra.mxu0 0
        %2760 = vmatprep.subr.bf16.mxu0 0
        %2761 = vmatpush1.bf16.msra.mxu0 0
        %2762 = vmatprep.subr.bf16.mxu0 0
        %2763 = vmatpush1.bf16.msra.mxu0 0
        %2764 = vmatprep.subr.bf16.mxu0 0
        %2765 = vmatpush1.bf16.msra.mxu0 0
        %2766 = vmatprep.subr.bf16.mxu0 0
        %2767 = vmatpush1.bf16.msra.mxu0 0
        %2768 = vmatprep.subr.bf16.mxu0 0
        %2769 = vmatpush1.bf16.msra.mxu0 0
        %2770 = vmatprep.subr.bf16.mxu0 0
        %2771 = vmatpush1.bf16.msra.mxu0 %v2742
        %2772 = vmatprep.subr.bf16.mxu0 0
        %2773 = vmatpush2.bf16.msra.mxu0 0
        %2774 = vmatprep.subr.bf16.mxu0 0
        %2775 = vmatpush2.bf16.msra.mxu0 0
        %2776 = vmatprep.subr.bf16.mxu0 0
        %2777 = vmatpush2.bf16.msra.mxu0 0
        %2778 = vmatprep.subr.bf16.mxu0 0
        %2779 = vmatpush2.bf16.msra.mxu0 0
        %2780 = vmatprep.subr.bf16.mxu0 0
        %2781 = vmatpush2.bf16.msra.mxu0 0
        %2782 = vmatprep.subr.bf16.mxu0 0
        %2783 = vmatpush2.bf16.msra.mxu0 0
        %2784 = vmatprep.subr.bf16.mxu0 0
        %2785 = vmatpush2.bf16.msra.mxu0 0
        %2786 = vmatprep.subr.bf16.mxu0 0
        %2787 = vmatpush2.bf16.msra.mxu0 0
        %2788 = vmatprep.mubr.bf16.mxu0 0
        %2789 = vmatmul.mubr.bf16.gmra.mxu0 %v2745
        %v2790 = vpop.f32.mrf.mxu0
        %v2791 = vadd.f32 0.0, %v2790
        %v2792 = vpop.f32.mrf.mxu0
        %v2793 = vpop.f32.mrf.mxu0
        %v2794 = vadd.f32 0.0, %v2793
        %v2795 = vpop.f32.mrf.mxu0
        %2796 = vmatprep.mubr.bf16.mxu0 0
        %2797 = vmatmul.mubr.bf16.gmra.mxu0 %v2748
        %v2798 = vpop.f32.mrf.mxu0
        %v2799 = vadd.f32 0.0, %v2798
        %v2800 = vpop.f32.mrf.mxu0
        %v2801 = vpop.f32.mrf.mxu0
        %v2802 = vadd.f32 0.0, %v2801
        %v2803 = vpop.f32.mrf.mxu0
        %2804 = vmatprep.mubr.bf16.mxu0 0
        %2805 = vmatmul.mubr.bf16.gmra.mxu0 %v2751
        %v2806 = vpop.f32.mrf.mxu0
        %v2807 = vadd.f32 0.0, %v2806
        %v2808 = vpop.f32.mrf.mxu0
        %v2809 = vpop.f32.mrf.mxu0
        %v2810 = vadd.f32 0.0, %v2809
        %v2811 = vpop.f32.mrf.mxu0
        %2812 = vmatprep.mubr.bf16.mxu0 0
        %2813 = vmatmul.mubr.bf16.gmra.mxu0 %v2754
        %v2814 = vpop.f32.mrf.mxu0
        %v2815 = vadd.f32 0.0, %v2814
        %v2816 = vpop.f32.mrf.mxu0
        %v2817 = vpop.f32.mrf.mxu0
        %v2818 = vadd.f32 0.0, %v2817
        %v2819 = vpop.f32.mrf.mxu0
        %2820 = vdwg.mxu0
        %v2821 = vadd.f32 %v2727, %v2791
        %v2822 = vadd.f32 %v2728, %v2794
        %v2823 = vadd.f32 %v2729, %v2799
        %v2824 = vadd.f32 %v2730, %v2802
        %v2825 = vadd.f32 %v2731, %v2807
        %v2826 = vadd.f32 %v2732, %v2810
        %v2827 = vadd.f32 %v2733, %v2815
        %v2828 = vadd.f32 %v2734, %v2818
        %s2829 = scalar_lea.vmem %s5, 64
        %v2830 = vld [vmem:[%s2829] sm:$0xf]
        %v2831 = vld [vmem:[%s2829 + $0x4] sm:$0xf]
        %v2834 = vunpack.c.l.b16 %v2830
        %v2835 = vunpack.c.l.b16 %v2831
        %v2836 = vpack.c.b16 %v2835, %v2834
        %v2839 = vsel %vm2104, %v2089, 0
        %v2842 = vsel %vm2104, %v2090, 0
        %v2845 = vsel %vm2104, %v2091, 0
        %v2848 = vsel %vm2104, %v2092, 0
        %2850 = vmatprep.subr.bf16.mxu0 0
        %2851 = vmatpush1.bf16.msra.mxu0 0
        %2852 = vmatprep.subr.bf16.mxu0 0
        %2853 = vmatpush1.bf16.msra.mxu0 0
        %2854 = vmatprep.subr.bf16.mxu0 0
        %2855 = vmatpush1.bf16.msra.mxu0 0
        %2856 = vmatprep.subr.bf16.mxu0 0
        %2857 = vmatpush1.bf16.msra.mxu0 0
        %2858 = vmatprep.subr.bf16.mxu0 0
        %2859 = vmatpush1.bf16.msra.mxu0 0
        %2860 = vmatprep.subr.bf16.mxu0 0
        %2861 = vmatpush1.bf16.msra.mxu0 0
        %2862 = vmatprep.subr.bf16.mxu0 0
        %2863 = vmatpush1.bf16.msra.mxu0 0
        %2864 = vmatprep.subr.bf16.mxu0 0
        %2865 = vmatpush1.bf16.msra.mxu0 %v2836
        %2866 = vmatprep.subr.bf16.mxu0 0
        %2867 = vmatpush2.bf16.msra.mxu0 0
        %2868 = vmatprep.subr.bf16.mxu0 0
        %2869 = vmatpush2.bf16.msra.mxu0 0
        %2870 = vmatprep.subr.bf16.mxu0 0
        %2871 = vmatpush2.bf16.msra.mxu0 0
        %2872 = vmatprep.subr.bf16.mxu0 0
        %2873 = vmatpush2.bf16.msra.mxu0 0
        %2874 = vmatprep.subr.bf16.mxu0 0
        %2875 = vmatpush2.bf16.msra.mxu0 0
        %2876 = vmatprep.subr.bf16.mxu0 0
        %2877 = vmatpush2.bf16.msra.mxu0 0
        %2878 = vmatprep.subr.bf16.mxu0 0
        %2879 = vmatpush2.bf16.msra.mxu0 0
        %2880 = vmatprep.subr.bf16.mxu0 0
        %2881 = vmatpush2.bf16.msra.mxu0 0
        %2882 = vmatprep.mubr.bf16.mxu0 0
        %2883 = vmatmul.mubr.bf16.gmra.mxu0 %v2839
        %v2884 = vpop.f32.mrf.mxu0
        %v2885 = vadd.f32 0.0, %v2884
        %v2886 = vpop.f32.mrf.mxu0
        %v2887 = vpop.f32.mrf.mxu0
        %v2888 = vadd.f32 0.0, %v2887
        %v2889 = vpop.f32.mrf.mxu0
        %2890 = vmatprep.mubr.bf16.mxu0 0
        %2891 = vmatmul.mubr.bf16.gmra.mxu0 %v2842
        %v2892 = vpop.f32.mrf.mxu0
        %v2893 = vadd.f32 0.0, %v2892
        %v2894 = vpop.f32.mrf.mxu0
        %v2895 = vpop.f32.mrf.mxu0
        %v2896 = vadd.f32 0.0, %v2895
        %v2897 = vpop.f32.mrf.mxu0
        %2898 = vmatprep.mubr.bf16.mxu0 0
        %2899 = vmatmul.mubr.bf16.gmra.mxu0 %v2845
        %v2900 = vpop.f32.mrf.mxu0
        %v2901 = vadd.f32 0.0, %v2900
        %v2902 = vpop.f32.mrf.mxu0
        %v2903 = vpop.f32.mrf.mxu0
        %v2904 = vadd.f32 0.0, %v2903
        %v2905 = vpop.f32.mrf.mxu0
        %2906 = vmatprep.mubr.bf16.mxu0 0
        %2907 = vmatmul.mubr.bf16.gmra.mxu0 %v2848
        %v2908 = vpop.f32.mrf.mxu0
        %v2909 = vadd.f32 0.0, %v2908
        %v2910 = vpop.f32.mrf.mxu0
        %v2911 = vpop.f32.mrf.mxu0
        %v2912 = vadd.f32 0.0, %v2911
        %v2913 = vpop.f32.mrf.mxu0
        %2914 = vdwg.mxu0
        %v2915 = vadd.f32 %v2821, %v2885
        %v2916 = vadd.f32 %v2822, %v2888
        %v2917 = vadd.f32 %v2823, %v2893
        %v2918 = vadd.f32 %v2824, %v2896
        %v2919 = vadd.f32 %v2825, %v2901
        %v2920 = vadd.f32 %v2826, %v2904
        %v2921 = vadd.f32 %v2827, %v2909
        %v2922 = vadd.f32 %v2828, %v2912
        %v2923 = vld [vmem:[%s6] sm:$0x1]
        %v2925 = vlaneseq
        %v2926 = vshrl.u32 %v2925, 7
        %v2927 = vsub.s32 0, %v2926
        %v2928 = vrot.slane %v2923, %v2927
        %v2930 = vadd.f32 %v2915, %v2928
        %v2931 = vadd.f32 %v2916, %v2928
        %v2932 = vadd.f32 %v2917, %v2928
        %v2933 = vadd.f32 %v2918, %v2928
        %v2934 = vadd.f32 %v2919, %v2928
        %v2935 = vadd.f32 %v2920, %v2928
        %v2936 = vadd.f32 %v2921, %v2928
        %v2937 = vadd.f32 %v2922, %v2928
        %v2938 = vmax.f32 %v2930, 0.0
        %v2939 = vmax.f32 %v2931, 0.0
        %v2940 = vmax.f32 %v2932, 0.0
        %v2941 = vmax.f32 %v2933, 0.0
        %v2942 = vmax.f32 %v2934, 0.0
        %v2943 = vmax.f32 %v2935, 0.0
        %v2944 = vmax.f32 %v2936, 0.0
        %v2945 = vmax.f32 %v2937, 0.0
        %v2946 = vpack.c.bf16 %v2939, %v2938
        %v2947 = vpack.c.bf16 %v2941, %v2940
        %v2948 = vpack.c.bf16 %v2943, %v2942
        %v2949 = vpack.c.bf16 %v2945, %v2944
        %v2950 = vld [vmem:[%s7] sm:$0xf]
        %v2951 = vld [vmem:[%s7 + $0x4] sm:$0xf]
        %v2954 = vunpack.c.l.b16 %v2950
        %v2955 = vunpack.c.l.b16 %v2951
        %v2956 = vpack.c.b16 %v2955, %v2954
        %v2958 = vsel %vm1627, %v2956, 0
        %2960 = vmatprep.subr.bf16.mxu0 0
        %2961 = vmatpush1.bf16.msra.mxu0 0
        %2962 = vmatprep.subr.bf16.mxu0 0
        %2963 = vmatpush1.bf16.msra.mxu0 0
        %2964 = vmatprep.subr.bf16.mxu0 0
        %2965 = vmatpush1.bf16.msra.mxu0 0
        %2966 = vmatprep.subr.bf16.mxu0 0
        %2967 = vmatpush1.bf16.msra.mxu0 0
        %2968 = vmatprep.subr.bf16.mxu0 0
        %2969 = vmatpush1.bf16.msra.mxu0 %v2949
        %2970 = vmatprep.subr.bf16.mxu0 0
        %2971 = vmatpush1.bf16.msra.mxu0 %v2948
        %2972 = vmatprep.subr.bf16.mxu0 0
        %2973 = vmatpush1.bf16.msra.mxu0 %v2947
        %2974 = vmatprep.subr.bf16.mxu0 0
        %2975 = vmatpush1.bf16.msra.mxu0 %v2946
        %2976 = vmatprep.subr.bf16.mxu0 0
        %2977 = vmatpush2.bf16.msra.mxu0 0
        %2978 = vmatprep.subr.bf16.mxu0 0
        %2979 = vmatpush2.bf16.msra.mxu0 0
        %2980 = vmatprep.subr.bf16.mxu0 0
        %2981 = vmatpush2.bf16.msra.mxu0 0
        %2982 = vmatprep.subr.bf16.mxu0 0
        %2983 = vmatpush2.bf16.msra.mxu0 0
        %2984 = vmatprep.subr.bf16.mxu0 0
        %2985 = vmatpush2.bf16.msra.mxu0 0
        %2986 = vmatprep.subr.bf16.mxu0 0
        %2987 = vmatpush2.bf16.msra.mxu0 0
        %2988 = vmatprep.subr.bf16.mxu0 0
        %2989 = vmatpush2.bf16.msra.mxu0 0
        %2990 = vmatprep.subr.bf16.mxu0 0
        %2991 = vmatpush2.bf16.msra.mxu0 0
        %2992 = vmatprep.mubr.bf16.mxu0 0
        %2993 = vmatmul.mubr.bf16.gmra.mxu0 %v2958
        %v2994 = vpop.f32.mrf.mxu0
        %v2995 = vadd.f32 0.0, %v2994
        %v2996 = vpop.f32.mrf.mxu0
        %v2997 = vpop.f32.mrf.mxu0
        %v2998 = vadd.f32 0.0, %v2997
        %v2999 = vpop.f32.mrf.mxu0
        %3000 = vdwg.mxu0
        %s3001 = scalar_lea.vmem %s7, 8
        %v3002 = vld [vmem:[%s3001] sm:$0xf]
        %v3003 = vld [vmem:[%s3001 + $0x4] sm:$0xf]
        %v3006 = vunpack.c.l.b16 %v3002
        %v3007 = vunpack.c.l.b16 %v3003
        %v3008 = vpack.c.b16 %v3007, %v3006
        %v3010 = vsel %vm1627, %v3008, 0
        %3012 = vmatprep.subr.bf16.mxu0 0
        %3013 = vmatpush1.bf16.msra.mxu0 0
        %3014 = vmatprep.subr.bf16.mxu0 0
        %3015 = vmatpush1.bf16.msra.mxu0 0
        %3016 = vmatprep.subr.bf16.mxu0 0
        %3017 = vmatpush1.bf16.msra.mxu0 0
        %3018 = vmatprep.subr.bf16.mxu0 0
        %3019 = vmatpush1.bf16.msra.mxu0 0
        %3020 = vmatprep.subr.bf16.mxu0 0
        %3021 = vmatpush1.bf16.msra.mxu0 %v2949
        %3022 = vmatprep.subr.bf16.mxu0 0
        %3023 = vmatpush1.bf16.msra.mxu0 %v2948
        %3024 = vmatprep.subr.bf16.mxu0 0
        %3025 = vmatpush1.bf16.msra.mxu0 %v2947
        %3026 = vmatprep.subr.bf16.mxu0 0
        %3027 = vmatpush1.bf16.msra.mxu0 %v2946
        %3028 = vmatprep.subr.bf16.mxu0 0
        %3029 = vmatpush2.bf16.msra.mxu0 0
        %3030 = vmatprep.subr.bf16.mxu0 0
        %3031 = vmatpush2.bf16.msra.mxu0 0
        %3032 = vmatprep.subr.bf16.mxu0 0
        %3033 = vmatpush2.bf16.msra.mxu0 0
        %3034 = vmatprep.subr.bf16.mxu0 0
        %3035 = vmatpush2.bf16.msra.mxu0 0
        %3036 = vmatprep.subr.bf16.mxu0 0
        %3037 = vmatpush2.bf16.msra.mxu0 0
        %3038 = vmatprep.subr.bf16.mxu0 0
        %3039 = vmatpush2.bf16.msra.mxu0 0
        %3040 = vmatprep.subr.bf16.mxu0 0
        %3041 = vmatpush2.bf16.msra.mxu0 0
        %3042 = vmatprep.subr.bf16.mxu0 0
        %3043 = vmatpush2.bf16.msra.mxu0 0
        %3044 = vmatprep.mubr.bf16.mxu0 0
        %3045 = vmatmul.mubr.bf16.gmra.mxu0 %v3010
        %v3046 = vpop.f32.mrf.mxu0
        %v3047 = vadd.f32 0.0, %v3046
        %v3048 = vpop.f32.mrf.mxu0
        %v3049 = vpop.f32.mrf.mxu0
        %v3050 = vadd.f32 0.0, %v3049
        %v3051 = vpop.f32.mrf.mxu0
        %3052 = vdwg.mxu0
        %v3053 = vmax.f32 %v2995, %v3047
        %v3054 = vmax.f32 %v2998, %v3050
        %s3055 = scalar_lea.vmem %s7, 16
        %v3056 = vld [vmem:[%s3055] sm:$0xf]
        %v3057 = vld [vmem:[%s3055 + $0x4] sm:$0xf]
        %v3060 = vunpack.c.l.b16 %v3056
        %v3061 = vunpack.c.l.b16 %v3057
        %v3062 = vpack.c.b16 %v3061, %v3060
        %v3064 = vsel %vm1627, %v3062, 0
        %3066 = vmatprep.subr.bf16.mxu0 0
        %3067 = vmatpush1.bf16.msra.mxu0 0
        %3068 = vmatprep.subr.bf16.mxu0 0
        %3069 = vmatpush1.bf16.msra.mxu0 0
        %3070 = vmatprep.subr.bf16.mxu0 0
        %3071 = vmatpush1.bf16.msra.mxu0 0
        %3072 = vmatprep.subr.bf16.mxu0 0
        %3073 = vmatpush1.bf16.msra.mxu0 0
        %3074 = vmatprep.subr.bf16.mxu0 0
        %3075 = vmatpush1.bf16.msra.mxu0 %v2949
        %3076 = vmatprep.subr.bf16.mxu0 0
        %3077 = vmatpush1.bf16.msra.mxu0 %v2948
        %3078 = vmatprep.subr.bf16.mxu0 0
        %3079 = vmatpush1.bf16.msra.mxu0 %v2947
        %3080 = vmatprep.subr.bf16.mxu0 0
        %3081 = vmatpush1.bf16.msra.mxu0 %v2946
        %3082 = vmatprep.subr.bf16.mxu0 0
        %3083 = vmatpush2.bf16.msra.mxu0 0
        %3084 = vmatprep.subr.bf16.mxu0 0
        %3085 = vmatpush2.bf16.msra.mxu0 0
        %3086 = vmatprep.subr.bf16.mxu0 0
        %3087 = vmatpush2.bf16.msra.mxu0 0
        %3088 = vmatprep.subr.bf16.mxu0 0
        %3089 = vmatpush2.bf16.msra.mxu0 0
        %3090 = vmatprep.subr.bf16.mxu0 0
        %3091 = vmatpush2.bf16.msra.mxu0 0
        %3092 = vmatprep.subr.bf16.mxu0 0
        %3093 = vmatpush2.bf16.msra.mxu0 0
        %3094 = vmatprep.subr.bf16.mxu0 0
        %3095 = vmatpush2.bf16.msra.mxu0 0
        %3096 = vmatprep.subr.bf16.mxu0 0
        %3097 = vmatpush2.bf16.msra.mxu0 0
        %3098 = vmatprep.mubr.bf16.mxu0 0
        %3099 = vmatmul.mubr.bf16.gmra.mxu0 %v3064
        %v3100 = vpop.f32.mrf.mxu0
        %v3101 = vadd.f32 0.0, %v3100
        %v3102 = vpop.f32.mrf.mxu0
        %v3103 = vpop.f32.mrf.mxu0
        %v3104 = vadd.f32 0.0, %v3103
        %v3105 = vpop.f32.mrf.mxu0
        %3106 = vdwg.mxu0
        %v3107 = vmax.f32 %v3053, %v3101
        %v3108 = vmax.f32 %v3054, %v3104
        %s3109 = scalar_lea.vmem %s7, 24
        %v3110 = vld [vmem:[%s3109] sm:$0xf]
        %v3111 = vld [vmem:[%s3109 + $0x4] sm:$0xf]
        %v3114 = vunpack.c.l.b16 %v3110
        %v3115 = vunpack.c.l.b16 %v3111
        %v3116 = vpack.c.b16 %v3115, %v3114
        %v3118 = vsel %vm1627, %v3116, 0
        %3120 = vmatprep.subr.bf16.mxu0 0
        %3121 = vmatpush1.bf16.msra.mxu0 0
        %3122 = vmatprep.subr.bf16.mxu0 0
        %3123 = vmatpush1.bf16.msra.mxu0 0
        %3124 = vmatprep.subr.bf16.mxu0 0
        %3125 = vmatpush1.bf16.msra.mxu0 0
        %3126 = vmatprep.subr.bf16.mxu0 0
        %3127 = vmatpush1.bf16.msra.mxu0 0
        %3128 = vmatprep.subr.bf16.mxu0 0
        %3129 = vmatpush1.bf16.msra.mxu0 %v2949
        %3130 = vmatprep.subr.bf16.mxu0 0
        %3131 = vmatpush1.bf16.msra.mxu0 %v2948
        %3132 = vmatprep.subr.bf16.mxu0 0
        %3133 = vmatpush1.bf16.msra.mxu0 %v2947
        %3134 = vmatprep.subr.bf16.mxu0 0
        %3135 = vmatpush1.bf16.msra.mxu0 %v2946
        %3136 = vmatprep.subr.bf16.mxu0 0
        %3137 = vmatpush2.bf16.msra.mxu0 0
        %3138 = vmatprep.subr.bf16.mxu0 0
        %3139 = vmatpush2.bf16.msra.mxu0 0
        %3140 = vmatprep.subr.bf16.mxu0 0
        %3141 = vmatpush2.bf16.msra.mxu0 0
        %3142 = vmatprep.subr.bf16.mxu0 0
        %3143 = vmatpush2.bf16.msra.mxu0 0
        %3144 = vmatprep.subr.bf16.mxu0 0
        %3145 = vmatpush2.bf16.msra.mxu0 0
        %3146 = vmatprep.subr.bf16.mxu0 0
        %3147 = vmatpush2.bf16.msra.mxu0 0
        %3148 = vmatprep.subr.bf16.mxu0 0
        %3149 = vmatpush2.bf16.msra.mxu0 0
        %3150 = vmatprep.subr.bf16.mxu0 0
        %3151 = vmatpush2.bf16.msra.mxu0 0
        %3152 = vmatprep.mubr.bf16.mxu0 0
        %3153 = vmatmul.mubr.bf16.gmra.mxu0 %v3118
        %v3154 = vpop.f32.mrf.mxu0
        %v3155 = vadd.f32 0.0, %v3154
        %v3156 = vpop.f32.mrf.mxu0
        %v3157 = vpop.f32.mrf.mxu0
        %v3158 = vadd.f32 0.0, %v3157
        %v3159 = vpop.f32.mrf.mxu0
        %3160 = vdwg.mxu0
        %v3161 = vmax.f32 %v3107, %v3155
        %v3162 = vmax.f32 %v3108, %v3158
        %v3163 = vpack.c.bf16 %v3162, %v3161
        %v3164 = vld [vmem:[%s8] sm:$0x3]
        %v3166 = vsel %vm2104, %v3164, 0
        %3168 = vmatprep.subr.bf16.mxu0 0
        %3169 = vmatpush1.bf16.msra.mxu0 0
        %3170 = vmatprep.subr.bf16.mxu0 0
        %3171 = vmatpush1.bf16.msra.mxu0 0
        %3172 = vmatprep.subr.bf16.mxu0 0
        %3173 = vmatpush1.bf16.msra.mxu0 0
        %3174 = vmatprep.subr.bf16.mxu0 0
        %3175 = vmatpush1.bf16.msra.mxu0 0
        %3176 = vmatprep.subr.bf16.mxu0 0
        %3177 = vmatpush1.bf16.msra.mxu0 0
        %3178 = vmatprep.subr.bf16.mxu0 0
        %3179 = vmatpush1.bf16.msra.mxu0 0
        %3180 = vmatprep.subr.bf16.mxu0 0
        %3181 = vmatpush1.bf16.msra.mxu0 0
        %3182 = vmatprep.subr.bf16.mxu0 0
        %3183 = vmatpush1.bf16.msra.mxu0 %v3163
        %3184 = vmatprep.subr.bf16.mxu0 0
        %3185 = vmatpush2.bf16.msra.mxu0 0
        %3186 = vmatprep.subr.bf16.mxu0 0
        %3187 = vmatpush2.bf16.msra.mxu0 0
        %3188 = vmatprep.subr.bf16.mxu0 0
        %3189 = vmatpush2.bf16.msra.mxu0 0
        %3190 = vmatprep.subr.bf16.mxu0 0
        %3191 = vmatpush2.bf16.msra.mxu0 0
        %3192 = vmatprep.subr.bf16.mxu0 0
        %3193 = vmatpush2.bf16.msra.mxu0 0
        %3194 = vmatprep.subr.bf16.mxu0 0
        %3195 = vmatpush2.bf16.msra.mxu0 0
        %3196 = vmatprep.subr.bf16.mxu0 0
        %3197 = vmatpush2.bf16.msra.mxu0 0
        %3198 = vmatprep.subr.bf16.mxu0 0
        %3199 = vmatpush2.bf16.msra.mxu0 0
        %3200 = vmatprep.mubr.bf16.mxu0 0
        %3201 = vmatmul.mubr.bf16.gmra.mxu0 %v3166
        %v3202 = vpop.f32.mrf.mxu0
        %v3203 = vadd.f32 0.0, %v3202
        %v3204 = vpop.f32.mrf.mxu0
        %v3205 = vpop.f32.mrf.mxu0
        %v3206 = vpop.f32.mrf.mxu0
        %3207 = vdwg.mxu0
        %v3208 = vpack.c.bf16 %v3203, %v3203
        %v3209 = vld [vmem:[%s9] sm:$0xf]
        %v3210 = vld [vmem:[%s9 + $0x4] sm:$0xf]
        %v3211 = vld [vmem:[%s9 + $0x8] sm:$0xf]
        %v3212 = vld [vmem:[%s9 + $0xc] sm:$0xf]
        %s3213 = scalar_lea.vmem %s9, 16
        %v3214 = vld [vmem:[%s3213] sm:$0xf]
        %v3215 = vld [vmem:[%s3213 + $0x4] sm:$0xf]
        %v3216 = vld [vmem:[%s3213 + $0x8] sm:$0xf]
        %v3217 = vld [vmem:[%s3213 + $0xc] sm:$0xf]
        %v3219 = vshrl.u32 %v3208, 16
        %v3225 = vunpack.c.l.b16 %v3214
        %v3226 = vunpack.c.l.b16 %v3215
        %v3227 = vunpack.c.l.b16 %v3216
        %v3228 = vunpack.c.l.b16 %v3217
        %v3229 = vpack.c.b16 %v3226, %v3225
        %v3230 = vpack.c.b16 %v3228, %v3227
        %vm3233 = vcmask 261120
        %v3235 = vsel %vm3233, %v3219, 0
        %3237 = vmatprep.subr.bf16.mxu0 0
        %3238 = vmatpush1.bf16.msra.mxu0 0
        %3239 = vmatprep.subr.bf16.mxu0 0
        %3240 = vmatpush1.bf16.msra.mxu0 0
        %3241 = vmatprep.subr.bf16.mxu0 0
        %3242 = vmatpush1.bf16.msra.mxu0 0
        %3243 = vmatprep.subr.bf16.mxu0 0
        %3244 = vmatpush1.bf16.msra.mxu0 0
        %3245 = vmatprep.subr.bf16.mxu0 0
        %3246 = vmatpush1.bf16.msra.mxu0 0
        %3247 = vmatprep.subr.bf16.mxu0 0
        %3248 = vmatpush1.bf16.msra.mxu0 0
        %3249 = vmatprep.subr.bf16.mxu0 0
        %3250 = vmatpush1.bf16.msra.mxu0 %v3230
        %3251 = vmatprep.subr.bf16.mxu0 0
        %3252 = vmatpush1.bf16.msra.mxu0 %v3229
        %3253 = vmatprep.subr.bf16.mxu0 0
        %3254 = vmatpush2.bf16.msra.mxu0 0
        %3255 = vmatprep.subr.bf16.mxu0 0
        %3256 = vmatpush2.bf16.msra.mxu0 0
        %3257 = vmatprep.subr.bf16.mxu0 0
        %3258 = vmatpush2.bf16.msra.mxu0 0
        %3259 = vmatprep.subr.bf16.mxu0 0
        %3260 = vmatpush2.bf16.msra.mxu0 0
        %3261 = vmatprep.subr.bf16.mxu0 0
        %3262 = vmatpush2.bf16.msra.mxu0 0
        %3263 = vmatprep.subr.bf16.mxu0 0
        %3264 = vmatpush2.bf16.msra.mxu0 0
        %3265 = vmatprep.subr.bf16.mxu0 0
        %3266 = vmatpush2.bf16.msra.mxu0 0
        %3267 = vmatprep.subr.bf16.mxu0 0
        %3268 = vmatpush2.bf16.msra.mxu0 0
        %3269 = vmatprep.mubr.bf16.mxu0 0
        %3270 = vmatmul.mubr.bf16.gmra.mxu0 %v3235
        %v3271 = vpop.f32.mrf.mxu0
        %v3272 = vadd.f32 0.0, %v3271
        %v3273 = vpop.f32.mrf.mxu0
        %v3274 = vpop.f32.mrf.mxu0
        %v3275 = vpop.f32.mrf.mxu0
        %3276 = vdwg.mxu0
        %v3281 = vunpack.c.l.b16 %v3209
        %v3282 = vunpack.c.l.b16 %v3210
        %v3283 = vunpack.c.l.b16 %v3211
        %v3284 = vunpack.c.l.b16 %v3212
        %v3285 = vpack.c.b16 %v3282, %v3281
        %v3286 = vpack.c.b16 %v3284, %v3283
        %v3289 = vsel %vm3233, %v3208, 0
        %3291 = vmatprep.subr.bf16.mxu0 0
        %3292 = vmatpush1.bf16.msra.mxu0 0
        %3293 = vmatprep.subr.bf16.mxu0 0
        %3294 = vmatpush1.bf16.msra.mxu0 0
        %3295 = vmatprep.subr.bf16.mxu0 0
        %3296 = vmatpush1.bf16.msra.mxu0 0
        %3297 = vmatprep.subr.bf16.mxu0 0
        %3298 = vmatpush1.bf16.msra.mxu0 0
        %3299 = vmatprep.subr.bf16.mxu0 0
        %3300 = vmatpush1.bf16.msra.mxu0 0
        %3301 = vmatprep.subr.bf16.mxu0 0
        %3302 = vmatpush1.bf16.msra.mxu0 0
        %3303 = vmatprep.subr.bf16.mxu0 0
        %3304 = vmatpush1.bf16.msra.mxu0 %v3286
        %3305 = vmatprep.subr.bf16.mxu0 0
        %3306 = vmatpush1.bf16.msra.mxu0 %v3285
        %3307 = vmatprep.subr.bf16.mxu0 0
        %3308 = vmatpush2.bf16.msra.mxu0 0
        %3309 = vmatprep.subr.bf16.mxu0 0
        %3310 = vmatpush2.bf16.msra.mxu0 0
        %3311 = vmatprep.subr.bf16.mxu0 0
        %3312 = vmatpush2.bf16.msra.mxu0 0
        %3313 = vmatprep.subr.bf16.mxu0 0
        %3314 = vmatpush2.bf16.msra.mxu0 0
        %3315 = vmatprep.subr.bf16.mxu0 0
        %3316 = vmatpush2.bf16.msra.mxu0 0
        %3317 = vmatprep.subr.bf16.mxu0 0
        %3318 = vmatpush2.bf16.msra.mxu0 0
        %3319 = vmatprep.subr.bf16.mxu0 0
        %3320 = vmatpush2.bf16.msra.mxu0 0
        %3321 = vmatprep.subr.bf16.mxu0 0
        %3322 = vmatpush2.bf16.msra.mxu0 0
        %3323 = vmatprep.mubr.bf16.mxu0 0
        %3324 = vmatmul.mubr.bf16.gmra.mxu0 %v3289
        %v3325 = vpop.f32.mrf.mxu0
        %v3326 = vadd.f32 %v3272, %v3325
        %v3327 = vpop.f32.mrf.mxu0
        %v3328 = vpop.f32.mrf.mxu0
        %v3329 = vpop.f32.mrf.mxu0
        %3330 = vdwg.mxu0
        %s3331 = scalar_lea.vmem %s9, 32
        %v3332 = vld [vmem:[%s3331] sm:$0xf]
        %v3333 = vld [vmem:[%s3331 + $0x4] sm:$0xf]
        %v3334 = vld [vmem:[%s3331 + $0x8] sm:$0xf]
        %v3335 = vld [vmem:[%s3331 + $0xc] sm:$0xf]
        %v3337 = vrot.slane %v3208, 1
        %v3342 = vunpack.c.l.b16 %v3332
        %v3343 = vunpack.c.l.b16 %v3333
        %v3344 = vunpack.c.l.b16 %v3334
        %v3345 = vunpack.c.l.b16 %v3335
        %v3346 = vpack.c.b16 %v3343, %v3342
        %v3347 = vpack.c.b16 %v3345, %v3344
        %v3351 = vsel %vm3233, %v3337, 0
        %3353 = vmatprep.subr.bf16.mxu0 0
        %3354 = vmatpush1.bf16.msra.mxu0 0
        %3355 = vmatprep.subr.bf16.mxu0 0
        %3356 = vmatpush1.bf16.msra.mxu0 0
        %3357 = vmatprep.subr.bf16.mxu0 0
        %3358 = vmatpush1.bf16.msra.mxu0 0
        %3359 = vmatprep.subr.bf16.mxu0 0
        %3360 = vmatpush1.bf16.msra.mxu0 0
        %3361 = vmatprep.subr.bf16.mxu0 0
        %3362 = vmatpush1.bf16.msra.mxu0 0
        %3363 = vmatprep.subr.bf16.mxu0 0
        %3364 = vmatpush1.bf16.msra.mxu0 0
        %3365 = vmatprep.subr.bf16.mxu0 0
        %3366 = vmatpush1.bf16.msra.mxu0 %v3347
        %3367 = vmatprep.subr.bf16.mxu0 0
        %3368 = vmatpush1.bf16.msra.mxu0 %v3346
        %3369 = vmatprep.subr.bf16.mxu0 0
        %3370 = vmatpush2.bf16.msra.mxu0 0
        %3371 = vmatprep.subr.bf16.mxu0 0
        %3372 = vmatpush2.bf16.msra.mxu0 0
        %3373 = vmatprep.subr.bf16.mxu0 0
        %3374 = vmatpush2.bf16.msra.mxu0 0
        %3375 = vmatprep.subr.bf16.mxu0 0
        %3376 = vmatpush2.bf16.msra.mxu0 0
        %3377 = vmatprep.subr.bf16.mxu0 0
        %3378 = vmatpush2.bf16.msra.mxu0 0
        %3379 = vmatprep.subr.bf16.mxu0 0
        %3380 = vmatpush2.bf16.msra.mxu0 0
        %3381 = vmatprep.subr.bf16.mxu0 0
        %3382 = vmatpush2.bf16.msra.mxu0 0
        %3383 = vmatprep.subr.bf16.mxu0 0
        %3384 = vmatpush2.bf16.msra.mxu0 0
        %3385 = vmatprep.mubr.bf16.mxu0 0
        %3386 = vmatmul.mubr.bf16.gmra.mxu0 %v3351
        %v3387 = vpop.f32.mrf.mxu0
        %v3388 = vadd.f32 0.0, %v3387
        %v3389 = vpop.f32.mrf.mxu0
        %v3390 = vpop.f32.mrf.mxu0
        %v3391 = vpop.f32.mrf.mxu0
        %3392 = vdwg.mxu0
        %v3393 = vadd.f32 %v3326, %v3388
        %s3394 = scalar_lea.vmem %s9, 48
        %v3395 = vld [vmem:[%s3394] sm:$0xf]
        %v3396 = vld [vmem:[%s3394 + $0x4] sm:$0xf]
        %v3397 = vld [vmem:[%s3394 + $0x8] sm:$0xf]
        %v3398 = vld [vmem:[%s3394 + $0xc] sm:$0xf]
        %v3399 = vrot.slane %v3219, 1
        %v3404 = vunpack.c.l.b16 %v3395
        %v3405 = vunpack.c.l.b16 %v3396
        %v3406 = vunpack.c.l.b16 %v3397
        %v3407 = vunpack.c.l.b16 %v3398
        %v3408 = vpack.c.b16 %v3405, %v3404
        %v3409 = vpack.c.b16 %v3407, %v3406
        %v3413 = vsel %vm3233, %v3399, 0
        %3415 = vmatprep.subr.bf16.mxu0 0
        %3416 = vmatpush1.bf16.msra.mxu0 0
        %3417 = vmatprep.subr.bf16.mxu0 0
        %3418 = vmatpush1.bf16.msra.mxu0 0
        %3419 = vmatprep.subr.bf16.mxu0 0
        %3420 = vmatpush1.bf16.msra.mxu0 0
        %3421 = vmatprep.subr.bf16.mxu0 0
        %3422 = vmatpush1.bf16.msra.mxu0 0
        %3423 = vmatprep.subr.bf16.mxu0 0
        %3424 = vmatpush1.bf16.msra.mxu0 0
        %3425 = vmatprep.subr.bf16.mxu0 0
        %3426 = vmatpush1.bf16.msra.mxu0 0
        %3427 = vmatprep.subr.bf16.mxu0 0
        %3428 = vmatpush1.bf16.msra.mxu0 %v3409
        %3429 = vmatprep.subr.bf16.mxu0 0
        %3430 = vmatpush1.bf16.msra.mxu0 %v3408
        %3431 = vmatprep.subr.bf16.mxu0 0
        %3432 = vmatpush2.bf16.msra.mxu0 0
        %3433 = vmatprep.subr.bf16.mxu0 0
        %3434 = vmatpush2.bf16.msra.mxu0 0
        %3435 = vmatprep.subr.bf16.mxu0 0
        %3436 = vmatpush2.bf16.msra.mxu0 0
        %3437 = vmatprep.subr.bf16.mxu0 0
        %3438 = vmatpush2.bf16.msra.mxu0 0
        %3439 = vmatprep.subr.bf16.mxu0 0
        %3440 = vmatpush2.bf16.msra.mxu0 0
        %3441 = vmatprep.subr.bf16.mxu0 0
        %3442 = vmatpush2.bf16.msra.mxu0 0
        %3443 = vmatprep.subr.bf16.mxu0 0
        %3444 = vmatpush2.bf16.msra.mxu0 0
        %3445 = vmatprep.subr.bf16.mxu0 0
        %3446 = vmatpush2.bf16.msra.mxu0 0
        %3447 = vmatprep.mubr.bf16.mxu0 0
        %3448 = vmatmul.mubr.bf16.gmra.mxu0 %v3413
        %v3449 = vpop.f32.mrf.mxu0
        %v3450 = vadd.f32 0.0, %v3449
        %v3451 = vpop.f32.mrf.mxu0
        %v3452 = vpop.f32.mrf.mxu0
        %v3453 = vpop.f32.mrf.mxu0
        %3454 = vdwg.mxu0
        %v3455 = vadd.f32 %v3393, %v3450
        %v3456 = vld [vmem:[%s10] sm:$0x1]
        %v3457 = vadd.f32 %v3455, %v3456
        %v3458 = vmax.f32 %v3457, 0.0
        %v3459 = vpack.c.bf16 %v3458, %v3458
        %v3460 = vld [vmem:[%s11] sm:$0xf]
        %v3461 = vld [vmem:[%s11 + $0x4] sm:$0xf]
        %v3462 = vld [vmem:[%s11 + $0x8] sm:$0xf]
        %v3463 = vld [vmem:[%s11 + $0xc] sm:$0xf]
        %v3464 = vld [vmem:[%s11 + $0x10] sm:$0xf]
        %v3465 = vld [vmem:[%s11 + $0x14] sm:$0xf]
        %v3466 = vld [vmem:[%s11 + $0x18] sm:$0xf]
        %v3467 = vld [vmem:[%s11 + $0x1c] sm:$0xf]
        %v3468 = vld [vmem:[%s12] sm:$0x1]
        %v3477 = vunpack.c.l.b16 %v3460
        %v3478 = vunpack.c.l.b16 %v3461
        %v3479 = vunpack.c.l.b16 %v3462
        %v3480 = vunpack.c.l.b16 %v3463
        %v3481 = vunpack.c.l.b16 %v3464
        %v3482 = vunpack.c.l.b16 %v3465
        %v3483 = vunpack.c.l.b16 %v3466
        %v3484 = vunpack.c.l.b16 %v3467
        %v3485 = vpack.c.b16 %v3478, %v3477
        %v3486 = vpack.c.b16 %v3480, %v3479
        %v3487 = vpack.c.b16 %v3482, %v3481
        %v3488 = vpack.c.b16 %v3484, %v3483
        %v3494 = vsel %vm1627, %v3459, 0
        %3496 = vmatprep.subr.bf16.mxu0 0
        %3497 = vmatpush1.bf16.msra.mxu0 0
        %3498 = vmatprep.subr.bf16.mxu0 0
        %3499 = vmatpush1.bf16.msra.mxu0 0
        %3500 = vmatprep.subr.bf16.mxu0 0
        %3501 = vmatpush1.bf16.msra.mxu0 0
        %3502 = vmatprep.subr.bf16.mxu0 0
        %3503 = vmatpush1.bf16.msra.mxu0 0
        %3504 = vmatprep.subr.bf16.mxu0 0
        %3505 = vmatpush1.bf16.msra.mxu0 %v3488
        %3506 = vmatprep.subr.bf16.mxu0 0
        %3507 = vmatpush1.bf16.msra.mxu0 %v3487
        %3508 = vmatprep.subr.bf16.mxu0 0
        %3509 = vmatpush1.bf16.msra.mxu0 %v3486
        %3510 = vmatprep.subr.bf16.mxu0 0
        %3511 = vmatpush1.bf16.msra.mxu0 %v3485
        %3512 = vmatprep.subr.bf16.mxu0 0
        %3513 = vmatpush2.bf16.msra.mxu0 0
        %3514 = vmatprep.subr.bf16.mxu0 0
        %3515 = vmatpush2.bf16.msra.mxu0 0
        %3516 = vmatprep.subr.bf16.mxu0 0
        %3517 = vmatpush2.bf16.msra.mxu0 0
        %3518 = vmatprep.subr.bf16.mxu0 0
        %3519 = vmatpush2.bf16.msra.mxu0 0
        %3520 = vmatprep.subr.bf16.mxu0 0
        %3521 = vmatpush2.bf16.msra.mxu0 0
        %3522 = vmatprep.subr.bf16.mxu0 0
        %3523 = vmatpush2.bf16.msra.mxu0 0
        %3524 = vmatprep.subr.bf16.mxu0 0
        %3525 = vmatpush2.bf16.msra.mxu0 0
        %3526 = vmatprep.subr.bf16.mxu0 0
        %3527 = vmatpush2.bf16.msra.mxu0 0
        %3528 = vmatprep.mubr.bf16.mxu0 0
        %3529 = vmatmul.mubr.bf16.gmra.mxu0 %v3494
        %v3530 = vpop.f32.mrf.mxu0
        %v3531 = vadd.f32 %v3468, %v3530
        %v3532 = vpop.f32.mrf.mxu0
        %v3533 = vpop.f32.mrf.mxu0
        %v3534 = vpop.f32.mrf.mxu0
        %3535 = vdwg.mxu0
        %v3536 = vmax.f32 %v3531, 0.0
        %v3537 = vpack.c.bf16 %v3536, %v3536
        %v3538 = vld [vmem:[%s13] sm:$0xf]
        %v3539 = vld [vmem:[%s13 + $0x4] sm:$0xf]
        %v3540 = vld [vmem:[%s13 + $0x8] sm:$0xf]
        %v3541 = vld [vmem:[%s13 + $0xc] sm:$0xf]
        %v3542 = vld [vmem:[%s13 + $0x10] sm:$0xf]
        %v3543 = vld [vmem:[%s13 + $0x14] sm:$0xf]
        %v3544 = vld [vmem:[%s13 + $0x18] sm:$0xf]
        %v3545 = vld [vmem:[%s13 + $0x1c] sm:$0xf]
        %v3546 = vld [vmem:[%s14] sm:$0x1]
        %v3555 = vunpack.c.l.b16 %v3538
        %v3556 = vunpack.c.l.b16 %v3539
        %v3557 = vunpack.c.l.b16 %v3540
        %v3558 = vunpack.c.l.b16 %v3541
        %v3559 = vunpack.c.l.b16 %v3542
        %v3560 = vunpack.c.l.b16 %v3543
        %v3561 = vunpack.c.l.b16 %v3544
        %v3562 = vunpack.c.l.b16 %v3545
        %v3563 = vpack.c.b16 %v3556, %v3555
        %v3564 = vpack.c.b16 %v3558, %v3557
        %v3565 = vpack.c.b16 %v3560, %v3559
        %v3566 = vpack.c.b16 %v3562, %v3561
        %v3572 = vsel %vm1627, %v3537, 0
        %3574 = vmatprep.subr.bf16.mxu0 0
        %3575 = vmatpush1.bf16.msra.mxu0 0
        %3576 = vmatprep.subr.bf16.mxu0 0
        %3577 = vmatpush1.bf16.msra.mxu0 0
        %3578 = vmatprep.subr.bf16.mxu0 0
        %3579 = vmatpush1.bf16.msra.mxu0 0
        %3580 = vmatprep.subr.bf16.mxu0 0
        %3581 = vmatpush1.bf16.msra.mxu0 0
        %3582 = vmatprep.subr.bf16.mxu0 0
        %3583 = vmatpush1.bf16.msra.mxu0 %v3566
        %3584 = vmatprep.subr.bf16.mxu0 0
        %3585 = vmatpush1.bf16.msra.mxu0 %v3565
        %3586 = vmatprep.subr.bf16.mxu0 0
        %3587 = vmatpush1.bf16.msra.mxu0 %v3564
        %3588 = vmatprep.subr.bf16.mxu0 0
        %3589 = vmatpush1.bf16.msra.mxu0 %v3563
        %3590 = vmatprep.subr.bf16.mxu0 0
        %3591 = vmatpush2.bf16.msra.mxu0 0
        %3592 = vmatprep.subr.bf16.mxu0 0
        %3593 = vmatpush2.bf16.msra.mxu0 0
        %3594 = vmatprep.subr.bf16.mxu0 0
        %3595 = vmatpush2.bf16.msra.mxu0 0
        %3596 = vmatprep.subr.bf16.mxu0 0
        %3597 = vmatpush2.bf16.msra.mxu0 0
        %3598 = vmatprep.subr.bf16.mxu0 0
        %3599 = vmatpush2.bf16.msra.mxu0 0
        %3600 = vmatprep.subr.bf16.mxu0 0
        %3601 = vmatpush2.bf16.msra.mxu0 0
        %3602 = vmatprep.subr.bf16.mxu0 0
        %3603 = vmatpush2.bf16.msra.mxu0 0
        %3604 = vmatprep.subr.bf16.mxu0 0
        %3605 = vmatpush2.bf16.msra.mxu0 0
        %3606 = vmatprep.mubr.bf16.mxu0 0
        %3607 = vmatmul.mubr.bf16.gmra.mxu0 %v3572
        %v3608 = vpop.f32.mrf.mxu0
        %v3609 = vadd.f32 %v3546, %v3608
        %v3610 = vpop.f32.mrf.mxu0
        %v3611 = vpop.f32.mrf.mxu0
        %v3612 = vpop.f32.mrf.mxu0
        %3613 = vdwg.mxu0
        %3614 = vst [vmem:[%s486] sm:$0x1] %v3609
        %s3615 = sand.u32 %s357, 1
        %s3616 = scalar_lea.sflag [#allocation3], %s3615
        %s3617 = sand.u32 %s357, 1
        %s3618 = scalar_lea.vmem [#allocation2], %s3617
        // Predicated region
        $region81: #{_lambda_.1} parent=79 // pred_check
          %p3619 = pneg %p367
        $region82: #{_lambda_.1} parent=79 // pred_check_branch
          %3621 = sbr.rel (%p3619) target = $region84
        $region83: #{_lambda_.1} parent=79 // pred_region
          %s3623 = ssub.s32 16, 16
          %3624 = vsyncadd %s3616, %s3623
          %s3625 = smul.addr %s29, 16
          %s3626 = scalar_lea.hbm %s15, %s3625
          %s3628 = sshll.u32 %s3618, 4
          %s3629 = int_to_ptr.vmem [resolvable:$true] %s3628
          %3631 = dma.vmem_to_hbm [thread:$0]  %s3629, 16, %s3626, %s3616
        $region84: #{_lambda_.1} parent=79 // pred_fallthru
          _
      $region80: #{_lambda_.1} parent=5 // pred_fallthru
        _
      %p3632 = scmp.le.s32.totalorder 2, %s24
      // Predicated region
      $region85: #{_lambda_.1} parent=5 // pred_check
        %p3633 = pneg %p3632
      $region86: #{_lambda_.1} parent=5 // pred_check_branch
        %3635 = sbr.rel (%p3633) target = $region88
      $region87: #{_lambda_.1} parent=5 // pred_region
        %s3636 = ssub.s32 %s24, 2
        // Predicated region
        $region89: #{_lambda_.1} parent=87 // pred_check
          %p3637 = pneg %p373
        $region90: #{_lambda_.1} parent=87 // pred_check_branch
          %3639 = sbr.rel (%p3637) target = $region92
        $region91: #{_lambda_.1} parent=87 // pred_region
          %s3640 = sand.u32 %s358, 1
          %s3641 = scalar_lea.sflag [#allocation3], %s3640
          %s3642 = sand.u32 %s358, 1
          %s3643 = scalar_lea.vmem [#allocation2], %s3642
          %3644 = dma.done %s3641, 16
        $region92: #{_lambda_.1} parent=87 // pred_fallthru
          _
      $region88: #{_lambda_.1} parent=5 // pred_fallthru
        _
    $region6: #{_lambda_.1} parent=1 // loop_footer
      %s28 = sadd.s32 1, %s24
    $region7: #{_lambda_.1} parent=1 // loop_footer_branch
      %23 = sbr.rel target = $region3
    $region8: #{_lambda_.1} parent=1 // loop_exit
      _
    %3645 = vsyncpa [#allocation3], 1
    %s3646 = scalar_lea.sflag [#allocation3], 1
    %3647 = vsyncpa %s3646, 1

</llo_original>
